<compile_context>
chip_gen: v6e
topology: v6e:2x2x1
jax: 0.10.0
libtpu: 0.0.40
codegen_flags: <defaults>
</compile_context>

<pallas_src>
import numpy as np
import jax
import jax.numpy as jnp
from jax import lax
from jax.experimental import pallas as pl
from jax.experimental.pallas import tpu as pltpu


# ----------------------------------------------------------------------------
# Static architecture description (lengths fixed by the module: fc2 emits 256).
# ----------------------------------------------------------------------------
def make_arch(C):
    def cl(l, k, s, p):  # Conv1d output length
        return (l + 2 * p - k) // s + 1

    def tl(l, k, s, p):  # ConvTranspose1d output length
        return (l - 1) * s - 2 * p + k

    layers = []

    def add_conv(name, kind, k, s, p, cin, cout, l_in, width=None):
        l_out = cl(l_in, k, s, p) if kind == "conv" else tl(l_in, k, s, p)
        w = l_out if width is None else width
        layers.append(dict(name=name, ltype=kind, k=k, s=s, p=p, cin=cin,
                           cout=cout, l_in=l_in, l_out=l_out, width=w))
        return w

    def add_gdn(name, l):
        layers.append(dict(name=name, ltype="gdn", k=0, s=0, p=0, cin=C,
                           cout=C, l_in=l, l_out=l, width=l))

    L_FC2 = 256
    L1 = add_conv("conv1", "conv", 3, 2, 2, 1, C, L_FC2)   # 129
    add_gdn("gdn2", L1)
    L3 = add_conv("conv3", "conv", 2, 2, 0, C, C, L1)      # 64
    add_gdn("gdn4", L3)
    # RAB5 (downsample1 / upsample1), edge-replicate 63 -> 64 on the last up conv
    l = add_conv("r5d0", "conv", 3, 2, 0, C, C, L3)        # 31
    l = add_conv("r5d1", "conv", 3, 2, 0, C, C, l)         # 15
    l = add_conv("r5d2", "conv", 3, 2, 0, C, C, l)         # 7
    l = add_conv("r5u0", "convT", 3, 2, 0, C, C, l)        # 15
    l = add_conv("r5u1", "convT", 3, 2, 0, C, C, l)        # 31
    l = add_conv("r5u2", "convT", 3, 2, 0, C, C, l, width=L3)  # 63 -> 64
    L6 = add_conv("conv6", "conv", 3, 2, 0, C, C, L3)      # 31
    add_gdn("gdn7", L6)
    L8 = add_conv("conv8", "conv", 3, 2, 1, C, C, L6)      # 16
    # RAB9 (downsample2 / upsample2), lengths round-trip exactly (16 -> ... -> 16)
    l = add_conv("r9d0", "conv", 2, 1, 0, C, C, L8)        # 15
    l = add_conv("r9d1", "conv", 3, 2, 0, C, C, l)         # 7
    l = add_conv("r9d2", "conv", 2, 1, 0, C, C, l)         # 6
    l = add_conv("r9u0", "convT", 2, 1, 0, C, C, l)        # 7
    l = add_conv("r9u1", "convT", 3, 2, 0, C, C, l)        # 15
    l = add_conv("r9u2", "convT", 2, 1, 0, C, C, l, width=L8)  # 16
    add_conv("convA", "conv", 3, 8, 0, C, C, L1)           # 16
    add_conv("convB", "conv", 3, 4, 0, C, C, L3)           # 16
    add_conv("convC", "conv", 3, 2, 1, C, C, L6)           # 16
    # conv10 (Cin = 4C) split into 4 grouped convs (inputs: x, ha, hb, hc)
    L10 = add_conv("conv10_g0", "conv", 2, 2, 0, C, C, L8)  # 8
    add_conv("conv10_g1", "conv", 2, 2, 0, C, C, L8)
    add_conv("conv10_g2", "conv", 2, 2, 0, C, C, L8)
    add_conv("conv10_g3", "conv", 2, 2, 0, C, C, L8)

    maxw = 0
    for i, d in enumerate(layers):
        d["bias_idx"] = i
        d["out_lanes"] = d["cout"] * d["width"]
        maxw = max(maxw, d["out_lanes"])
    maxw = ((maxw + 127) // 128) * 128   # lane-aligned bias slab rows

    return dict(layers=layers, meta={d["name"]: d for d in layers},
                order=[d["name"] for d in layers], maxw=maxw, C=C,
                L_FC2=L_FC2, L1=L1, L3=L3, L6=L6, L8=L8, L10=L10)


# ----------------------------------------------------------------------------
# Host-side operator construction (one-time, outside the hot path).
# Layout: activations are (B, C*L) slabs; lane index = channel*L + position.
# Each layer becomes one dense operator K with  y = x @ K + bias_row.
# ----------------------------------------------------------------------------
def _pos_masks(kind, k, s, p, l_in, l_out, width):
    """(k, l_in, width) 0/1 masks folding stride, zero-padding, convT scatter
    and edge replication (output columns >= l_out copy column l_out-1)."""
    j = np.arange(l_in)[:, None]                              # input position
    o_eff = np.minimum(np.arange(width)[None, :], l_out - 1)  # clamped output position
    masks = []
    for t in range(k):
        if kind == "conv":
            m = (j == o_eff * s + t - p)       # gather x[:, o*s + t - p]
        else:
            m = (o_eff == j * s + t - p)       # scatter x[:, j] -> out[:, j*s + t - p]
        masks.append(m.astype(np.float32))
    return np.stack(masks)


def _conv_operator(weight, kind, k, s, p, l_in, l_out, width):
    """weight: (Cout, Cin, k).  Returns K of shape (Cin*l_in, Cout*width)."""
    pos = _pos_masks(kind, k, s, p, l_in, l_out, width)       # (k, l_in, width)
    K = np.einsum("oct,tjw->cjow", weight.astype(np.float32), pos)
    cout, cin = weight.shape[0], weight.shape[1]
    return np.ascontiguousarray(K.reshape(cin * l_in, cout * width), np.float32)


def _gdn_operator(gamma, L):
    """gamma: (Cout, Cin).  Returns Kg of shape (Cin*L, Cout*L):
       den[:, co*L + o] = sum_ci gamma[co, ci] * xsq[:, ci*L + o]."""
    C = gamma.shape[0]
    K = np.einsum("oc,jw->cjow", gamma.astype(np.float32), np.eye(L, dtype=np.float32))
    return np.ascontiguousarray(K.reshape(C * L, C * L), np.float32)


def pack_params(params, arch):
    C = arch["C"]
    ops, bias = [], np.zeros((len(arch["layers"]), arch["maxw"]), np.float32)
    for d in arch["layers"]:
        name = d["name"]
        if d["ltype"] == "gdn":
            gamma = np.asarray(params[name + "_gamma"], np.float32)
            beta = np.asarray(params[name + "_beta"], np.float32)
            ops.append(jnp.asarray(_gdn_operator(gamma, d["l_in"])))
            bias[d["bias_idx"], :d["out_lanes"]] = np.repeat(beta, d["width"])
        else:
            if name.startswith("conv10_g"):
                g = int(name[-1])
                w = np.asarray(params["conv10_w"], np.float32)[:, g * C:(g + 1) * C, :]
                b = (np.asarray(params["conv10_b"], np.float32) if g == 0
                     else np.zeros((C,), np.float32))   # bias added once (group 0)
            else:
                w = np.asarray(params[name + "_w"], np.float32)
                b = np.asarray(params[name + "_b"], np.float32)
            if d["ltype"] == "convT":
                # torch ConvTranspose1d weight is (Cin, Cout, k) -> normalize to (Cout, Cin, k)
                w = np.transpose(w, (1, 0, 2))
            ops.append(jnp.asarray(_conv_operator(
                w, d["ltype"], d["k"], d["s"], d["p"], d["l_in"], d["l_out"], d["width"])))
            bias[d["bias_idx"], :d["out_lanes"]] = np.repeat(b, d["width"])
    return dict(
        w1t=jnp.asarray(np.asarray(params["fc1_w"], np.float32).T),
        b1=jnp.asarray(np.asarray(params["fc1_b"], np.float32)[None, :]),
        w2t=jnp.asarray(np.asarray(params["fc2_w"], np.float32).T),
        b2=jnp.asarray(np.asarray(params["fc2_b"], np.float32)[None, :]),
        bias=jnp.asarray(bias),          # (n_layers, MAXW) packed bias rows
        ops=tuple(ops),                  # one dense operator per layer
    )


# ----------------------------------------------------------------------------
# The fused kernel: one MXU dot per layer on a VMEM-resident (B, C*L) slab.
# ----------------------------------------------------------------------------
def make_kernel(arch):
    order, meta = arch["order"], arch["meta"]

    def kernel(x_ref, w1_ref, b1_ref, w2_ref, b2_ref, bias_ref, *rest):
        op = dict(zip(order, rest[:len(order)]))
        o_ref = rest[len(order)]
        f32 = jnp.float32

        def mm(a, b):
            # TODO(synk): pass precision=lax.Precision.HIGHEST here if bit-level
            # parity with the f32 PyTorch reference is required.
            return jnp.dot(a, b, preferred_element_type=f32)

        def brow(name):
            d = meta[name]
            i = d["bias_idx"]
            return bias_ref[i:i + 1, :d["out_lanes"]]       # (1, out_lanes), broadcasts over B

        def conv(name, x, relu=False):
            y = mm(x, op[name][...]) + brow(name)
            if relu:
                # TODO(synk): activation_constructor source not provided; ReLU assumed.
                y = jnp.maximum(y, 0.0)
            return y

        def gdn(name, x):
            # TODO(synk): GDN source not provided; canonical Balle GDN assumed
            # (encode direction): y = x * rsqrt(beta + gamma @ x^2), clamped.
            den = mm(x * x, op[name][...]) + brow(name)
            return x * lax.rsqrt(jnp.maximum(den, 1e-6))

        def rab(x, keys):
            # TODO(synk): RAB1D source not provided; x + x * upsample(downsample(x))
            # assumed (sigmoid off); edge replication is folded into the operators.
            m = x
            for i, k in enumerate(keys):
                m = conv(k, m, relu=(i not in (2, 5)))      # no act after each Sequential's last conv
            return x + x * m

        # ---- trunk: fc1 -> fc2 (no activation in between, as in the reference) ----
        h = mm(x_ref[...], w1_ref[...]) + b1_ref[...]       # (B, 512)
        h = mm(h, w2_ref[...]) + b2_ref[...]                # (B, 256) == conv1 input (Cin=1)

        x = gdn("gdn2", conv("conv1", h))                   # (B, C*129)
        xa = x
        x = gdn("gdn4", conv("conv3", x))                   # (B, C*64)
        xb = x
        x = rab(xb, ("r5d0", "r5d1", "r5d2", "r5u0", "r5u1", "r5u2"))
        x = gdn("gdn7", conv("conv6", x))                   # (B, C*31)
        xc = x
        x = conv("conv8", x)                                # (B, C*16)
        x = rab(x, ("r9d0", "r9d1", "r9d2", "r9u0", "r9u1", "r9u2"))

        # ---- heads + conv10 (channel concat -> 4 grouped matmuls, summed) ----
        ha = conv("convA", xa)
        hb = conv("convB", xb)
        hc = conv("convC", xc)
        o_ref[...] = (conv("conv10_g0", x) + conv("conv10_g1", ha)
                      + conv("conv10_g2", hb) + conv("conv10_g3", hc))

    return kernel


def build_encoder(arch):
    kernel = make_kernel(arch)
    n_in = 6 + len(arch["order"])
    C, L10 = arch["C"], arch["L10"]

    @jax.jit
    def run(x2d, w1t, b1, w2t, b2, bias, *ops):
        B = x2d.shape[0]
        vmem = pl.BlockSpec(memory_space=pltpu.MemorySpace.VMEM)
        return pl.pallas_call(
            kernel,
            out_shape=jax.ShapeDtypeStruct((B, C * L10), jnp.float32),
            in_specs=[vmem] * n_in,
            out_specs=vmem,
        )(x2d, w1t, b1, w2t, b2, bias, *ops)

    return run


# ----------------------------------------------------------------------------
# Full forward pass (mirrors TucodecEncode1D2L.forward / .trunk)
# ----------------------------------------------------------------------------
def tucodec_encode_1d_2l(run, arch, packed, x):
    """x: (B, 1, clusterInputSize) -> (h, x1, x3, x6, x8, x10)."""
    B, Cx, Lin = x.shape
    C = arch["C"]
    x2d = x.reshape(B * Cx, Lin).astype(jnp.float32)        # Cx == 1 (conv1 has Cin=1)
    h = run(x2d, packed["w1t"], packed["b1"], packed["w2t"], packed["b2"],
            packed["bias"], *packed["ops"])
    h = h.reshape(B, C, arch["L10"])
    x1 = (B, Cx, arch["L_FC2"])
    x3 = (B, C, arch["L1"])
    x6 = (B, C, arch["L3"])
    x8 = (B, C, arch["L6"])
    x10 = (B, 4 * C, arch["L8"])
    return h, x1, x3, x6, x8, x10


# ----------------------------------------------------------------------------
# Parameter init (deterministic, synthetic; PyTorch weight layouts)
# ----------------------------------------------------------------------------
def init_params(key, arch, cluster_input_size):
    C = arch["C"]
    kit = iter(jax.random.split(key, 64))

    def w(shape, scale=0.1):
        return scale * jax.random.normal(next(kit), shape, jnp.float32)

    def zeros(n):
        return jnp.zeros((n,), jnp.float32)

    p = {
        "fc1_w": w((512, cluster_input_size)), "fc1_b": zeros(512),
        "fc2_w": w((256, 512)), "fc2_b": zeros(256),
        "conv1_w": w((C, 1, 3)), "conv1_b": zeros(C),
        "conv3_w": w((C, C, 2)), "conv3_b": zeros(C),
        "conv6_w": w((C, C, 3)), "conv6_b": zeros(C),
        "conv8_w": w((C, C, 3)), "conv8_b": zeros(C),
        "convA_w": w((C, C, 3)), "convA_b": zeros(C),
        "convB_w": w((C, C, 3)), "convB_b": zeros(C),
        "convC_w": w((C, C, 3)), "convC_b": zeros(C),
        "conv10_w": w((C, 4 * C, 2)), "conv10_b": zeros(C),
    }
    for g in ("gdn2", "gdn4", "gdn7"):
        p[g + "_gamma"] = 0.1 * jnp.eye(C, dtype=jnp.float32)
        p[g + "_beta"] = jnp.ones((C,), jnp.float32)
    for d in arch["layers"]:
        if d["name"].startswith("r"):   # RAB conv / conv-transpose weights (square, Cin=Cout=C)
            p[d["name"] + "_w"] = w((C, C, d["k"]))
            p[d["name"] + "_b"] = zeros(C)
    return p


# ----------------------------------------------------------------------------
if __name__ == "__main__":
    B = 2
    Cstd = 4
    cluster_input_size = 64

    arch = make_arch(Cstd)
    key = jax.random.PRNGKey(0)
    kp, kx = jax.random.split(key)
    params = init_params(kp, arch, cluster_input_size)
    packed = pack_params(params, arch)          # one-time packing, outside the hot path
    run = build_encoder(arch)
    x = jax.random.normal(kx, (B, 1, cluster_input_size), jnp.float32)

    h, x1, x3, x6, x8, x10 = tucodec_encode_1d_2l(run, arch, packed, x)
    h = jax.block_until_ready(h)

    assert x1 == (B, 1, 256)
    assert x3 == (B, Cstd, 129)
    assert x6 == (B, Cstd, 64)
    assert x8 == (B, Cstd, 31)
    assert x10 == (B, 4 * Cstd, 16)
    assert h.shape == (B, Cstd, 8)
    assert bool(jnp.all(jnp.isfinite(h)))
    print("KERNEL_OK")
</pallas_src>

<mosaic_0001>
module attributes {stable_mosaic.version = 11 : i64} {
  func.func @kernel(%arg0: memref<2x64xf32, #tpu.memory_space<vmem>>, %arg1: memref<64x512xf32, #tpu.memory_space<vmem>>, %arg2: memref<1x512xf32, #tpu.memory_space<vmem>>, %arg3: memref<512x256xf32, #tpu.memory_space<vmem>>, %arg4: memref<1x256xf32, #tpu.memory_space<vmem>>, %arg5: memref<26x640xf32, #tpu.memory_space<vmem>>, %arg6: memref<256x516xf32, #tpu.memory_space<vmem>>, %arg7: memref<516x516xf32, #tpu.memory_space<vmem>>, %arg8: memref<516x256xf32, #tpu.memory_space<vmem>>, %arg9: memref<256x256xf32, #tpu.memory_space<vmem>>, %arg10: memref<256x124xf32, #tpu.memory_space<vmem>>, %arg11: memref<124x60xf32, #tpu.memory_space<vmem>>, %arg12: memref<60x28xf32, #tpu.memory_space<vmem>>, %arg13: memref<28x60xf32, #tpu.memory_space<vmem>>, %arg14: memref<60x124xf32, #tpu.memory_space<vmem>>, %arg15: memref<124x256xf32, #tpu.memory_space<vmem>>, %arg16: memref<256x124xf32, #tpu.memory_space<vmem>>, %arg17: memref<124x124xf32, #tpu.memory_space<vmem>>, %arg18: memref<124x64xf32, #tpu.memory_space<vmem>>, %arg19: memref<64x60xf32, #tpu.memory_space<vmem>>, %arg20: memref<60x28xf32, #tpu.memory_space<vmem>>, %arg21: memref<28x24xf32, #tpu.memory_space<vmem>>, %arg22: memref<24x28xf32, #tpu.memory_space<vmem>>, %arg23: memref<28x60xf32, #tpu.memory_space<vmem>>, %arg24: memref<60x64xf32, #tpu.memory_space<vmem>>, %arg25: memref<516x64xf32, #tpu.memory_space<vmem>>, %arg26: memref<256x64xf32, #tpu.memory_space<vmem>>, %arg27: memref<124x64xf32, #tpu.memory_space<vmem>>, %arg28: memref<64x32xf32, #tpu.memory_space<vmem>>, %arg29: memref<64x32xf32, #tpu.memory_space<vmem>>, %arg30: memref<64x32xf32, #tpu.memory_space<vmem>>, %arg31: memref<64x32xf32, #tpu.memory_space<vmem>>, %arg32: memref<2x32xf32, #tpu.memory_space<vmem>>) attributes {dimension_semantics = [], scalar_prefetch = 0 : i64, scratch_operands = 0 : i64, tpu.core_type = #tpu.core_type<tc>} {
    %c0 = arith.constant 0 : index
    %c0_0 = arith.constant 0 : index
    %0 = vector.load %arg0[%c0, %c0_0] : memref<2x64xf32, #tpu.memory_space<vmem>>, vector<2x64xf32>
    %c0_1 = arith.constant 0 : index
    %c0_2 = arith.constant 0 : index
    %1 = vector.load %arg1[%c0_1, %c0_2] : memref<64x512xf32, #tpu.memory_space<vmem>>, vector<64x512xf32>
    %cst = arith.constant dense<0.000000e+00> : vector<2x512xf32>
    %2 = tpu.matmul %0, %1, %cst {dimension_numbers = #tpu.dot_dimension_numbers<[1], [0], [0], [1], [0, 0, 1, 1], [], []>} : vector<2x64xf32>, vector<64x512xf32>, vector<2x512xf32> -> vector<2x512xf32>
    %c0_3 = arith.constant 0 : index
    %c0_4 = arith.constant 0 : index
    %3 = vector.load %arg2[%c0_3, %c0_4] : memref<1x512xf32, #tpu.memory_space<vmem>>, vector<1x512xf32>
    %4 = vector.broadcast %3 : vector<1x512xf32> to vector<2x512xf32>
    %5 = arith.addf %2, %4 : vector<2x512xf32>
    %c0_5 = arith.constant 0 : index
    %c0_6 = arith.constant 0 : index
    %6 = vector.load %arg3[%c0_5, %c0_6] : memref<512x256xf32, #tpu.memory_space<vmem>>, vector<512x256xf32>
    %cst_7 = arith.constant dense<0.000000e+00> : vector<2x256xf32>
    %7 = tpu.matmul %5, %6, %cst_7 {dimension_numbers = #tpu.dot_dimension_numbers<[1], [0], [0], [1], [0, 0, 1, 1], [], []>} : vector<2x512xf32>, vector<512x256xf32>, vector<2x256xf32> -> vector<2x256xf32>
    %c0_8 = arith.constant 0 : index
    %c0_9 = arith.constant 0 : index
    %8 = vector.load %arg4[%c0_8, %c0_9] : memref<1x256xf32, #tpu.memory_space<vmem>>, vector<1x256xf32>
    %9 = vector.broadcast %8 : vector<1x256xf32> to vector<2x256xf32>
    %10 = arith.addf %7, %9 : vector<2x256xf32>
    %c0_10 = arith.constant 0 : index
    %c0_11 = arith.constant 0 : index
    %11 = vector.load %arg6[%c0_10, %c0_11] : memref<256x516xf32, #tpu.memory_space<vmem>>, vector<256x516xf32>
    %cst_12 = arith.constant dense<0.000000e+00> : vector<2x516xf32>
    %12 = tpu.matmul %10, %11, %cst_12 {dimension_numbers = #tpu.dot_dimension_numbers<[1], [0], [0], [1], [0, 0, 1, 1], [], []>} : vector<2x256xf32>, vector<256x516xf32>, vector<2x516xf32> -> vector<2x516xf32>
    %c0_13 = arith.constant 0 : index
    %c0_14 = arith.constant 0 : index
    %13 = vector.load %arg5[%c0_13, %c0_14] : memref<26x640xf32, #tpu.memory_space<vmem>>, vector<1x516xf32>
    %14 = vector.broadcast %13 : vector<1x516xf32> to vector<2x516xf32>
    %15 = arith.addf %12, %14 : vector<2x516xf32>
    %16 = arith.mulf %15, %15 : vector<2x516xf32>
    %c0_15 = arith.constant 0 : index
    %c0_16 = arith.constant 0 : index
    %17 = vector.load %arg7[%c0_15, %c0_16] : memref<516x516xf32, #tpu.memory_space<vmem>>, vector<516x516xf32>
    %cst_17 = arith.constant dense<0.000000e+00> : vector<2x516xf32>
    %18 = tpu.matmul %16, %17, %cst_17 {dimension_numbers = #tpu.dot_dimension_numbers<[1], [0], [0], [1], [0, 0, 1, 1], [], []>} : vector<2x516xf32>, vector<516x516xf32>, vector<2x516xf32> -> vector<2x516xf32>
    %c1 = arith.constant 1 : index
    %c0_18 = arith.constant 0 : index
    %19 = vector.load %arg5[%c1, %c0_18] : memref<26x640xf32, #tpu.memory_space<vmem>>, vector<1x516xf32>
    %20 = vector.broadcast %19 : vector<1x516xf32> to vector<2x516xf32>
    %21 = arith.addf %18, %20 : vector<2x516xf32>
    %cst_19 = arith.constant 9.99999997E-7 : f32
    %22 = vector.broadcast %cst_19 : f32 to vector<2x516xf32>
    %23 = arith.maximumf %21, %22 : vector<2x516xf32>
    %24 = math.rsqrt %23 : vector<2x516xf32>
    %25 = arith.mulf %15, %24 : vector<2x516xf32>
    %c0_20 = arith.constant 0 : index
    %c0_21 = arith.constant 0 : index
    %26 = vector.load %arg8[%c0_20, %c0_21] : memref<516x256xf32, #tpu.memory_space<vmem>>, vector<516x256xf32>
    %cst_22 = arith.constant dense<0.000000e+00> : vector<2x256xf32>
    %27 = tpu.matmul %25, %26, %cst_22 {dimension_numbers = #tpu.dot_dimension_numbers<[1], [0], [0], [1], [0, 0, 1, 1], [], []>} : vector<2x516xf32>, vector<516x256xf32>, vector<2x256xf32> -> vector<2x256xf32>
    %c2 = arith.constant 2 : index
    %c0_23 = arith.constant 0 : index
    %28 = vector.load %arg5[%c2, %c0_23] : memref<26x640xf32, #tpu.memory_space<vmem>>, vector<1x256xf32>
    %29 = vector.broadcast %28 : vector<1x256xf32> to vector<2x256xf32>
    %30 = arith.addf %27, %29 : vector<2x256xf32>
    %31 = arith.mulf %30, %30 : vector<2x256xf32>
    %c0_24 = arith.constant 0 : index
    %c0_25 = arith.constant 0 : index
    %32 = vector.load %arg9[%c0_24, %c0_25] : memref<256x256xf32, #tpu.memory_space<vmem>>, vector<256x256xf32>
    %cst_26 = arith.constant dense<0.000000e+00> : vector<2x256xf32>
    %33 = tpu.matmul %31, %32, %cst_26 {dimension_numbers = #tpu.dot_dimension_numbers<[1], [0], [0], [1], [0, 0, 1, 1], [], []>} : vector<2x256xf32>, vector<256x256xf32>, vector<2x256xf32> -> vector<2x256xf32>
    %c3 = arith.constant 3 : index
    %c0_27 = arith.constant 0 : index
    %34 = vector.load %arg5[%c3, %c0_27] : memref<26x640xf32, #tpu.memory_space<vmem>>, vector<1x256xf32>
    %35 = vector.broadcast %34 : vector<1x256xf32> to vector<2x256xf32>
    %36 = arith.addf %33, %35 : vector<2x256xf32>
    %cst_28 = arith.constant 9.99999997E-7 : f32
    %37 = vector.broadcast %cst_28 : f32 to vector<2x256xf32>
    %38 = arith.maximumf %36, %37 : vector<2x256xf32>
    %39 = math.rsqrt %38 : vector<2x256xf32>
    %40 = arith.mulf %30, %39 : vector<2x256xf32>
    %c0_29 = arith.constant 0 : index
    %c0_30 = arith.constant 0 : index
    %41 = vector.load %arg10[%c0_29, %c0_30] : memref<256x124xf32, #tpu.memory_space<vmem>>, vector<256x124xf32>
    %cst_31 = arith.constant dense<0.000000e+00> : vector<2x124xf32>
    %42 = tpu.matmul %40, %41, %cst_31 {dimension_numbers = #tpu.dot_dimension_numbers<[1], [0], [0], [1], [0, 0, 1, 1], [], []>} : vector<2x256xf32>, vector<256x124xf32>, vector<2x124xf32> -> vector<2x124xf32>
    %c4 = arith.constant 4 : index
    %c0_32 = arith.constant 0 : index
    %43 = vector.load %arg5[%c4, %c0_32] : memref<26x640xf32, #tpu.memory_space<vmem>>, vector<1x124xf32>
    %44 = vector.broadcast %43 : vector<1x124xf32> to vector<2x124xf32>
    %45 = arith.addf %42, %44 : vector<2x124xf32>
    %cst_33 = arith.constant 0.000000e+00 : f32
    %46 = vector.broadcast %cst_33 : f32 to vector<2x124xf32>
    %47 = arith.maximumf %45, %46 : vector<2x124xf32>
    %c0_34 = arith.constant 0 : index
    %c0_35 = arith.constant 0 : index
    %48 = vector.load %arg11[%c0_34, %c0_35] : memref<124x60xf32, #tpu.memory_space<vmem>>, vector<124x60xf32>
    %cst_36 = arith.constant dense<0.000000e+00> : vector<2x60xf32>
    %49 = tpu.matmul %47, %48, %cst_36 {dimension_numbers = #tpu.dot_dimension_numbers<[1], [0], [0], [1], [0, 0, 1, 1], [], []>} : vector<2x124xf32>, vector<124x60xf32>, vector<2x60xf32> -> vector<2x60xf32>
    %c5 = arith.constant 5 : index
    %c0_37 = arith.constant 0 : index
    %50 = vector.load %arg5[%c5, %c0_37] : memref<26x640xf32, #tpu.memory_space<vmem>>, vector<1x60xf32>
    %51 = vector.broadcast %50 : vector<1x60xf32> to vector<2x60xf32>
    %52 = arith.addf %49, %51 : vector<2x60xf32>
    %cst_38 = arith.constant 0.000000e+00 : f32
    %53 = vector.broadcast %cst_38 : f32 to vector<2x60xf32>
    %54 = arith.maximumf %52, %53 : vector<2x60xf32>
    %c0_39 = arith.constant 0 : index
    %c0_40 = arith.constant 0 : index
    %55 = vector.load %arg12[%c0_39, %c0_40] : memref<60x28xf32, #tpu.memory_space<vmem>>, vector<60x28xf32>
    %cst_41 = arith.constant dense<0.000000e+00> : vector<2x28xf32>
    %56 = tpu.matmul %54, %55, %cst_41 {dimension_numbers = #tpu.dot_dimension_numbers<[1], [0], [0], [1], [0, 0, 1, 1], [], []>} : vector<2x60xf32>, vector<60x28xf32>, vector<2x28xf32> -> vector<2x28xf32>
    %c6 = arith.constant 6 : index
    %c0_42 = arith.constant 0 : index
    %57 = vector.load %arg5[%c6, %c0_42] : memref<26x640xf32, #tpu.memory_space<vmem>>, vector<1x28xf32>
    %58 = vector.broadcast %57 : vector<1x28xf32> to vector<2x28xf32>
    %59 = arith.addf %56, %58 : vector<2x28xf32>
    %c0_43 = arith.constant 0 : index
    %c0_44 = arith.constant 0 : index
    %60 = vector.load %arg13[%c0_43, %c0_44] : memref<28x60xf32, #tpu.memory_space<vmem>>, vector<28x60xf32>
    %cst_45 = arith.constant dense<0.000000e+00> : vector<2x60xf32>
    %61 = tpu.matmul %59, %60, %cst_45 {dimension_numbers = #tpu.dot_dimension_numbers<[1], [0], [0], [1], [0, 0, 1, 1], [], []>} : vector<2x28xf32>, vector<28x60xf32>, vector<2x60xf32> -> vector<2x60xf32>
    %c7 = arith.constant 7 : index
    %c0_46 = arith.constant 0 : index
    %62 = vector.load %arg5[%c7, %c0_46] : memref<26x640xf32, #tpu.memory_space<vmem>>, vector<1x60xf32>
    %63 = vector.broadcast %62 : vector<1x60xf32> to vector<2x60xf32>
    %64 = arith.addf %61, %63 : vector<2x60xf32>
    %cst_47 = arith.constant 0.000000e+00 : f32
    %65 = vector.broadcast %cst_47 : f32 to vector<2x60xf32>
    %66 = arith.maximumf %64, %65 : vector<2x60xf32>
    %c0_48 = arith.constant 0 : index
    %c0_49 = arith.constant 0 : index
    %67 = vector.load %arg14[%c0_48, %c0_49] : memref<60x124xf32, #tpu.memory_space<vmem>>, vector<60x124xf32>
    %cst_50 = arith.constant dense<0.000000e+00> : vector<2x124xf32>
    %68 = tpu.matmul %66, %67, %cst_50 {dimension_numbers = #tpu.dot_dimension_numbers<[1], [0], [0], [1], [0, 0, 1, 1], [], []>} : vector<2x60xf32>, vector<60x124xf32>, vector<2x124xf32> -> vector<2x124xf32>
    %c8 = arith.constant 8 : index
    %c0_51 = arith.constant 0 : index
    %69 = vector.load %arg5[%c8, %c0_51] : memref<26x640xf32, #tpu.memory_space<vmem>>, vector<1x124xf32>
    %70 = vector.broadcast %69 : vector<1x124xf32> to vector<2x124xf32>
    %71 = arith.addf %68, %70 : vector<2x124xf32>
    %cst_52 = arith.constant 0.000000e+00 : f32
    %72 = vector.broadcast %cst_52 : f32 to vector<2x124xf32>
    %73 = arith.maximumf %71, %72 : vector<2x124xf32>
    %c0_53 = arith.constant 0 : index
    %c0_54 = arith.constant 0 : index
    %74 = vector.load %arg15[%c0_53, %c0_54] : memref<124x256xf32, #tpu.memory_space<vmem>>, vector<124x256xf32>
    %cst_55 = arith.constant dense<0.000000e+00> : vector<2x256xf32>
    %75 = tpu.matmul %73, %74, %cst_55 {dimension_numbers = #tpu.dot_dimension_numbers<[1], [0], [0], [1], [0, 0, 1, 1], [], []>} : vector<2x124xf32>, vector<124x256xf32>, vector<2x256xf32> -> vector<2x256xf32>
    %c9 = arith.constant 9 : index
    %c0_56 = arith.constant 0 : index
    %76 = vector.load %arg5[%c9, %c0_56] : memref<26x640xf32, #tpu.memory_space<vmem>>, vector<1x256xf32>
    %77 = vector.broadcast %76 : vector<1x256xf32> to vector<2x256xf32>
    %78 = arith.addf %75, %77 : vector<2x256xf32>
    %79 = arith.mulf %40, %78 : vector<2x256xf32>
    %80 = arith.addf %40, %79 : vector<2x256xf32>
    %c0_57 = arith.constant 0 : index
    %c0_58 = arith.constant 0 : index
    %81 = vector.load %arg16[%c0_57, %c0_58] : memref<256x124xf32, #tpu.memory_space<vmem>>, vector<256x124xf32>
    %cst_59 = arith.constant dense<0.000000e+00> : vector<2x124xf32>
    %82 = tpu.matmul %80, %81, %cst_59 {dimension_numbers = #tpu.dot_dimension_numbers<[1], [0], [0], [1], [0, 0, 1, 1], [], []>} : vector<2x256xf32>, vector<256x124xf32>, vector<2x124xf32> -> vector<2x124xf32>
    %c10 = arith.constant 10 : index
    %c0_60 = arith.constant 0 : index
    %83 = vector.load %arg5[%c10, %c0_60] : memref<26x640xf32, #tpu.memory_space<vmem>>, vector<1x124xf32>
    %84 = vector.broadcast %83 : vector<1x124xf32> to vector<2x124xf32>
    %85 = arith.addf %82, %84 : vector<2x124xf32>
    %86 = arith.mulf %85, %85 : vector<2x124xf32>
    %c0_61 = arith.constant 0 : index
    %c0_62 = arith.constant 0 : index
    %87 = vector.load %arg17[%c0_61, %c0_62] : memref<124x124xf32, #tpu.memory_space<vmem>>, vector<124x124xf32>
    %cst_63 = arith.constant dense<0.000000e+00> : vector<2x124xf32>
    %88 = tpu.matmul %86, %87, %cst_63 {dimension_numbers = #tpu.dot_dimension_numbers<[1], [0], [0], [1], [0, 0, 1, 1], [], []>} : vector<2x124xf32>, vector<124x124xf32>, vector<2x124xf32> -> vector<2x124xf32>
    %c11 = arith.constant 11 : index
    %c0_64 = arith.constant 0 : index
    %89 = vector.load %arg5[%c11, %c0_64] : memref<26x640xf32, #tpu.memory_space<vmem>>, vector<1x124xf32>
    %90 = vector.broadcast %89 : vector<1x124xf32> to vector<2x124xf32>
    %91 = arith.addf %88, %90 : vector<2x124xf32>
    %cst_65 = arith.constant 9.99999997E-7 : f32
    %92 = vector.broadcast %cst_65 : f32 to vector<2x124xf32>
    %93 = arith.maximumf %91, %92 : vector<2x124xf32>
    %94 = math.rsqrt %93 : vector<2x124xf32>
    %95 = arith.mulf %85, %94 : vector<2x124xf32>
    %c0_66 = arith.constant 0 : index
    %c0_67 = arith.constant 0 : index
    %96 = vector.load %arg18[%c0_66, %c0_67] : memref<124x64xf32, #tpu.memory_space<vmem>>, vector<124x64xf32>
    %cst_68 = arith.constant dense<0.000000e+00> : vector<2x64xf32>
    %97 = tpu.matmul %95, %96, %cst_68 {dimension_numbers = #tpu.dot_dimension_numbers<[1], [0], [0], [1], [0, 0, 1, 1], [], []>} : vector<2x124xf32>, vector<124x64xf32>, vector<2x64xf32> -> vector<2x64xf32>
    %c12 = arith.constant 12 : index
    %c0_69 = arith.constant 0 : index
    %98 = vector.load %arg5[%c12, %c0_69] : memref<26x640xf32, #tpu.memory_space<vmem>>, vector<1x64xf32>
    %99 = vector.broadcast %98 : vector<1x64xf32> to vector<2x64xf32>
    %100 = arith.addf %97, %99 : vector<2x64xf32>
    %c0_70 = arith.constant 0 : index
    %c0_71 = arith.constant 0 : index
    %101 = vector.load %arg19[%c0_70, %c0_71] : memref<64x60xf32, #tpu.memory_space<vmem>>, vector<64x60xf32>
    %cst_72 = arith.constant dense<0.000000e+00> : vector<2x60xf32>
    %102 = tpu.matmul %100, %101, %cst_72 {dimension_numbers = #tpu.dot_dimension_numbers<[1], [0], [0], [1], [0, 0, 1, 1], [], []>} : vector<2x64xf32>, vector<64x60xf32>, vector<2x60xf32> -> vector<2x60xf32>
    %c13 = arith.constant 13 : index
    %c0_73 = arith.constant 0 : index
    %103 = vector.load %arg5[%c13, %c0_73] : memref<26x640xf32, #tpu.memory_space<vmem>>, vector<1x60xf32>
    %104 = vector.broadcast %103 : vector<1x60xf32> to vector<2x60xf32>
    %105 = arith.addf %102, %104 : vector<2x60xf32>
    %cst_74 = arith.constant 0.000000e+00 : f32
    %106 = vector.broadcast %cst_74 : f32 to vector<2x60xf32>
    %107 = arith.maximumf %105, %106 : vector<2x60xf32>
    %c0_75 = arith.constant 0 : index
    %c0_76 = arith.constant 0 : index
    %108 = vector.load %arg20[%c0_75, %c0_76] : memref<60x28xf32, #tpu.memory_space<vmem>>, vector<60x28xf32>
    %cst_77 = arith.constant dense<0.000000e+00> : vector<2x28xf32>
    %109 = tpu.matmul %107, %108, %cst_77 {dimension_numbers = #tpu.dot_dimension_numbers<[1], [0], [0], [1], [0, 0, 1, 1], [], []>} : vector<2x60xf32>, vector<60x28xf32>, vector<2x28xf32> -> vector<2x28xf32>
    %c14 = arith.constant 14 : index
    %c0_78 = arith.constant 0 : index
    %110 = vector.load %arg5[%c14, %c0_78] : memref<26x640xf32, #tpu.memory_space<vmem>>, vector<1x28xf32>
    %111 = vector.broadcast %110 : vector<1x28xf32> to vector<2x28xf32>
    %112 = arith.addf %109, %111 : vector<2x28xf32>
    %cst_79 = arith.constant 0.000000e+00 : f32
    %113 = vector.broadcast %cst_79 : f32 to vector<2x28xf32>
    %114 = arith.maximumf %112, %113 : vector<2x28xf32>
    %c0_80 = arith.constant 0 : index
    %c0_81 = arith.constant 0 : index
    %115 = vector.load %arg21[%c0_80, %c0_81] : memref<28x24xf32, #tpu.memory_space<vmem>>, vector<28x24xf32>
    %cst_82 = arith.constant dense<0.000000e+00> : vector<2x24xf32>
    %116 = tpu.matmul %114, %115, %cst_82 {dimension_numbers = #tpu.dot_dimension_numbers<[1], [0], [0], [1], [0, 0, 1, 1], [], []>} : vector<2x28xf32>, vector<28x24xf32>, vector<2x24xf32> -> vector<2x24xf32>
    %c15 = arith.constant 15 : index
    %c0_83 = arith.constant 0 : index
    %117 = vector.load %arg5[%c15, %c0_83] : memref<26x640xf32, #tpu.memory_space<vmem>>, vector<1x24xf32>
    %118 = vector.broadcast %117 : vector<1x24xf32> to vector<2x24xf32>
    %119 = arith.addf %116, %118 : vector<2x24xf32>
    %c0_84 = arith.constant 0 : index
    %c0_85 = arith.constant 0 : index
    %120 = vector.load %arg22[%c0_84, %c0_85] : memref<24x28xf32, #tpu.memory_space<vmem>>, vector<24x28xf32>
    %cst_86 = arith.constant dense<0.000000e+00> : vector<2x28xf32>
    %121 = tpu.matmul %119, %120, %cst_86 {dimension_numbers = #tpu.dot_dimension_numbers<[1], [0], [0], [1], [0, 0, 1, 1], [], []>} : vector<2x24xf32>, vector<24x28xf32>, vector<2x28xf32> -> vector<2x28xf32>
    %c16 = arith.constant 16 : index
    %c0_87 = arith.constant 0 : index
    %122 = vector.load %arg5[%c16, %c0_87] : memref<26x640xf32, #tpu.memory_space<vmem>>, vector<1x28xf32>
    %123 = vector.broadcast %122 : vector<1x28xf32> to vector<2x28xf32>
    %124 = arith.addf %121, %123 : vector<2x28xf32>
    %cst_88 = arith.constant 0.000000e+00 : f32
    %125 = vector.broadcast %cst_88 : f32 to vector<2x28xf32>
    %126 = arith.maximumf %124, %125 : vector<2x28xf32>
    %c0_89 = arith.constant 0 : index
    %c0_90 = arith.constant 0 : index
    %127 = vector.load %arg23[%c0_89, %c0_90] : memref<28x60xf32, #tpu.memory_space<vmem>>, vector<28x60xf32>
    %cst_91 = arith.constant dense<0.000000e+00> : vector<2x60xf32>
    %128 = tpu.matmul %126, %127, %cst_91 {dimension_numbers = #tpu.dot_dimension_numbers<[1], [0], [0], [1], [0, 0, 1, 1], [], []>} : vector<2x28xf32>, vector<28x60xf32>, vector<2x60xf32> -> vector<2x60xf32>
    %c17 = arith.constant 17 : index
    %c0_92 = arith.constant 0 : index
    %129 = vector.load %arg5[%c17, %c0_92] : memref<26x640xf32, #tpu.memory_space<vmem>>, vector<1x60xf32>
    %130 = vector.broadcast %129 : vector<1x60xf32> to vector<2x60xf32>
    %131 = arith.addf %128, %130 : vector<2x60xf32>
    %cst_93 = arith.constant 0.000000e+00 : f32
    %132 = vector.broadcast %cst_93 : f32 to vector<2x60xf32>
    %133 = arith.maximumf %131, %132 : vector<2x60xf32>
    %c0_94 = arith.constant 0 : index
    %c0_95 = arith.constant 0 : index
    %134 = vector.load %arg24[%c0_94, %c0_95] : memref<60x64xf32, #tpu.memory_space<vmem>>, vector<60x64xf32>
    %cst_96 = arith.constant dense<0.000000e+00> : vector<2x64xf32>
    %135 = tpu.matmul %133, %134, %cst_96 {dimension_numbers = #tpu.dot_dimension_numbers<[1], [0], [0], [1], [0, 0, 1, 1], [], []>} : vector<2x60xf32>, vector<60x64xf32>, vector<2x64xf32> -> vector<2x64xf32>
    %c18 = arith.constant 18 : index
    %c0_97 = arith.constant 0 : index
    %136 = vector.load %arg5[%c18, %c0_97] : memref<26x640xf32, #tpu.memory_space<vmem>>, vector<1x64xf32>
    %137 = vector.broadcast %136 : vector<1x64xf32> to vector<2x64xf32>
    %138 = arith.addf %135, %137 : vector<2x64xf32>
    %139 = arith.mulf %100, %138 : vector<2x64xf32>
    %140 = arith.addf %100, %139 : vector<2x64xf32>
    %c0_98 = arith.constant 0 : index
    %c0_99 = arith.constant 0 : index
    %141 = vector.load %arg25[%c0_98, %c0_99] : memref<516x64xf32, #tpu.memory_space<vmem>>, vector<516x64xf32>
    %cst_100 = arith.constant dense<0.000000e+00> : vector<2x64xf32>
    %142 = tpu.matmul %25, %141, %cst_100 {dimension_numbers = #tpu.dot_dimension_numbers<[1], [0], [0], [1], [0, 0, 1, 1], [], []>} : vector<2x516xf32>, vector<516x64xf32>, vector<2x64xf32> -> vector<2x64xf32>
    %c19 = arith.constant 19 : index
    %c0_101 = arith.constant 0 : index
    %143 = vector.load %arg5[%c19, %c0_101] : memref<26x640xf32, #tpu.memory_space<vmem>>, vector<1x64xf32>
    %144 = vector.broadcast %143 : vector<1x64xf32> to vector<2x64xf32>
    %145 = arith.addf %142, %144 : vector<2x64xf32>
    %c0_102 = arith.constant 0 : index
    %c0_103 = arith.constant 0 : index
    %146 = vector.load %arg26[%c0_102, %c0_103] : memref<256x64xf32, #tpu.memory_space<vmem>>, vector<256x64xf32>
    %cst_104 = arith.constant dense<0.000000e+00> : vector<2x64xf32>
    %147 = tpu.matmul %40, %146, %cst_104 {dimension_numbers = #tpu.dot_dimension_numbers<[1], [0], [0], [1], [0, 0, 1, 1], [], []>} : vector<2x256xf32>, vector<256x64xf32>, vector<2x64xf32> -> vector<2x64xf32>
    %c20 = arith.constant 20 : index
    %c0_105 = arith.constant 0 : index
    %148 = vector.load %arg5[%c20, %c0_105] : memref<26x640xf32, #tpu.memory_space<vmem>>, vector<1x64xf32>
    %149 = vector.broadcast %148 : vector<1x64xf32> to vector<2x64xf32>
    %150 = arith.addf %147, %149 : vector<2x64xf32>
    %c0_106 = arith.constant 0 : index
    %c0_107 = arith.constant 0 : index
    %151 = vector.load %arg27[%c0_106, %c0_107] : memref<124x64xf32, #tpu.memory_space<vmem>>, vector<124x64xf32>
    %cst_108 = arith.constant dense<0.000000e+00> : vector<2x64xf32>
    %152 = tpu.matmul %95, %151, %cst_108 {dimension_numbers = #tpu.dot_dimension_numbers<[1], [0], [0], [1], [0, 0, 1, 1], [], []>} : vector<2x124xf32>, vector<124x64xf32>, vector<2x64xf32> -> vector<2x64xf32>
    %c21 = arith.constant 21 : index
    %c0_109 = arith.constant 0 : index
    %153 = vector.load %arg5[%c21, %c0_109] : memref<26x640xf32, #tpu.memory_space<vmem>>, vector<1x64xf32>
    %154 = vector.broadcast %153 : vector<1x64xf32> to vector<2x64xf32>
    %155 = arith.addf %152, %154 : vector<2x64xf32>
    %c0_110 = arith.constant 0 : index
    %c0_111 = arith.constant 0 : index
    %156 = vector.load %arg28[%c0_110, %c0_111] : memref<64x32xf32, #tpu.memory_space<vmem>>, vector<64x32xf32>
    %cst_112 = arith.constant dense<0.000000e+00> : vector<2x32xf32>
    %157 = tpu.matmul %140, %156, %cst_112 {dimension_numbers = #tpu.dot_dimension_numbers<[1], [0], [0], [1], [0, 0, 1, 1], [], []>} : vector<2x64xf32>, vector<64x32xf32>, vector<2x32xf32> -> vector<2x32xf32>
    %c22 = arith.constant 22 : index
    %c0_113 = arith.constant 0 : index
    %158 = vector.load %arg5[%c22, %c0_113] : memref<26x640xf32, #tpu.memory_space<vmem>>, vector<1x32xf32>
    %159 = vector.broadcast %158 : vector<1x32xf32> to vector<2x32xf32>
    %160 = arith.addf %157, %159 : vector<2x32xf32>
    %c0_114 = arith.constant 0 : index
    %c0_115 = arith.constant 0 : index
    %161 = vector.load %arg29[%c0_114, %c0_115] : memref<64x32xf32, #tpu.memory_space<vmem>>, vector<64x32xf32>
    %cst_116 = arith.constant dense<0.000000e+00> : vector<2x32xf32>
    %162 = tpu.matmul %145, %161, %cst_116 {dimension_numbers = #tpu.dot_dimension_numbers<[1], [0], [0], [1], [0, 0, 1, 1], [], []>} : vector<2x64xf32>, vector<64x32xf32>, vector<2x32xf32> -> vector<2x32xf32>
    %c23 = arith.constant 23 : index
    %c0_117 = arith.constant 0 : index
    %163 = vector.load %arg5[%c23, %c0_117] : memref<26x640xf32, #tpu.memory_space<vmem>>, vector<1x32xf32>
    %164 = vector.broadcast %163 : vector<1x32xf32> to vector<2x32xf32>
    %165 = arith.addf %162, %164 : vector<2x32xf32>
    %166 = arith.addf %160, %165 : vector<2x32xf32>
    %c0_118 = arith.constant 0 : index
    %c0_119 = arith.constant 0 : index
    %167 = vector.load %arg30[%c0_118, %c0_119] : memref<64x32xf32, #tpu.memory_space<vmem>>, vector<64x32xf32>
    %cst_120 = arith.constant dense<0.000000e+00> : vector<2x32xf32>
    %168 = tpu.matmul %150, %167, %cst_120 {dimension_numbers = #tpu.dot_dimension_numbers<[1], [0], [0], [1], [0, 0, 1, 1], [], []>} : vector<2x64xf32>, vector<64x32xf32>, vector<2x32xf32> -> vector<2x32xf32>
    %c24 = arith.constant 24 : index
    %c0_121 = arith.constant 0 : index
    %169 = vector.load %arg5[%c24, %c0_121] : memref<26x640xf32, #tpu.memory_space<vmem>>, vector<1x32xf32>
    %170 = vector.broadcast %169 : vector<1x32xf32> to vector<2x32xf32>
    %171 = arith.addf %168, %170 : vector<2x32xf32>
    %172 = arith.addf %166, %171 : vector<2x32xf32>
    %c0_122 = arith.constant 0 : index
    %c0_123 = arith.constant 0 : index
    %173 = vector.load %arg31[%c0_122, %c0_123] : memref<64x32xf32, #tpu.memory_space<vmem>>, vector<64x32xf32>
    %cst_124 = arith.constant dense<0.000000e+00> : vector<2x32xf32>
    %174 = tpu.matmul %155, %173, %cst_124 {dimension_numbers = #tpu.dot_dimension_numbers<[1], [0], [0], [1], [0, 0, 1, 1], [], []>} : vector<2x64xf32>, vector<64x32xf32>, vector<2x32xf32> -> vector<2x32xf32>
    %c25 = arith.constant 25 : index
    %c0_125 = arith.constant 0 : index
    %175 = vector.load %arg5[%c25, %c0_125] : memref<26x640xf32, #tpu.memory_space<vmem>>, vector<1x32xf32>
    %176 = vector.broadcast %175 : vector<1x32xf32> to vector<2x32xf32>
    %177 = arith.addf %174, %176 : vector<2x32xf32>
    %178 = arith.addf %172, %177 : vector<2x32xf32>
    %c0_126 = arith.constant 0 : index
    %c0_127 = arith.constant 0 : index
    %179 = vector.load %arg32[%c0_126, %c0_127] : memref<2x32xf32, #tpu.memory_space<vmem>>, vector<2x32xf32>
    tpu.vector_store %arg32[%c0_126, %c0_127], %178 {strides = array<i32>} : memref<2x32xf32, #tpu.memory_space<vmem>>, vector<2x32xf32>,
    return
  }
}

</mosaic_0001>

<llo_original>
// kernel: run.1
$region0: #{run.1}
  #allocation0 [shape = 'u32[]', space=smem, size = 0x4, offset = 0x4, fixed_abs, tag = 'smem constant byte address 0x4 - core index']
  #allocation1 [shape = 'u32[144,128]{1,0:T(1,128)}', space=vmem, size = 0x12000, scoped, tag = 'internal scratch']
  %s0 = inlined_call_operand.smem [shape: u32[33], index: -1, kind: input, shape index: {}]
  %s1 = sld [smem:[%s0]]
  %s2 = scalar_lea.smem %s0, 1
  %s3 = sld [smem:[%s2]]
  %s4 = scalar_lea.smem %s0, 2
  %s5 = sld [smem:[%s4]]
  %s6 = scalar_lea.smem %s0, 3
  %s7 = sld [smem:[%s6]]
  %s8 = scalar_lea.smem %s0, 4
  %s9 = sld [smem:[%s8]]
  %s10 = scalar_lea.smem %s0, 5
  %s11 = sld [smem:[%s10]]
  %s12 = scalar_lea.smem %s0, 6
  %s13 = sld [smem:[%s12]]
  %s14 = scalar_lea.smem %s0, 7
  %s15 = sld [smem:[%s14]]
  %s16 = scalar_lea.smem %s0, 8
  %s17 = sld [smem:[%s16]]
  %s18 = scalar_lea.smem %s0, 9
  %s19 = sld [smem:[%s18]]
  %s20 = scalar_lea.smem %s0, 10
  %s21 = sld [smem:[%s20]]
  %s22 = scalar_lea.smem %s0, 11
  %s23 = sld [smem:[%s22]]
  %s24 = scalar_lea.smem %s0, 12
  %s25 = sld [smem:[%s24]]
  %s26 = scalar_lea.smem %s0, 13
  %s27 = sld [smem:[%s26]]
  %s28 = scalar_lea.smem %s0, 14
  %s29 = sld [smem:[%s28]]
  %s30 = scalar_lea.smem %s0, 15
  %s31 = sld [smem:[%s30]]
  %s32 = scalar_lea.smem %s0, 16
  %s33 = sld [smem:[%s32]]
  %s34 = scalar_lea.smem %s0, 17
  %s35 = sld [smem:[%s34]]
  %s36 = scalar_lea.smem %s0, 18
  %s37 = sld [smem:[%s36]]
  %s38 = scalar_lea.smem %s0, 19
  %s39 = sld [smem:[%s38]]
  %s40 = scalar_lea.smem %s0, 20
  %s41 = sld [smem:[%s40]]
  %s42 = scalar_lea.smem %s0, 21
  %s43 = sld [smem:[%s42]]
  %s44 = scalar_lea.smem %s0, 22
  %s45 = sld [smem:[%s44]]
  %s46 = scalar_lea.smem %s0, 23
  %s47 = sld [smem:[%s46]]
  %s48 = scalar_lea.smem %s0, 24
  %s49 = sld [smem:[%s48]]
  %s50 = scalar_lea.smem %s0, 25
  %s51 = sld [smem:[%s50]]
  %s52 = scalar_lea.smem %s0, 26
  %s53 = sld [smem:[%s52]]
  %s54 = scalar_lea.smem %s0, 27
  %s55 = sld [smem:[%s54]]
  %s56 = scalar_lea.smem %s0, 28
  %s57 = sld [smem:[%s56]]
  %s58 = scalar_lea.smem %s0, 29
  %s59 = sld [smem:[%s58]]
  %s60 = scalar_lea.smem %s0, 30
  %s61 = sld [smem:[%s60]]
  %s62 = scalar_lea.smem %s0, 31
  %s63 = sld [smem:[%s62]]
  %s64 = scalar_lea.smem %s0, 32
  %s65 = sld [smem:[%s64]]
  %s66 = sld [smem:[#allocation0]]
  $region190: #{run.1} parent=0
    _
  %s68 = ssub.s32 1, %s66
  %s69 = scalar_select 0, %s68, %s66
  $region1: #{run.1} parent=0
    #allocation2 [shape = 'u8[131072]{0}', space=vmem, size = 0x20000, scoped, tag = 'input window, operand 1, single buffered']
    #allocation3 [shape = 's32[1]{0}', space=sflag, size = 0x4, scoped, tag = 'scoped memory for run.1']
    #allocation4 [shape = 's32[1]{0}', space=sflag, size = 0x4, scoped, tag = 'scoped memory for run.1']
    #allocation5 [shape = 'u8[2048]{0}', space=vmem, size = 0x800, scoped, tag = 'input window, operand 2, single buffered']
    #allocation6 [shape = 's32[1]{0}', space=sflag, size = 0x4, scoped, tag = 'scoped memory for run.1']
    #allocation7 [shape = 'u8[1024]{0}', space=vmem, size = 0x400, scoped, tag = 'input window, operand 4, single buffered']
    #allocation8 [shape = 'u8[81920]{0}', space=vmem, size = 0x14000, scoped, tag = 'input window, operand 5, single buffered']
    #allocation9 [shape = 's32[1]{0}', space=sflag, size = 0x4, scoped, tag = 'scoped memory for run.1']
    #allocation10 [shape = 'u8[262144]{0}', space=vmem, size = 0x40000, scoped, tag = 'input window, operand 9, single buffered']
    #allocation11 [shape = 'u8[131072]{0}', space=vmem, size = 0x20000, scoped, tag = 'input window, operand 10, single buffered']
    #allocation12 [shape = 's32[1]{0}', space=sflag, size = 0x4, scoped, tag = 'scoped memory for run.1']
    #allocation13 [shape = 'u8[16384]{0}', space=vmem, size = 0x4000, scoped, tag = 'input window, operand 13, single buffered']
    #allocation14 [shape = 'u8[131072]{0}', space=vmem, size = 0x20000, scoped, tag = 'input window, operand 15, single buffered']
    #allocation15 [shape = 's32[1]{0}', space=sflag, size = 0x4, scoped, tag = 'scoped memory for run.1']
    #allocation16 [shape = 'u8[131072]{0}', space=vmem, size = 0x20000, scoped, tag = 'input window, operand 16, single buffered']
    #allocation17 [shape = 'u8[65536]{0}', space=vmem, size = 0x10000, scoped, tag = 'input window, operand 17, single buffered']
    #allocation18 [shape = 's32[1]{0}', space=sflag, size = 0x4, scoped, tag = 'scoped memory for run.1']
    #allocation19 [shape = 'u8[32768]{0}', space=vmem, size = 0x8000, scoped, tag = 'input window, operand 19, single buffered']
    #allocation20 [shape = 'u8[12288]{0}', space=vmem, size = 0x3000, scoped, tag = 'input window, operand 22, single buffered']
    #allocation21 [shape = 's32[1]{0}', space=sflag, size = 0x4, scoped, tag = 'scoped memory for run.1']
    #allocation22 [shape = 'u8[16384]{0}', space=vmem, size = 0x4000, scoped, tag = 'input window, operand 23, single buffered']
    #allocation23 [shape = 'u8[1024]{0}', space=vmem, size = 0x400, scoped, tag = 'output window, operand 0, single buffered']
    %70 = vsyncpa [#allocation3], 0
    %71 = vsyncpa [#allocation6], 0
    %72 = vsyncpa [#allocation9], 0
    %73 = vsyncpa [#allocation12], 0
    %74 = vsyncpa [#allocation15], 0
    %75 = vsyncpa [#allocation18], 0
    %76 = vsyncpa [#allocation21], 0
    %77 = vsyncpa [#allocation4], 0
    // Predicated region
    $region2: #{run.1} parent=1 // pred_check
      _
    $region3: #{run.1} parent=1 // pred_check_branch
      %79 = sbr.rel (0) target = $region5
    $region4: #{run.1} parent=1 // pred_region
      _
    $region5: #{run.1} parent=1 // pred_fallthru
      _
    // Predicated region
    $region6: #{run.1} parent=1 // pred_check
      _
    $region7: #{run.1} parent=1 // pred_check_branch
      %81 = sbr.rel (0) target = $region9
    $region8: #{run.1} parent=1 // pred_region
      %s83 = ssub.s32 4096, 4096
      %84 = vsyncadd [#allocation3], %s83
      %s85 = sshll.u32 [#allocation2], 4
      %s86 = int_to_ptr.vmem [resolvable:$true] %s85
      %91 = dma.hbm_to_vmem [thread:$0]  %s3, 4096, %s86, [#allocation3], 512, 512, 32
    $region9: #{run.1} parent=1 // pred_fallthru
      _
    // Predicated region
    $region10: #{run.1} parent=1 // pred_check
      _
    $region11: #{run.1} parent=1 // pred_check_branch
      %93 = sbr.rel (0) target = $region13
    $region12: #{run.1} parent=1 // pred_region
      %s95 = ssub.s32 64, 64
      %96 = vsyncadd [#allocation6], %s95
      %s98 = sshll.u32 [#allocation5], 4
      %s99 = int_to_ptr.vmem [resolvable:$true] %s98
      %101 = dma.hbm_to_vmem [thread:$0]  %s5, 64, %s99, [#allocation6]
    $region13: #{run.1} parent=1 // pred_fallthru
      _
    // Predicated region
    $region14: #{run.1} parent=1 // pred_check
      _
    $region15: #{run.1} parent=1 // pred_check_branch
      %103 = sbr.rel (0) target = $region17
    $region16: #{run.1} parent=1 // pred_region
      _
    $region17: #{run.1} parent=1 // pred_fallthru
      _
    // Predicated region
    $region18: #{run.1} parent=1 // pred_check
      _
    $region19: #{run.1} parent=1 // pred_check_branch
      %105 = sbr.rel (0) target = $region21
    $region20: #{run.1} parent=1 // pred_region
      %s107 = ssub.s32 32, 32
      %108 = vsyncadd [#allocation6], %s107
      %s110 = sshll.u32 [#allocation7], 4
      %s111 = int_to_ptr.vmem [resolvable:$true] %s110
      %113 = dma.hbm_to_vmem [thread:$0]  %s9, 32, %s111, [#allocation6]
    $region21: #{run.1} parent=1 // pred_fallthru
      _
    // Predicated region
    $region22: #{run.1} parent=1 // pred_check
      _
    $region23: #{run.1} parent=1 // pred_check_branch
      %115 = sbr.rel (0) target = $region25
    $region24: #{run.1} parent=1 // pred_region
      %s117 = ssub.s32 2560, 2560
      %118 = vsyncadd [#allocation9], %s117
      %s119 = sshll.u32 [#allocation8], 4
      %s120 = int_to_ptr.vmem [resolvable:$true] %s119
      %125 = dma.hbm_to_vmem [thread:$0]  %s11, 2560, %s120, [#allocation9], 640, 640, 40
    $region25: #{run.1} parent=1 // pred_fallthru
      _
    // Predicated region
    $region26: #{run.1} parent=1 // pred_check
      _
    $region27: #{run.1} parent=1 // pred_check_branch
      %127 = sbr.rel (0) target = $region29
    $region28: #{run.1} parent=1 // pred_region
      _
    $region29: #{run.1} parent=1 // pred_fallthru
      _
    // Predicated region
    $region30: #{run.1} parent=1 // pred_check
      _
    $region31: #{run.1} parent=1 // pred_check_branch
      %129 = sbr.rel (0) target = $region33
    $region32: #{run.1} parent=1 // pred_region
      _
    $region33: #{run.1} parent=1 // pred_fallthru
      _
    // Predicated region
    $region34: #{run.1} parent=1 // pred_check
      _
    $region35: #{run.1} parent=1 // pred_check_branch
      %131 = sbr.rel (0) target = $region37
    $region36: #{run.1} parent=1 // pred_region
      _
    $region37: #{run.1} parent=1 // pred_fallthru
      _
    // Predicated region
    $region38: #{run.1} parent=1 // pred_check
      _
    $region39: #{run.1} parent=1 // pred_check_branch
      %133 = sbr.rel (0) target = $region41
    $region40: #{run.1} parent=1 // pred_region
      %s135 = ssub.s32 8192, 8192
      %136 = vsyncadd [#allocation9], %s135
      %s137 = sshll.u32 [#allocation10], 4
      %s138 = int_to_ptr.vmem [resolvable:$true] %s137
      %143 = dma.hbm_to_vmem [thread:$0]  %s19, 8192, %s138, [#allocation9], 256, 256, 16
    $region41: #{run.1} parent=1 // pred_fallthru
      _
    // Predicated region
    $region42: #{run.1} parent=1 // pred_check
      _
    $region43: #{run.1} parent=1 // pred_check_branch
      %145 = sbr.rel (0) target = $region45
    $region44: #{run.1} parent=1 // pred_region
      %s147 = ssub.s32 4096, 4096
      %148 = vsyncadd [#allocation12], %s147
      %s149 = sshll.u32 [#allocation11], 4
      %s150 = int_to_ptr.vmem [resolvable:$true] %s149
      %155 = dma.hbm_to_vmem [thread:$0]  %s21, 4096, %s150, [#allocation12], 128, 128, 8
    $region45: #{run.1} parent=1 // pred_fallthru
      _
    // Predicated region
    $region46: #{run.1} parent=1 // pred_check
      _
    $region47: #{run.1} parent=1 // pred_check_branch
      %157 = sbr.rel (0) target = $region49
    $region48: #{run.1} parent=1 // pred_region
      _
    $region49: #{run.1} parent=1 // pred_fallthru
      _
    // Predicated region
    $region50: #{run.1} parent=1 // pred_check
      _
    $region51: #{run.1} parent=1 // pred_check_branch
      %159 = sbr.rel (0) target = $region53
    $region52: #{run.1} parent=1 // pred_region
      _
    $region53: #{run.1} parent=1 // pred_fallthru
      _
    // Predicated region
    $region54: #{run.1} parent=1 // pred_check
      _
    $region55: #{run.1} parent=1 // pred_check_branch
      %161 = sbr.rel (0) target = $region57
    $region56: #{run.1} parent=1 // pred_region
      %s163 = ssub.s32 512, 512
      %164 = vsyncadd [#allocation12], %s163
      %s165 = sshll.u32 [#allocation13], 4
      %s166 = int_to_ptr.vmem [resolvable:$true] %s165
      %171 = dma.hbm_to_vmem [thread:$0]  %s27, 512, %s166, [#allocation12], 128, 128, 8
    $region57: #{run.1} parent=1 // pred_fallthru
      _
    // Predicated region
    $region58: #{run.1} parent=1 // pred_check
      _
    $region59: #{run.1} parent=1 // pred_check_branch
      %173 = sbr.rel (0) target = $region61
    $region60: #{run.1} parent=1 // pred_region
      _
    $region61: #{run.1} parent=1 // pred_fallthru
      _
    // Predicated region
    $region62: #{run.1} parent=1 // pred_check
      _
    $region63: #{run.1} parent=1 // pred_check_branch
      %175 = sbr.rel (0) target = $region65
    $region64: #{run.1} parent=1 // pred_region
      %s177 = ssub.s32 4096, 4096
      %178 = vsyncadd [#allocation15], %s177
      %s179 = sshll.u32 [#allocation14], 4
      %s180 = int_to_ptr.vmem [resolvable:$true] %s179
      %185 = dma.hbm_to_vmem [thread:$0]  %s31, 4096, %s180, [#allocation15], 256, 256, 16
    $region65: #{run.1} parent=1 // pred_fallthru
      _
    // Predicated region
    $region66: #{run.1} parent=1 // pred_check
      _
    $region67: #{run.1} parent=1 // pred_check_branch
      %187 = sbr.rel (0) target = $region69
    $region68: #{run.1} parent=1 // pred_region
      %s189 = ssub.s32 4096, 4096
      %190 = vsyncadd [#allocation15], %s189
      %s191 = sshll.u32 [#allocation16], 4
      %s192 = int_to_ptr.vmem [resolvable:$true] %s191
      %197 = dma.hbm_to_vmem [thread:$0]  %s33, 4096, %s192, [#allocation15], 128, 128, 8
    $region69: #{run.1} parent=1 // pred_fallthru
      _
    // Predicated region
    $region70: #{run.1} parent=1 // pred_check
      _
    $region71: #{run.1} parent=1 // pred_check_branch
      %199 = sbr.rel (0) target = $region73
    $region72: #{run.1} parent=1 // pred_region
      %s201 = ssub.s32 2048, 2048
      %202 = vsyncadd [#allocation18], %s201
      %s203 = sshll.u32 [#allocation17], 4
      %s204 = int_to_ptr.vmem [resolvable:$true] %s203
      %209 = dma.hbm_to_vmem [thread:$0]  %s35, 2048, %s204, [#allocation18], 128, 128, 8
    $region73: #{run.1} parent=1 // pred_fallthru
      _
    // Predicated region
    $region74: #{run.1} parent=1 // pred_check
      _
    $region75: #{run.1} parent=1 // pred_check_branch
      %211 = sbr.rel (0) target = $region77
    $region76: #{run.1} parent=1 // pred_region
      _
    $region77: #{run.1} parent=1 // pred_fallthru
      _
    // Predicated region
    $region78: #{run.1} parent=1 // pred_check
      _
    $region79: #{run.1} parent=1 // pred_check_branch
      %213 = sbr.rel (0) target = $region81
    $region80: #{run.1} parent=1 // pred_region
      %s215 = ssub.s32 1024, 1024
      %216 = vsyncadd [#allocation18], %s215
      %s217 = sshll.u32 [#allocation19], 4
      %s218 = int_to_ptr.vmem [resolvable:$true] %s217
      %223 = dma.hbm_to_vmem [thread:$0]  %s39, 1024, %s218, [#allocation18], 128, 128, 8
    $region81: #{run.1} parent=1 // pred_fallthru
      _
    // Predicated region
    $region82: #{run.1} parent=1 // pred_check
      _
    $region83: #{run.1} parent=1 // pred_check_branch
      %225 = sbr.rel (0) target = $region85
    $region84: #{run.1} parent=1 // pred_region
      _
    $region85: #{run.1} parent=1 // pred_fallthru
      _
    // Predicated region
    $region86: #{run.1} parent=1 // pred_check
      _
    $region87: #{run.1} parent=1 // pred_check_branch
      %227 = sbr.rel (0) target = $region89
    $region88: #{run.1} parent=1 // pred_region
      _
    $region89: #{run.1} parent=1 // pred_fallthru
      _
    // Predicated region
    $region90: #{run.1} parent=1 // pred_check
      _
    $region91: #{run.1} parent=1 // pred_check_branch
      %229 = sbr.rel (0) target = $region93
    $region92: #{run.1} parent=1 // pred_region
      %s231 = ssub.s32 384, 384
      %232 = vsyncadd [#allocation21], %s231
      %s233 = sshll.u32 [#allocation20], 4
      %s234 = int_to_ptr.vmem [resolvable:$true] %s233
      %239 = dma.hbm_to_vmem [thread:$0]  %s45, 384, %s234, [#allocation21], 128, 128, 8
    $region93: #{run.1} parent=1 // pred_fallthru
      _
    // Predicated region
    $region94: #{run.1} parent=1 // pred_check
      _
    $region95: #{run.1} parent=1 // pred_check_branch
      %241 = sbr.rel (0) target = $region97
    $region96: #{run.1} parent=1 // pred_region
      %s243 = ssub.s32 512, 512
      %244 = vsyncadd [#allocation21], %s243
      %s245 = sshll.u32 [#allocation22], 4
      %s246 = int_to_ptr.vmem [resolvable:$true] %s245
      %251 = dma.hbm_to_vmem [thread:$0]  %s47, 512, %s246, [#allocation21], 128, 128, 8
    $region97: #{run.1} parent=1 // pred_fallthru
      _
    // Predicated region
    $region98: #{run.1} parent=1 // pred_check
      _
    $region99: #{run.1} parent=1 // pred_check_branch
      %253 = sbr.rel (0) target = $region101
    $region100: #{run.1} parent=1 // pred_region
      _
    $region101: #{run.1} parent=1 // pred_fallthru
      _
    // Predicated region
    $region102: #{run.1} parent=1 // pred_check
      _
    $region103: #{run.1} parent=1 // pred_check_branch
      %255 = sbr.rel (0) target = $region105
    $region104: #{run.1} parent=1 // pred_region
      _
    $region105: #{run.1} parent=1 // pred_fallthru
      _
    // Predicated region
    $region106: #{run.1} parent=1 // pred_check
      _
    $region107: #{run.1} parent=1 // pred_check_branch
      %257 = sbr.rel (0) target = $region109
    $region108: #{run.1} parent=1 // pred_region
      _
    $region109: #{run.1} parent=1 // pred_fallthru
      _
    // Predicated region
    $region110: #{run.1} parent=1 // pred_check
      _
    $region111: #{run.1} parent=1 // pred_check_branch
      %259 = sbr.rel (0) target = $region113
    $region112: #{run.1} parent=1 // pred_region
      _
    $region113: #{run.1} parent=1 // pred_fallthru
      _
    // Predicated region
    $region114: #{run.1} parent=1 // pred_check
      _
    $region115: #{run.1} parent=1 // pred_check_branch
      %261 = sbr.rel (0) target = $region117
    $region116: #{run.1} parent=1 // pred_region
      _
    $region117: #{run.1} parent=1 // pred_fallthru
      _
    // Predicated region
    $region118: #{run.1} parent=1 // pred_check
      _
    $region119: #{run.1} parent=1 // pred_check_branch
      %263 = sbr.rel (0) target = $region121
    $region120: #{run.1} parent=1 // pred_region
      _
    $region121: #{run.1} parent=1 // pred_fallthru
      _
    // Predicated region
    $region122: #{run.1} parent=1 // pred_check
      _
    $region123: #{run.1} parent=1 // pred_check_branch
      %265 = sbr.rel (0) target = $region125
    $region124: #{run.1} parent=1 // pred_region
      _
    $region125: #{run.1} parent=1 // pred_fallthru
      _
    // Predicated region
    $region126: #{run.1} parent=1 // pred_check
      _
    $region127: #{run.1} parent=1 // pred_check_branch
      %267 = sbr.rel (0) target = $region129
    $region128: #{run.1} parent=1 // pred_region
      _
    $region129: #{run.1} parent=1 // pred_fallthru
      _
    // Predicated region
    $region130: #{run.1} parent=1 // pred_check
      _
    $region131: #{run.1} parent=1 // pred_check_branch
      %269 = sbr.rel (0) target = $region133
    $region132: #{run.1} parent=1 // pred_region
      %270 = dma.done [#allocation3], 4096
    $region133: #{run.1} parent=1 // pred_fallthru
      _
    // Predicated region
    $region134: #{run.1} parent=1 // pred_check
      _
    $region135: #{run.1} parent=1 // pred_check_branch
      %272 = sbr.rel (0) target = $region137
    $region136: #{run.1} parent=1 // pred_region
      %273 = dma.done [#allocation6], 64
    $region137: #{run.1} parent=1 // pred_fallthru
      _
    // Predicated region
    $region138: #{run.1} parent=1 // pred_check
      _
    $region139: #{run.1} parent=1 // pred_check_branch
      %275 = sbr.rel (0) target = $region141
    $region140: #{run.1} parent=1 // pred_region
      %276 = dma.done [#allocation6], 32
    $region141: #{run.1} parent=1 // pred_fallthru
      _
    // Predicated region
    $region142: #{run.1} parent=1 // pred_check
      _
    $region143: #{run.1} parent=1 // pred_check_branch
      %278 = sbr.rel (0) target = $region145
    $region144: #{run.1} parent=1 // pred_region
      %279 = dma.done [#allocation9], 2560
    $region145: #{run.1} parent=1 // pred_fallthru
      _
    // Predicated region
    $region146: #{run.1} parent=1 // pred_check
      _
    $region147: #{run.1} parent=1 // pred_check_branch
      %281 = sbr.rel (0) target = $region149
    $region148: #{run.1} parent=1 // pred_region
      %282 = dma.done [#allocation9], 8192
    $region149: #{run.1} parent=1 // pred_fallthru
      _
    // Predicated region
    $region150: #{run.1} parent=1 // pred_check
      _
    $region151: #{run.1} parent=1 // pred_check_branch
      %284 = sbr.rel (0) target = $region153
    $region152: #{run.1} parent=1 // pred_region
      %285 = dma.done [#allocation12], 4096
    $region153: #{run.1} parent=1 // pred_fallthru
      _
    // Predicated region
    $region154: #{run.1} parent=1 // pred_check
      _
    $region155: #{run.1} parent=1 // pred_check_branch
      %287 = sbr.rel (0) target = $region157
    $region156: #{run.1} parent=1 // pred_region
      %288 = dma.done [#allocation12], 512
    $region157: #{run.1} parent=1 // pred_fallthru
      _
    // Predicated region
    $region158: #{run.1} parent=1 // pred_check
      _
    $region159: #{run.1} parent=1 // pred_check_branch
      %290 = sbr.rel (0) target = $region161
    $region160: #{run.1} parent=1 // pred_region
      %291 = dma.done [#allocation15], 4096
    $region161: #{run.1} parent=1 // pred_fallthru
      _
    // Predicated region
    $region162: #{run.1} parent=1 // pred_check
      _
    $region163: #{run.1} parent=1 // pred_check_branch
      %293 = sbr.rel (0) target = $region165
    $region164: #{run.1} parent=1 // pred_region
      %294 = dma.done [#allocation15], 4096
    $region165: #{run.1} parent=1 // pred_fallthru
      _
    // Predicated region
    $region166: #{run.1} parent=1 // pred_check
      _
    $region167: #{run.1} parent=1 // pred_check_branch
      %296 = sbr.rel (0) target = $region169
    $region168: #{run.1} parent=1 // pred_region
      %297 = dma.done [#allocation18], 2048
    $region169: #{run.1} parent=1 // pred_fallthru
      _
    // Predicated region
    $region170: #{run.1} parent=1 // pred_check
      _
    $region171: #{run.1} parent=1 // pred_check_branch
      %299 = sbr.rel (0) target = $region173
    $region172: #{run.1} parent=1 // pred_region
      %300 = dma.done [#allocation18], 1024
    $region173: #{run.1} parent=1 // pred_fallthru
      _
    // Predicated region
    $region174: #{run.1} parent=1 // pred_check
      _
    $region175: #{run.1} parent=1 // pred_check_branch
      %302 = sbr.rel (0) target = $region177
    $region176: #{run.1} parent=1 // pred_region
      %303 = dma.done [#allocation21], 384
    $region177: #{run.1} parent=1 // pred_fallthru
      _
    // Predicated region
    $region178: #{run.1} parent=1 // pred_check
      _
    $region179: #{run.1} parent=1 // pred_check_branch
      %305 = sbr.rel (0) target = $region181
    $region180: #{run.1} parent=1 // pred_region
      %306 = dma.done [#allocation21], 512
    $region181: #{run.1} parent=1 // pred_fallthru
      _
    %v307 = vld [vmem:[%s1] sm:$0x3]
    %v308 = vld [vmem:[#allocation2] sm:$0xff]
    %v309 = vld [vmem:[#allocation2 + $0x8] sm:$0xff]
    %v310 = vld [vmem:[#allocation2 + $0x10] sm:$0xff]
    %v311 = vld [vmem:[#allocation2 + $0x18] sm:$0xff]
    %v312 = vld [vmem:[#allocation2 + $0x20] sm:$0xff]
    %v313 = vld [vmem:[#allocation2 + $0x28] sm:$0xff]
    %v314 = vld [vmem:[#allocation2 + $0x30] sm:$0xff]
    %v315 = vld [vmem:[#allocation2 + $0x38] sm:$0xff]
    %v316 = vld [vmem:[#allocation2 + $0x40] sm:$0xff]
    %v317 = vld [vmem:[#allocation2 + $0x48] sm:$0xff]
    %v318 = vld [vmem:[#allocation2 + $0x50] sm:$0xff]
    %v319 = vld [vmem:[#allocation2 + $0x58] sm:$0xff]
    %v320 = vld [vmem:[#allocation2 + $0x60] sm:$0xff]
    %v321 = vld [vmem:[#allocation2 + $0x68] sm:$0xff]
    %v322 = vld [vmem:[#allocation2 + $0x70] sm:$0xff]
    %v323 = vld [vmem:[#allocation2 + $0x78] sm:$0xff]
    %v324 = vld [vmem:[#allocation2 + $0x80] sm:$0xff]
    %v325 = vld [vmem:[#allocation2 + $0x88] sm:$0xff]
    %v326 = vld [vmem:[#allocation2 + $0x90] sm:$0xff]
    %v327 = vld [vmem:[#allocation2 + $0x98] sm:$0xff]
    %v328 = vld [vmem:[#allocation2 + $0xa0] sm:$0xff]
    %v329 = vld [vmem:[#allocation2 + $0xa8] sm:$0xff]
    %v330 = vld [vmem:[#allocation2 + $0xb0] sm:$0xff]
    %v331 = vld [vmem:[#allocation2 + $0xb8] sm:$0xff]
    %v332 = vld [vmem:[#allocation2 + $0xc0] sm:$0xff]
    %v333 = vld [vmem:[#allocation2 + $0xc8] sm:$0xff]
    %v334 = vld [vmem:[#allocation2 + $0xd0] sm:$0xff]
    %v335 = vld [vmem:[#allocation2 + $0xd8] sm:$0xff]
    %v336 = vld [vmem:[#allocation2 + $0xe0] sm:$0xff]
    %v337 = vld [vmem:[#allocation2 + $0xe8] sm:$0xff]
    %v338 = vld [vmem:[#allocation2 + $0xf0] sm:$0xff]
    %v339 = vld [vmem:[#allocation2 + $0xf8] sm:$0xff]
    %v340 = vld [vmem:[#allocation5] sm:$0xf]
    %v342 = vlaneseq
    %v343 = vshrl.u32 %v342, 7
    %v344 = vsub.s32 0, %v343
    %v345 = vrot.slane %v340, %v344
    %v346 = vlaneseq
    %v347 = vshrl.u32 %v346, 7
    %v348 = vsub.s32 1, %v347
    %v349 = vrot.slane %v340, %v348
    %v350 = vlaneseq
    %v351 = vshrl.u32 %v350, 7
    %v352 = vsub.s32 2, %v351
    %v353 = vrot.slane %v340, %v352
    %v354 = vlaneseq
    %v355 = vshrl.u32 %v354, 7
    %v356 = vsub.s32 3, %v355
    %v357 = vrot.slane %v340, %v356
    %vm362 = vcmask 523264
    %v364 = vsel %vm362, %v307, 0
    %366 = vmatprep.subr.mxu0 0.0
    %367 = vmatpush1.msra.mxu0 0.0
    %368 = vmatprep.subr.mxu0 0.0
    %369 = vmatpush1.msra.mxu0 0.0
    %370 = vmatprep.subr.mxu0 0.0
    %371 = vmatpush1.msra.mxu0 0.0
    %372 = vmatprep.subr.mxu0 0.0
    %373 = vmatpush1.msra.mxu0 0.0
    %374 = vmatprep.subr.mxu0 0.0
    %375 = vmatpush1.msra.mxu0 0.0
    %376 = vmatprep.subr.mxu0 0.0
    %377 = vmatpush1.msra.mxu0 0.0
    %378 = vmatprep.subr.mxu0 0.0
    %379 = vmatpush1.msra.mxu0 0.0
    %380 = vmatprep.subr.mxu0 0.0
    %381 = vmatpush1.msra.mxu0 0.0
    %382 = vmatprep.subr.mxu0 %v337
    %383 = vmatpush1.msra.mxu0 %v336
    %384 = vmatprep.subr.mxu0 %v333
    %385 = vmatpush1.msra.mxu0 %v332
    %386 = vmatprep.subr.mxu0 %v329
    %387 = vmatpush1.msra.mxu0 %v328
    %388 = vmatprep.subr.mxu0 %v325
    %389 = vmatpush1.msra.mxu0 %v324
    %390 = vmatprep.subr.mxu0 %v321
    %391 = vmatpush1.msra.mxu0 %v320
    %392 = vmatprep.subr.mxu0 %v317
    %393 = vmatpush1.msra.mxu0 %v316
    %394 = vmatprep.subr.mxu0 %v313
    %395 = vmatpush1.msra.mxu0 %v312
    %396 = vmatprep.subr.mxu0 %v309
    %397 = vmatpush1.msra.mxu0 %v308
    %398 = vmatprep.subr.mxu0 0.0
    %399 = vmatpush2.msra.mxu0 0.0
    %400 = vmatprep.subr.mxu0 0.0
    %401 = vmatpush2.msra.mxu0 0.0
    %402 = vmatprep.subr.mxu0 0.0
    %403 = vmatpush2.msra.mxu0 0.0
    %404 = vmatprep.subr.mxu0 0.0
    %405 = vmatpush2.msra.mxu0 0.0
    %406 = vmatprep.subr.mxu0 0.0
    %407 = vmatpush2.msra.mxu0 0.0
    %408 = vmatprep.subr.mxu0 0.0
    %409 = vmatpush2.msra.mxu0 0.0
    %410 = vmatprep.subr.mxu0 0.0
    %411 = vmatpush2.msra.mxu0 0.0
    %412 = vmatprep.subr.mxu0 0.0
    %413 = vmatpush2.msra.mxu0 0.0
    %414 = vmatprep.subr.mxu0 0.0
    %415 = vmatpush2.msra.mxu0 0.0
    %416 = vmatprep.subr.mxu0 0.0
    %417 = vmatpush2.msra.mxu0 0.0
    %418 = vmatprep.subr.mxu0 0.0
    %419 = vmatpush2.msra.mxu0 0.0
    %420 = vmatprep.subr.mxu0 0.0
    %421 = vmatpush2.msra.mxu0 0.0
    %422 = vmatprep.subr.mxu0 0.0
    %423 = vmatpush2.msra.mxu0 0.0
    %424 = vmatprep.subr.mxu0 0.0
    %425 = vmatpush2.msra.mxu0 0.0
    %426 = vmatprep.subr.mxu0 0.0
    %427 = vmatpush2.msra.mxu0 0.0
    %428 = vmatprep.subr.mxu0 0.0
    %429 = vmatpush2.msra.mxu0 0.0
    %430 = vmatprep.mubr.f32.mxu0 0.0
    %431 = vmatmul.mubr.f32.gmra.mxu0 %v364
    %v432 = vpop.f32.mrf.mxu0
    %v433 = vadd.f32 %v345, %v432
    %v434 = vpop.f32.mrf.mxu0
    %v435 = vadd.f32 %v349, %v434
    %436 = vdwg.mxu0
    %437 = vmatprep.subr.mxu0 0.0
    %438 = vmatpush1.msra.mxu0 0.0
    %439 = vmatprep.subr.mxu0 0.0
    %440 = vmatpush1.msra.mxu0 0.0
    %441 = vmatprep.subr.mxu0 0.0
    %442 = vmatpush1.msra.mxu0 0.0
    %443 = vmatprep.subr.mxu0 0.0
    %444 = vmatpush1.msra.mxu0 0.0
    %445 = vmatprep.subr.mxu0 0.0
    %446 = vmatpush1.msra.mxu0 0.0
    %447 = vmatprep.subr.mxu0 0.0
    %448 = vmatpush1.msra.mxu0 0.0
    %449 = vmatprep.subr.mxu0 0.0
    %450 = vmatpush1.msra.mxu0 0.0
    %451 = vmatprep.subr.mxu0 0.0
    %452 = vmatpush1.msra.mxu0 0.0
    %453 = vmatprep.subr.mxu0 %v339
    %454 = vmatpush1.msra.mxu0 %v338
    %455 = vmatprep.subr.mxu0 %v335
    %456 = vmatpush1.msra.mxu0 %v334
    %457 = vmatprep.subr.mxu0 %v331
    %458 = vmatpush1.msra.mxu0 %v330
    %459 = vmatprep.subr.mxu0 %v327
    %460 = vmatpush1.msra.mxu0 %v326
    %461 = vmatprep.subr.mxu0 %v323
    %462 = vmatpush1.msra.mxu0 %v322
    %463 = vmatprep.subr.mxu0 %v319
    %464 = vmatpush1.msra.mxu0 %v318
    %465 = vmatprep.subr.mxu0 %v315
    %466 = vmatpush1.msra.mxu0 %v314
    %467 = vmatprep.subr.mxu0 %v311
    %468 = vmatpush1.msra.mxu0 %v310
    %469 = vmatprep.subr.mxu0 0.0
    %470 = vmatpush2.msra.mxu0 0.0
    %471 = vmatprep.subr.mxu0 0.0
    %472 = vmatpush2.msra.mxu0 0.0
    %473 = vmatprep.subr.mxu0 0.0
    %474 = vmatpush2.msra.mxu0 0.0
    %475 = vmatprep.subr.mxu0 0.0
    %476 = vmatpush2.msra.mxu0 0.0
    %477 = vmatprep.subr.mxu0 0.0
    %478 = vmatpush2.msra.mxu0 0.0
    %479 = vmatprep.subr.mxu0 0.0
    %480 = vmatpush2.msra.mxu0 0.0
    %481 = vmatprep.subr.mxu0 0.0
    %482 = vmatpush2.msra.mxu0 0.0
    %483 = vmatprep.subr.mxu0 0.0
    %484 = vmatpush2.msra.mxu0 0.0
    %485 = vmatprep.subr.mxu0 0.0
    %486 = vmatpush2.msra.mxu0 0.0
    %487 = vmatprep.subr.mxu0 0.0
    %488 = vmatpush2.msra.mxu0 0.0
    %489 = vmatprep.subr.mxu0 0.0
    %490 = vmatpush2.msra.mxu0 0.0
    %491 = vmatprep.subr.mxu0 0.0
    %492 = vmatpush2.msra.mxu0 0.0
    %493 = vmatprep.subr.mxu0 0.0
    %494 = vmatpush2.msra.mxu0 0.0
    %495 = vmatprep.subr.mxu0 0.0
    %496 = vmatpush2.msra.mxu0 0.0
    %497 = vmatprep.subr.mxu0 0.0
    %498 = vmatpush2.msra.mxu0 0.0
    %499 = vmatprep.subr.mxu0 0.0
    %500 = vmatpush2.msra.mxu0 0.0
    %501 = vmatprep.mubr.f32.mxu0 0.0
    %502 = vmatmul.mubr.f32.gmra.mxu0 %v364
    %v503 = vpop.f32.mrf.mxu0
    %v504 = vadd.f32 %v353, %v503
    %v505 = vpop.f32.mrf.mxu0
    %v506 = vadd.f32 %v357, %v505
    %507 = vdwg.mxu0
    %v508 = vld [vmem:[%s7] sm:$0xff]
    %v509 = vld [vmem:[%s7 + $0x8] sm:$0xff]
    %v510 = vld [vmem:[%s7 + $0x10] sm:$0xff]
    %v511 = vld [vmem:[%s7 + $0x18] sm:$0xff]
    %v512 = vld [vmem:[%s7 + $0x20] sm:$0xff]
    %v513 = vld [vmem:[%s7 + $0x28] sm:$0xff]
    %v514 = vld [vmem:[%s7 + $0x30] sm:$0xff]
    %v515 = vld [vmem:[%s7 + $0x38] sm:$0xff]
    %v516 = vld [vmem:[%s7 + $0x40] sm:$0xff]
    %v517 = vld [vmem:[%s7 + $0x48] sm:$0xff]
    %v518 = vld [vmem:[%s7 + $0x50] sm:$0xff]
    %v519 = vld [vmem:[%s7 + $0x58] sm:$0xff]
    %v520 = vld [vmem:[%s7 + $0x60] sm:$0xff]
    %v521 = vld [vmem:[%s7 + $0x68] sm:$0xff]
    %v522 = vld [vmem:[%s7 + $0x70] sm:$0xff]
    %v523 = vld [vmem:[%s7 + $0x78] sm:$0xff]
    %v524 = vld [vmem:[%s7 + $0x80] sm:$0xff]
    %v525 = vld [vmem:[%s7 + $0x88] sm:$0xff]
    %v526 = vld [vmem:[%s7 + $0x90] sm:$0xff]
    %v527 = vld [vmem:[%s7 + $0x98] sm:$0xff]
    %v528 = vld [vmem:[%s7 + $0xa0] sm:$0xff]
    %v529 = vld [vmem:[%s7 + $0xa8] sm:$0xff]
    %v530 = vld [vmem:[%s7 + $0xb0] sm:$0xff]
    %v531 = vld [vmem:[%s7 + $0xb8] sm:$0xff]
    %v532 = vld [vmem:[%s7 + $0xc0] sm:$0xff]
    %v533 = vld [vmem:[%s7 + $0xc8] sm:$0xff]
    %v534 = vld [vmem:[%s7 + $0xd0] sm:$0xff]
    %v535 = vld [vmem:[%s7 + $0xd8] sm:$0xff]
    %v536 = vld [vmem:[%s7 + $0xe0] sm:$0xff]
    %v537 = vld [vmem:[%s7 + $0xe8] sm:$0xff]
    %v538 = vld [vmem:[%s7 + $0xf0] sm:$0xff]
    %v539 = vld [vmem:[%s7 + $0xf8] sm:$0xff]
    %v540 = vld [vmem:[%s7 + $0x100] sm:$0xff]
    %v541 = vld [vmem:[%s7 + $0x108] sm:$0xff]
    %v542 = vld [vmem:[%s7 + $0x110] sm:$0xff]
    %v543 = vld [vmem:[%s7 + $0x118] sm:$0xff]
    %v544 = vld [vmem:[%s7 + $0x120] sm:$0xff]
    %v545 = vld [vmem:[%s7 + $0x128] sm:$0xff]
    %v546 = vld [vmem:[%s7 + $0x130] sm:$0xff]
    %v547 = vld [vmem:[%s7 + $0x138] sm:$0xff]
    %v548 = vld [vmem:[%s7 + $0x140] sm:$0xff]
    %v549 = vld [vmem:[%s7 + $0x148] sm:$0xff]
    %v550 = vld [vmem:[%s7 + $0x150] sm:$0xff]
    %v551 = vld [vmem:[%s7 + $0x158] sm:$0xff]
    %v552 = vld [vmem:[%s7 + $0x160] sm:$0xff]
    %v553 = vld [vmem:[%s7 + $0x168] sm:$0xff]
    %v554 = vld [vmem:[%s7 + $0x170] sm:$0xff]
    %v555 = vld [vmem:[%s7 + $0x178] sm:$0xff]
    %v556 = vld [vmem:[%s7 + $0x180] sm:$0xff]
    %v557 = vld [vmem:[%s7 + $0x188] sm:$0xff]
    %v558 = vld [vmem:[%s7 + $0x190] sm:$0xff]
    %v559 = vld [vmem:[%s7 + $0x198] sm:$0xff]
    %v560 = vld [vmem:[%s7 + $0x1a0] sm:$0xff]
    %v561 = vld [vmem:[%s7 + $0x1a8] sm:$0xff]
    %v562 = vld [vmem:[%s7 + $0x1b0] sm:$0xff]
    %v563 = vld [vmem:[%s7 + $0x1b8] sm:$0xff]
    %v564 = vld [vmem:[%s7 + $0x1c0] sm:$0xff]
    %v565 = vld [vmem:[%s7 + $0x1c8] sm:$0xff]
    %v566 = vld [vmem:[%s7 + $0x1d0] sm:$0xff]
    %v567 = vld [vmem:[%s7 + $0x1d8] sm:$0xff]
    %v568 = vld [vmem:[%s7 + $0x1e0] sm:$0xff]
    %v569 = vld [vmem:[%s7 + $0x1e8] sm:$0xff]
    %v570 = vld [vmem:[%s7 + $0x1f0] sm:$0xff]
    %v571 = vld [vmem:[%s7 + $0x1f8] sm:$0xff]
    %v572 = vld [vmem:[%s7 + $0x200] sm:$0xff]
    %v573 = vld [vmem:[%s7 + $0x208] sm:$0xff]
    %v574 = vld [vmem:[%s7 + $0x210] sm:$0xff]
    %v575 = vld [vmem:[%s7 + $0x218] sm:$0xff]
    %v576 = vld [vmem:[%s7 + $0x220] sm:$0xff]
    %v577 = vld [vmem:[%s7 + $0x228] sm:$0xff]
    %v578 = vld [vmem:[%s7 + $0x230] sm:$0xff]
    %v579 = vld [vmem:[%s7 + $0x238] sm:$0xff]
    %v580 = vld [vmem:[%s7 + $0x240] sm:$0xff]
    %v581 = vld [vmem:[%s7 + $0x248] sm:$0xff]
    %v582 = vld [vmem:[%s7 + $0x250] sm:$0xff]
    %v583 = vld [vmem:[%s7 + $0x258] sm:$0xff]
    %v584 = vld [vmem:[%s7 + $0x260] sm:$0xff]
    %v585 = vld [vmem:[%s7 + $0x268] sm:$0xff]
    %v586 = vld [vmem:[%s7 + $0x270] sm:$0xff]
    %v587 = vld [vmem:[%s7 + $0x278] sm:$0xff]
    %v588 = vld [vmem:[%s7 + $0x280] sm:$0xff]
    %v589 = vld [vmem:[%s7 + $0x288] sm:$0xff]
    %v590 = vld [vmem:[%s7 + $0x290] sm:$0xff]
    %v591 = vld [vmem:[%s7 + $0x298] sm:$0xff]
    %v592 = vld [vmem:[%s7 + $0x2a0] sm:$0xff]
    %v593 = vld [vmem:[%s7 + $0x2a8] sm:$0xff]
    %v594 = vld [vmem:[%s7 + $0x2b0] sm:$0xff]
    %v595 = vld [vmem:[%s7 + $0x2b8] sm:$0xff]
    %v596 = vld [vmem:[%s7 + $0x2c0] sm:$0xff]
    %v597 = vld [vmem:[%s7 + $0x2c8] sm:$0xff]
    %v598 = vld [vmem:[%s7 + $0x2d0] sm:$0xff]
    %v599 = vld [vmem:[%s7 + $0x2d8] sm:$0xff]
    %v600 = vld [vmem:[%s7 + $0x2e0] sm:$0xff]
    %v601 = vld [vmem:[%s7 + $0x2e8] sm:$0xff]
    %v602 = vld [vmem:[%s7 + $0x2f0] sm:$0xff]
    %v603 = vld [vmem:[%s7 + $0x2f8] sm:$0xff]
    %v604 = vld [vmem:[%s7 + $0x300] sm:$0xff]
    %v605 = vld [vmem:[%s7 + $0x308] sm:$0xff]
    %v606 = vld [vmem:[%s7 + $0x310] sm:$0xff]
    %v607 = vld [vmem:[%s7 + $0x318] sm:$0xff]
    %v608 = vld [vmem:[%s7 + $0x320] sm:$0xff]
    %v609 = vld [vmem:[%s7 + $0x328] sm:$0xff]
    %v610 = vld [vmem:[%s7 + $0x330] sm:$0xff]
    %v611 = vld [vmem:[%s7 + $0x338] sm:$0xff]
    %v612 = vld [vmem:[%s7 + $0x340] sm:$0xff]
    %v613 = vld [vmem:[%s7 + $0x348] sm:$0xff]
    %v614 = vld [vmem:[%s7 + $0x350] sm:$0xff]
    %v615 = vld [vmem:[%s7 + $0x358] sm:$0xff]
    %v616 = vld [vmem:[%s7 + $0x360] sm:$0xff]
    %v617 = vld [vmem:[%s7 + $0x368] sm:$0xff]
    %v618 = vld [vmem:[%s7 + $0x370] sm:$0xff]
    %v619 = vld [vmem:[%s7 + $0x378] sm:$0xff]
    %v620 = vld [vmem:[%s7 + $0x380] sm:$0xff]
    %v621 = vld [vmem:[%s7 + $0x388] sm:$0xff]
    %v622 = vld [vmem:[%s7 + $0x390] sm:$0xff]
    %v623 = vld [vmem:[%s7 + $0x398] sm:$0xff]
    %v624 = vld [vmem:[%s7 + $0x3a0] sm:$0xff]
    %v625 = vld [vmem:[%s7 + $0x3a8] sm:$0xff]
    %v626 = vld [vmem:[%s7 + $0x3b0] sm:$0xff]
    %v627 = vld [vmem:[%s7 + $0x3b8] sm:$0xff]
    %v628 = vld [vmem:[%s7 + $0x3c0] sm:$0xff]
    %v629 = vld [vmem:[%s7 + $0x3c8] sm:$0xff]
    %v630 = vld [vmem:[%s7 + $0x3d0] sm:$0xff]
    %v631 = vld [vmem:[%s7 + $0x3d8] sm:$0xff]
    %v632 = vld [vmem:[%s7 + $0x3e0] sm:$0xff]
    %v633 = vld [vmem:[%s7 + $0x3e8] sm:$0xff]
    %v634 = vld [vmem:[%s7 + $0x3f0] sm:$0xff]
    %v635 = vld [vmem:[%s7 + $0x3f8] sm:$0xff]
    %v636 = vld [vmem:[#allocation7] sm:$0x3]
    %v638 = vlaneseq
    %v639 = vshrl.u32 %v638, 7
    %v640 = vsub.s32 0, %v639
    %v641 = vrot.slane %v636, %v640
    %v642 = vlaneseq
    %v643 = vshrl.u32 %v642, 7
    %v644 = vsub.s32 1, %v643
    %v645 = vrot.slane %v636, %v644
    %648 = vmatprep.subr.mxu0 %v539
    %649 = vmatpush1.msra.mxu0 %v538
    %650 = vmatprep.subr.mxu0 %v537
    %651 = vmatpush1.msra.mxu0 %v536
    %652 = vmatprep.subr.mxu0 %v535
    %653 = vmatpush1.msra.mxu0 %v534
    %654 = vmatprep.subr.mxu0 %v533
    %655 = vmatpush1.msra.mxu0 %v532
    %656 = vmatprep.subr.mxu0 %v531
    %657 = vmatpush1.msra.mxu0 %v530
    %658 = vmatprep.subr.mxu0 %v529
    %659 = vmatpush1.msra.mxu0 %v528
    %660 = vmatprep.subr.mxu0 %v527
    %661 = vmatpush1.msra.mxu0 %v526
    %662 = vmatprep.subr.mxu0 %v525
    %663 = vmatpush1.msra.mxu0 %v524
    %664 = vmatprep.subr.mxu0 %v523
    %665 = vmatpush1.msra.mxu0 %v522
    %666 = vmatprep.subr.mxu0 %v521
    %667 = vmatpush1.msra.mxu0 %v520
    %668 = vmatprep.subr.mxu0 %v519
    %669 = vmatpush1.msra.mxu0 %v518
    %670 = vmatprep.subr.mxu0 %v517
    %671 = vmatpush1.msra.mxu0 %v516
    %672 = vmatprep.subr.mxu0 %v515
    %673 = vmatpush1.msra.mxu0 %v514
    %674 = vmatprep.subr.mxu0 %v513
    %675 = vmatpush1.msra.mxu0 %v512
    %676 = vmatprep.subr.mxu0 %v511
    %677 = vmatpush1.msra.mxu0 %v510
    %678 = vmatprep.subr.mxu0 %v509
    %679 = vmatpush1.msra.mxu0 %v508
    %680 = vmatprep.subr.mxu0 %v571
    %681 = vmatpush2.msra.mxu0 %v570
    %682 = vmatprep.subr.mxu0 %v569
    %683 = vmatpush2.msra.mxu0 %v568
    %684 = vmatprep.subr.mxu0 %v567
    %685 = vmatpush2.msra.mxu0 %v566
    %686 = vmatprep.subr.mxu0 %v565
    %687 = vmatpush2.msra.mxu0 %v564
    %688 = vmatprep.subr.mxu0 %v563
    %689 = vmatpush2.msra.mxu0 %v562
    %690 = vmatprep.subr.mxu0 %v561
    %691 = vmatpush2.msra.mxu0 %v560
    %692 = vmatprep.subr.mxu0 %v559
    %693 = vmatpush2.msra.mxu0 %v558
    %694 = vmatprep.subr.mxu0 %v557
    %695 = vmatpush2.msra.mxu0 %v556
    %696 = vmatprep.subr.mxu0 %v555
    %697 = vmatpush2.msra.mxu0 %v554
    %698 = vmatprep.subr.mxu0 %v553
    %699 = vmatpush2.msra.mxu0 %v552
    %700 = vmatprep.subr.mxu0 %v551
    %701 = vmatpush2.msra.mxu0 %v550
    %702 = vmatprep.subr.mxu0 %v549
    %703 = vmatpush2.msra.mxu0 %v548
    %704 = vmatprep.subr.mxu0 %v547
    %705 = vmatpush2.msra.mxu0 %v546
    %706 = vmatprep.subr.mxu0 %v545
    %707 = vmatpush2.msra.mxu0 %v544
    %708 = vmatprep.subr.mxu0 %v543
    %709 = vmatpush2.msra.mxu0 %v542
    %710 = vmatprep.subr.mxu0 %v541
    %711 = vmatpush2.msra.mxu0 %v540
    %712 = vmatprep.mubr.f32.mxu0 %v435
    %713 = vmatmul.mubr.f32.gmra.mxu0 %v433
    %v714 = vpop.f32.mrf.mxu0
    %v715 = vadd.f32 %v641, %v714
    %v716 = vpop.f32.mrf.mxu0
    %v717 = vadd.f32 %v645, %v716
    %718 = vdwg.mxu0
    %719 = vmatprep.subr.mxu0 %v603
    %720 = vmatpush1.msra.mxu0 %v602
    %721 = vmatprep.subr.mxu0 %v601
    %722 = vmatpush1.msra.mxu0 %v600
    %723 = vmatprep.subr.mxu0 %v599
    %724 = vmatpush1.msra.mxu0 %v598
    %725 = vmatprep.subr.mxu0 %v597
    %726 = vmatpush1.msra.mxu0 %v596
    %727 = vmatprep.subr.mxu0 %v595
    %728 = vmatpush1.msra.mxu0 %v594
    %729 = vmatprep.subr.mxu0 %v593
    %730 = vmatpush1.msra.mxu0 %v592
    %731 = vmatprep.subr.mxu0 %v591
    %732 = vmatpush1.msra.mxu0 %v590
    %733 = vmatprep.subr.mxu0 %v589
    %734 = vmatpush1.msra.mxu0 %v588
    %735 = vmatprep.subr.mxu0 %v587
    %736 = vmatpush1.msra.mxu0 %v586
    %737 = vmatprep.subr.mxu0 %v585
    %738 = vmatpush1.msra.mxu0 %v584
    %739 = vmatprep.subr.mxu0 %v583
    %740 = vmatpush1.msra.mxu0 %v582
    %741 = vmatprep.subr.mxu0 %v581
    %742 = vmatpush1.msra.mxu0 %v580
    %743 = vmatprep.subr.mxu0 %v579
    %744 = vmatpush1.msra.mxu0 %v578
    %745 = vmatprep.subr.mxu0 %v577
    %746 = vmatpush1.msra.mxu0 %v576
    %747 = vmatprep.subr.mxu0 %v575
    %748 = vmatpush1.msra.mxu0 %v574
    %749 = vmatprep.subr.mxu0 %v573
    %750 = vmatpush1.msra.mxu0 %v572
    %751 = vmatprep.subr.mxu0 %v635
    %752 = vmatpush2.msra.mxu0 %v634
    %753 = vmatprep.subr.mxu0 %v633
    %754 = vmatpush2.msra.mxu0 %v632
    %755 = vmatprep.subr.mxu0 %v631
    %756 = vmatpush2.msra.mxu0 %v630
    %757 = vmatprep.subr.mxu0 %v629
    %758 = vmatpush2.msra.mxu0 %v628
    %759 = vmatprep.subr.mxu0 %v627
    %760 = vmatpush2.msra.mxu0 %v626
    %761 = vmatprep.subr.mxu0 %v625
    %762 = vmatpush2.msra.mxu0 %v624
    %763 = vmatprep.subr.mxu0 %v623
    %764 = vmatpush2.msra.mxu0 %v622
    %765 = vmatprep.subr.mxu0 %v621
    %766 = vmatpush2.msra.mxu0 %v620
    %767 = vmatprep.subr.mxu0 %v619
    %768 = vmatpush2.msra.mxu0 %v618
    %769 = vmatprep.subr.mxu0 %v617
    %770 = vmatpush2.msra.mxu0 %v616
    %771 = vmatprep.subr.mxu0 %v615
    %772 = vmatpush2.msra.mxu0 %v614
    %773 = vmatprep.subr.mxu0 %v613
    %774 = vmatpush2.msra.mxu0 %v612
    %775 = vmatprep.subr.mxu0 %v611
    %776 = vmatpush2.msra.mxu0 %v610
    %777 = vmatprep.subr.mxu0 %v609
    %778 = vmatpush2.msra.mxu0 %v608
    %779 = vmatprep.subr.mxu0 %v607
    %780 = vmatpush2.msra.mxu0 %v606
    %781 = vmatprep.subr.mxu0 %v605
    %782 = vmatpush2.msra.mxu0 %v604
    %783 = vmatprep.mubr.f32.mxu0 %v506
    %784 = vmatmul.mubr.f32.gmra.mxu0 %v504
    %v785 = vpop.f32.mrf.mxu0
    %v786 = vadd.f32 %v715, %v785
    %v787 = vpop.f32.mrf.mxu0
    %v788 = vadd.f32 %v717, %v787
    %789 = vdwg.mxu0
    %v790 = vld [vmem:[%s13] sm:$0xff]
    %v791 = vld [vmem:[%s13 + $0x8] sm:$0xff]
    %v792 = vld [vmem:[%s13 + $0x10] sm:$0xff]
    %v793 = vld [vmem:[%s13 + $0x18] sm:$0xff]
    %v794 = vld [vmem:[%s13 + $0x20] sm:$0xff]
    %v795 = vld [vmem:[%s13 + $0x28] sm:$0xff]
    %v796 = vld [vmem:[%s13 + $0x30] sm:$0xff]
    %v797 = vld [vmem:[%s13 + $0x38] sm:$0xff]
    %v798 = vld [vmem:[%s13 + $0x40] sm:$0xff]
    %v799 = vld [vmem:[%s13 + $0x48] sm:$0xff]
    %v800 = vld [vmem:[%s13 + $0x50] sm:$0xff]
    %v801 = vld [vmem:[%s13 + $0x58] sm:$0xff]
    %v802 = vld [vmem:[%s13 + $0x60] sm:$0xff]
    %v803 = vld [vmem:[%s13 + $0x68] sm:$0xff]
    %v804 = vld [vmem:[%s13 + $0x70] sm:$0xff]
    %v805 = vld [vmem:[%s13 + $0x78] sm:$0xff]
    %v806 = vld [vmem:[%s13 + $0x80] sm:$0xff]
    %v807 = vld [vmem:[%s13 + $0x88] sm:$0xff]
    %v808 = vld [vmem:[%s13 + $0x90] sm:$0xff]
    %v809 = vld [vmem:[%s13 + $0x98] sm:$0xff]
    %v810 = vld [vmem:[%s13 + $0xa0] sm:$0xff]
    %v811 = vld [vmem:[%s13 + $0xa8] sm:$0xff]
    %v812 = vld [vmem:[%s13 + $0xb0] sm:$0xff]
    %v813 = vld [vmem:[%s13 + $0xb8] sm:$0xff]
    %v814 = vld [vmem:[%s13 + $0xc0] sm:$0xff]
    %v815 = vld [vmem:[%s13 + $0xc8] sm:$0xff]
    %v816 = vld [vmem:[%s13 + $0xd0] sm:$0xff]
    %v817 = vld [vmem:[%s13 + $0xd8] sm:$0xff]
    %v818 = vld [vmem:[%s13 + $0xe0] sm:$0xff]
    %v819 = vld [vmem:[%s13 + $0xe8] sm:$0xff]
    %v820 = vld [vmem:[%s13 + $0xf0] sm:$0xff]
    %v821 = vld [vmem:[%s13 + $0xf8] sm:$0xff]
    %v822 = vld [vmem:[%s13 + $0x100] sm:$0xff]
    %v823 = vld [vmem:[%s13 + $0x108] sm:$0xff]
    %v824 = vld [vmem:[%s13 + $0x110] sm:$0xff]
    %v825 = vld [vmem:[%s13 + $0x118] sm:$0xff]
    %v826 = vld [vmem:[%s13 + $0x120] sm:$0xff]
    %v827 = vld [vmem:[%s13 + $0x128] sm:$0xff]
    %v828 = vld [vmem:[%s13 + $0x130] sm:$0xff]
    %v829 = vld [vmem:[%s13 + $0x138] sm:$0xff]
    %v830 = vld [vmem:[%s13 + $0x140] sm:$0xff]
    %v831 = vld [vmem:[%s13 + $0x148] sm:$0xff]
    %v832 = vld [vmem:[%s13 + $0x150] sm:$0xff]
    %v833 = vld [vmem:[%s13 + $0x158] sm:$0xff]
    %v834 = vld [vmem:[%s13 + $0x160] sm:$0xff]
    %v835 = vld [vmem:[%s13 + $0x168] sm:$0xff]
    %v836 = vld [vmem:[%s13 + $0x170] sm:$0xff]
    %v837 = vld [vmem:[%s13 + $0x178] sm:$0xff]
    %v838 = vld [vmem:[%s13 + $0x180] sm:$0xff]
    %v839 = vld [vmem:[%s13 + $0x188] sm:$0xff]
    %v840 = vld [vmem:[%s13 + $0x190] sm:$0xff]
    %v841 = vld [vmem:[%s13 + $0x198] sm:$0xff]
    %v842 = vld [vmem:[%s13 + $0x1a0] sm:$0xff]
    %v843 = vld [vmem:[%s13 + $0x1a8] sm:$0xff]
    %v844 = vld [vmem:[%s13 + $0x1b0] sm:$0xff]
    %v845 = vld [vmem:[%s13 + $0x1b8] sm:$0xff]
    %v846 = vld [vmem:[%s13 + $0x1c0] sm:$0xff]
    %v847 = vld [vmem:[%s13 + $0x1c8] sm:$0xff]
    %v848 = vld [vmem:[%s13 + $0x1d0] sm:$0xff]
    %v849 = vld [vmem:[%s13 + $0x1d8] sm:$0xff]
    %v850 = vld [vmem:[%s13 + $0x1e0] sm:$0xff]
    %v851 = vld [vmem:[%s13 + $0x1e8] sm:$0xff]
    %v852 = vld [vmem:[%s13 + $0x1f0] sm:$0xff]
    %v853 = vld [vmem:[%s13 + $0x1f8] sm:$0xff]
    %v854 = vld [vmem:[%s13 + $0x200] sm:$0xff]
    %v855 = vld [vmem:[%s13 + $0x208] sm:$0xff]
    %v856 = vld [vmem:[%s13 + $0x210] sm:$0xff]
    %v857 = vld [vmem:[%s13 + $0x218] sm:$0xff]
    %v858 = vld [vmem:[%s13 + $0x220] sm:$0xff]
    %v859 = vld [vmem:[%s13 + $0x228] sm:$0xff]
    %v860 = vld [vmem:[%s13 + $0x230] sm:$0xff]
    %v861 = vld [vmem:[%s13 + $0x238] sm:$0xff]
    %v862 = vld [vmem:[%s13 + $0x240] sm:$0xff]
    %v863 = vld [vmem:[%s13 + $0x248] sm:$0xff]
    %v864 = vld [vmem:[%s13 + $0x250] sm:$0xff]
    %v865 = vld [vmem:[%s13 + $0x258] sm:$0xff]
    %v866 = vld [vmem:[%s13 + $0x260] sm:$0xff]
    %v867 = vld [vmem:[%s13 + $0x268] sm:$0xff]
    %v868 = vld [vmem:[%s13 + $0x270] sm:$0xff]
    %v869 = vld [vmem:[%s13 + $0x278] sm:$0xff]
    %v870 = vld [vmem:[%s13 + $0x280] sm:$0xff]
    %v871 = vld [vmem:[%s13 + $0x288] sm:$0xff]
    %v872 = vld [vmem:[%s13 + $0x290] sm:$0xff]
    %v873 = vld [vmem:[%s13 + $0x298] sm:$0xff]
    %v874 = vld [vmem:[%s13 + $0x2a0] sm:$0xff]
    %v875 = vld [vmem:[%s13 + $0x2a8] sm:$0xff]
    %v876 = vld [vmem:[%s13 + $0x2b0] sm:$0xff]
    %v877 = vld [vmem:[%s13 + $0x2b8] sm:$0xff]
    %v878 = vld [vmem:[%s13 + $0x2c0] sm:$0xff]
    %v879 = vld [vmem:[%s13 + $0x2c8] sm:$0xff]
    %v880 = vld [vmem:[%s13 + $0x2d0] sm:$0xff]
    %v881 = vld [vmem:[%s13 + $0x2d8] sm:$0xff]
    %v882 = vld [vmem:[%s13 + $0x2e0] sm:$0xff]
    %v883 = vld [vmem:[%s13 + $0x2e8] sm:$0xff]
    %v884 = vld [vmem:[%s13 + $0x2f0] sm:$0xff]
    %v885 = vld [vmem:[%s13 + $0x2f8] sm:$0xff]
    %v886 = vld [vmem:[%s13 + $0x300] sm:$0xff]
    %v887 = vld [vmem:[%s13 + $0x308] sm:$0xff]
    %v888 = vld [vmem:[%s13 + $0x310] sm:$0xff]
    %v889 = vld [vmem:[%s13 + $0x318] sm:$0xff]
    %v890 = vld [vmem:[%s13 + $0x320] sm:$0xff]
    %v891 = vld [vmem:[%s13 + $0x328] sm:$0xff]
    %v892 = vld [vmem:[%s13 + $0x330] sm:$0xff]
    %v893 = vld [vmem:[%s13 + $0x338] sm:$0xff]
    %v894 = vld [vmem:[%s13 + $0x340] sm:$0xff]
    %v895 = vld [vmem:[%s13 + $0x348] sm:$0xff]
    %v896 = vld [vmem:[%s13 + $0x350] sm:$0xff]
    %v897 = vld [vmem:[%s13 + $0x358] sm:$0xff]
    %v898 = vld [vmem:[%s13 + $0x360] sm:$0xff]
    %v899 = vld [vmem:[%s13 + $0x368] sm:$0xff]
    %v900 = vld [vmem:[%s13 + $0x370] sm:$0xff]
    %v901 = vld [vmem:[%s13 + $0x378] sm:$0xff]
    %v902 = vld [vmem:[%s13 + $0x380] sm:$0xff]
    %v903 = vld [vmem:[%s13 + $0x388] sm:$0xff]
    %v904 = vld [vmem:[%s13 + $0x390] sm:$0xff]
    %v905 = vld [vmem:[%s13 + $0x398] sm:$0xff]
    %v906 = vld [vmem:[%s13 + $0x3a0] sm:$0xff]
    %v907 = vld [vmem:[%s13 + $0x3a8] sm:$0xff]
    %v908 = vld [vmem:[%s13 + $0x3b0] sm:$0xff]
    %v909 = vld [vmem:[%s13 + $0x3b8] sm:$0xff]
    %v910 = vld [vmem:[%s13 + $0x3c0] sm:$0xff]
    %v911 = vld [vmem:[%s13 + $0x3c8] sm:$0xff]
    %v912 = vld [vmem:[%s13 + $0x3d0] sm:$0xff]
    %v913 = vld [vmem:[%s13 + $0x3d8] sm:$0xff]
    %v914 = vld [vmem:[%s13 + $0x3e0] sm:$0xff]
    %v915 = vld [vmem:[%s13 + $0x3e8] sm:$0xff]
    %v916 = vld [vmem:[%s13 + $0x3f0] sm:$0xff]
    %v917 = vld [vmem:[%s13 + $0x3f8] sm:$0xff]
    %v918 = vld [vmem:[%s13 + $0x400] sm:$0xff]
    %v919 = vld [vmem:[%s13 + $0x408] sm:$0xff]
    %v920 = vld [vmem:[%s13 + $0x410] sm:$0xff]
    %v921 = vld [vmem:[%s13 + $0x418] sm:$0xff]
    %v922 = vld [vmem:[%s13 + $0x420] sm:$0xff]
    %v923 = vld [vmem:[%s13 + $0x428] sm:$0xff]
    %v924 = vld [vmem:[%s13 + $0x430] sm:$0xff]
    %v925 = vld [vmem:[%s13 + $0x438] sm:$0xff]
    %v926 = vld [vmem:[%s13 + $0x440] sm:$0xff]
    %v927 = vld [vmem:[%s13 + $0x448] sm:$0xff]
    %v928 = vld [vmem:[%s13 + $0x450] sm:$0xff]
    %v929 = vld [vmem:[%s13 + $0x458] sm:$0xff]
    %v930 = vld [vmem:[%s13 + $0x460] sm:$0xff]
    %v931 = vld [vmem:[%s13 + $0x468] sm:$0xff]
    %v932 = vld [vmem:[%s13 + $0x470] sm:$0xff]
    %v933 = vld [vmem:[%s13 + $0x478] sm:$0xff]
    %v934 = vld [vmem:[%s13 + $0x480] sm:$0xff]
    %v935 = vld [vmem:[%s13 + $0x488] sm:$0xff]
    %v936 = vld [vmem:[%s13 + $0x490] sm:$0xff]
    %v937 = vld [vmem:[%s13 + $0x498] sm:$0xff]
    %v938 = vld [vmem:[%s13 + $0x4a0] sm:$0xff]
    %v939 = vld [vmem:[%s13 + $0x4a8] sm:$0xff]
    %v940 = vld [vmem:[%s13 + $0x4b0] sm:$0xff]
    %v941 = vld [vmem:[%s13 + $0x4b8] sm:$0xff]
    %v942 = vld [vmem:[%s13 + $0x4c0] sm:$0xff]
    %v943 = vld [vmem:[%s13 + $0x4c8] sm:$0xff]
    %v944 = vld [vmem:[%s13 + $0x4d0] sm:$0xff]
    %v945 = vld [vmem:[%s13 + $0x4d8] sm:$0xff]
    %v946 = vld [vmem:[%s13 + $0x4e0] sm:$0xff]
    %v947 = vld [vmem:[%s13 + $0x4e8] sm:$0xff]
    %v948 = vld [vmem:[%s13 + $0x4f0] sm:$0xff]
    %v949 = vld [vmem:[%s13 + $0x4f8] sm:$0xff]
    %v950 = vld [vmem:[#allocation8] ss:$8 sm:$0xf]
    %v951 = vld [vmem:[#allocation8] ss:$8 sm:$0x10]
    %v952 = vor.u32 %v950, %v951
    %v954 = vlaneseq
    %v955 = vshrl.u32 %v954, 7
    %v956 = vsub.s32 0, %v955
    %v957 = vrot.slane %v952, %v956
    %v958 = vlaneseq
    %v959 = vshrl.u32 %v958, 7
    %v960 = vsub.s32 1, %v959
    %v961 = vrot.slane %v952, %v960
    %v962 = vlaneseq
    %v963 = vshrl.u32 %v962, 7
    %v964 = vsub.s32 2, %v963
    %v965 = vrot.slane %v952, %v964
    %v966 = vlaneseq
    %v967 = vshrl.u32 %v966, 7
    %v968 = vsub.s32 3, %v967
    %v969 = vrot.slane %v952, %v968
    %v970 = vlaneseq
    %v971 = vshrl.u32 %v970, 7
    %v972 = vsub.s32 4, %v971
    %v973 = vrot.slane %v952, %v972
    %979 = vmatprep.subr.mxu0 %v866
    %980 = vmatpush1.msra.mxu0 %v865
    %981 = vmatprep.subr.mxu0 %v861
    %982 = vmatpush1.msra.mxu0 %v860
    %983 = vmatprep.subr.mxu0 %v856
    %984 = vmatpush1.msra.mxu0 %v855
    %985 = vmatprep.subr.mxu0 %v851
    %986 = vmatpush1.msra.mxu0 %v850
    %987 = vmatprep.subr.mxu0 %v846
    %988 = vmatpush1.msra.mxu0 %v845
    %989 = vmatprep.subr.mxu0 %v841
    %990 = vmatpush1.msra.mxu0 %v840
    %991 = vmatprep.subr.mxu0 %v836
    %992 = vmatpush1.msra.mxu0 %v835
    %993 = vmatprep.subr.mxu0 %v831
    %994 = vmatpush1.msra.mxu0 %v830
    %995 = vmatprep.subr.mxu0 %v826
    %996 = vmatpush1.msra.mxu0 %v825
    %997 = vmatprep.subr.mxu0 %v821
    %998 = vmatpush1.msra.mxu0 %v820
    %999 = vmatprep.subr.mxu0 %v816
    %1000 = vmatpush1.msra.mxu0 %v815
    %1001 = vmatprep.subr.mxu0 %v811
    %1002 = vmatpush1.msra.mxu0 %v810
    %1003 = vmatprep.subr.mxu0 %v806
    %1004 = vmatpush1.msra.mxu0 %v805
    %1005 = vmatprep.subr.mxu0 %v801
    %1006 = vmatpush1.msra.mxu0 %v800
    %1007 = vmatprep.subr.mxu0 %v796
    %1008 = vmatpush1.msra.mxu0 %v795
    %1009 = vmatprep.subr.mxu0 %v791
    %1010 = vmatpush1.msra.mxu0 %v790
    %1011 = vmatprep.subr.mxu0 %v946
    %1012 = vmatpush2.msra.mxu0 %v945
    %1013 = vmatprep.subr.mxu0 %v941
    %1014 = vmatpush2.msra.mxu0 %v940
    %1015 = vmatprep.subr.mxu0 %v936
    %1016 = vmatpush2.msra.mxu0 %v935
    %1017 = vmatprep.subr.mxu0 %v931
    %1018 = vmatpush2.msra.mxu0 %v930
    %1019 = vmatprep.subr.mxu0 %v926
    %1020 = vmatpush2.msra.mxu0 %v925
    %1021 = vmatprep.subr.mxu0 %v921
    %1022 = vmatpush2.msra.mxu0 %v920
    %1023 = vmatprep.subr.mxu0 %v916
    %1024 = vmatpush2.msra.mxu0 %v915
    %1025 = vmatprep.subr.mxu0 %v911
    %1026 = vmatpush2.msra.mxu0 %v910
    %1027 = vmatprep.subr.mxu0 %v906
    %1028 = vmatpush2.msra.mxu0 %v905
    %1029 = vmatprep.subr.mxu0 %v901
    %1030 = vmatpush2.msra.mxu0 %v900
    %1031 = vmatprep.subr.mxu0 %v896
    %1032 = vmatpush2.msra.mxu0 %v895
    %1033 = vmatprep.subr.mxu0 %v891
    %1034 = vmatpush2.msra.mxu0 %v890
    %1035 = vmatprep.subr.mxu0 %v886
    %1036 = vmatpush2.msra.mxu0 %v885
    %1037 = vmatprep.subr.mxu0 %v881
    %1038 = vmatpush2.msra.mxu0 %v880
    %1039 = vmatprep.subr.mxu0 %v876
    %1040 = vmatpush2.msra.mxu0 %v875
    %1041 = vmatprep.subr.mxu0 %v871
    %1042 = vmatpush2.msra.mxu0 %v870
    %1043 = vmatprep.mubr.f32.mxu0 %v788
    %1044 = vmatmul.mubr.f32.gmra.mxu0 %v786
    %v1045 = vpop.f32.mrf.mxu0
    %v1046 = vadd.f32 %v957, %v1045
    %v1047 = vpop.f32.mrf.mxu0
    %v1048 = vadd.f32 %v961, %v1047
    %1049 = vdwg.mxu0
    %1050 = vmatprep.subr.mxu0 %v868
    %1051 = vmatpush1.msra.mxu0 %v867
    %1052 = vmatprep.subr.mxu0 %v863
    %1053 = vmatpush1.msra.mxu0 %v862
    %1054 = vmatprep.subr.mxu0 %v858
    %1055 = vmatpush1.msra.mxu0 %v857
    %1056 = vmatprep.subr.mxu0 %v853
    %1057 = vmatpush1.msra.mxu0 %v852
    %1058 = vmatprep.subr.mxu0 %v848
    %1059 = vmatpush1.msra.mxu0 %v847
    %1060 = vmatprep.subr.mxu0 %v843
    %1061 = vmatpush1.msra.mxu0 %v842
    %1062 = vmatprep.subr.mxu0 %v838
    %1063 = vmatpush1.msra.mxu0 %v837
    %1064 = vmatprep.subr.mxu0 %v833
    %1065 = vmatpush1.msra.mxu0 %v832
    %1066 = vmatprep.subr.mxu0 %v828
    %1067 = vmatpush1.msra.mxu0 %v827
    %1068 = vmatprep.subr.mxu0 %v823
    %1069 = vmatpush1.msra.mxu0 %v822
    %1070 = vmatprep.subr.mxu0 %v818
    %1071 = vmatpush1.msra.mxu0 %v817
    %1072 = vmatprep.subr.mxu0 %v813
    %1073 = vmatpush1.msra.mxu0 %v812
    %1074 = vmatprep.subr.mxu0 %v808
    %1075 = vmatpush1.msra.mxu0 %v807
    %1076 = vmatprep.subr.mxu0 %v803
    %1077 = vmatpush1.msra.mxu0 %v802
    %1078 = vmatprep.subr.mxu0 %v798
    %1079 = vmatpush1.msra.mxu0 %v797
    %1080 = vmatprep.subr.mxu0 %v793
    %1081 = vmatpush1.msra.mxu0 %v792
    %1082 = vmatprep.subr.mxu0 %v948
    %1083 = vmatpush2.msra.mxu0 %v947
    %1084 = vmatprep.subr.mxu0 %v943
    %1085 = vmatpush2.msra.mxu0 %v942
    %1086 = vmatprep.subr.mxu0 %v938
    %1087 = vmatpush2.msra.mxu0 %v937
    %1088 = vmatprep.subr.mxu0 %v933
    %1089 = vmatpush2.msra.mxu0 %v932
    %1090 = vmatprep.subr.mxu0 %v928
    %1091 = vmatpush2.msra.mxu0 %v927
    %1092 = vmatprep.subr.mxu0 %v923
    %1093 = vmatpush2.msra.mxu0 %v922
    %1094 = vmatprep.subr.mxu0 %v918
    %1095 = vmatpush2.msra.mxu0 %v917
    %1096 = vmatprep.subr.mxu0 %v913
    %1097 = vmatpush2.msra.mxu0 %v912
    %1098 = vmatprep.subr.mxu0 %v908
    %1099 = vmatpush2.msra.mxu0 %v907
    %1100 = vmatprep.subr.mxu0 %v903
    %1101 = vmatpush2.msra.mxu0 %v902
    %1102 = vmatprep.subr.mxu0 %v898
    %1103 = vmatpush2.msra.mxu0 %v897
    %1104 = vmatprep.subr.mxu0 %v893
    %1105 = vmatpush2.msra.mxu0 %v892
    %1106 = vmatprep.subr.mxu0 %v888
    %1107 = vmatpush2.msra.mxu0 %v887
    %1108 = vmatprep.subr.mxu0 %v883
    %1109 = vmatpush2.msra.mxu0 %v882
    %1110 = vmatprep.subr.mxu0 %v878
    %1111 = vmatpush2.msra.mxu0 %v877
    %1112 = vmatprep.subr.mxu0 %v873
    %1113 = vmatpush2.msra.mxu0 %v872
    %1114 = vmatprep.mubr.f32.mxu0 %v788
    %1115 = vmatmul.mubr.f32.gmra.mxu0 %v786
    %v1116 = vpop.f32.mrf.mxu0
    %v1117 = vadd.f32 %v965, %v1116
    %v1118 = vpop.f32.mrf.mxu0
    %v1119 = vadd.f32 %v969, %v1118
    %1120 = vdwg.mxu0
    %1121 = vmatprep.subr.mxu0 0.0
    %1122 = vmatpush1.msra.mxu0 %v869
    %1123 = vmatprep.subr.mxu0 0.0
    %1124 = vmatpush1.msra.mxu0 %v864
    %1125 = vmatprep.subr.mxu0 0.0
    %1126 = vmatpush1.msra.mxu0 %v859
    %1127 = vmatprep.subr.mxu0 0.0
    %1128 = vmatpush1.msra.mxu0 %v854
    %1129 = vmatprep.subr.mxu0 0.0
    %1130 = vmatpush1.msra.mxu0 %v849
    %1131 = vmatprep.subr.mxu0 0.0
    %1132 = vmatpush1.msra.mxu0 %v844
    %1133 = vmatprep.subr.mxu0 0.0
    %1134 = vmatpush1.msra.mxu0 %v839
    %1135 = vmatprep.subr.mxu0 0.0
    %1136 = vmatpush1.msra.mxu0 %v834
    %1137 = vmatprep.subr.mxu0 0.0
    %1138 = vmatpush1.msra.mxu0 %v829
    %1139 = vmatprep.subr.mxu0 0.0
    %1140 = vmatpush1.msra.mxu0 %v824
    %1141 = vmatprep.subr.mxu0 0.0
    %1142 = vmatpush1.msra.mxu0 %v819
    %1143 = vmatprep.subr.mxu0 0.0
    %1144 = vmatpush1.msra.mxu0 %v814
    %1145 = vmatprep.subr.mxu0 0.0
    %1146 = vmatpush1.msra.mxu0 %v809
    %1147 = vmatprep.subr.mxu0 0.0
    %1148 = vmatpush1.msra.mxu0 %v804
    %1149 = vmatprep.subr.mxu0 0.0
    %1150 = vmatpush1.msra.mxu0 %v799
    %1151 = vmatprep.subr.mxu0 0.0
    %1152 = vmatpush1.msra.mxu0 %v794
    %1153 = vmatprep.subr.mxu0 0.0
    %1154 = vmatpush2.msra.mxu0 %v949
    %1155 = vmatprep.subr.mxu0 0.0
    %1156 = vmatpush2.msra.mxu0 %v944
    %1157 = vmatprep.subr.mxu0 0.0
    %1158 = vmatpush2.msra.mxu0 %v939
    %1159 = vmatprep.subr.mxu0 0.0
    %1160 = vmatpush2.msra.mxu0 %v934
    %1161 = vmatprep.subr.mxu0 0.0
    %1162 = vmatpush2.msra.mxu0 %v929
    %1163 = vmatprep.subr.mxu0 0.0
    %1164 = vmatpush2.msra.mxu0 %v924
    %1165 = vmatprep.subr.mxu0 0.0
    %1166 = vmatpush2.msra.mxu0 %v919
    %1167 = vmatprep.subr.mxu0 0.0
    %1168 = vmatpush2.msra.mxu0 %v914
    %1169 = vmatprep.subr.mxu0 0.0
    %1170 = vmatpush2.msra.mxu0 %v909
    %1171 = vmatprep.subr.mxu0 0.0
    %1172 = vmatpush2.msra.mxu0 %v904
    %1173 = vmatprep.subr.mxu0 0.0
    %1174 = vmatpush2.msra.mxu0 %v899
    %1175 = vmatprep.subr.mxu0 0.0
    %1176 = vmatpush2.msra.mxu0 %v894
    %1177 = vmatprep.subr.mxu0 0.0
    %1178 = vmatpush2.msra.mxu0 %v889
    %1179 = vmatprep.subr.mxu0 0.0
    %1180 = vmatpush2.msra.mxu0 %v884
    %1181 = vmatprep.subr.mxu0 0.0
    %1182 = vmatpush2.msra.mxu0 %v879
    %1183 = vmatprep.subr.mxu0 0.0
    %1184 = vmatpush2.msra.mxu0 %v874
    %1185 = vmatprep.mubr.f32.mxu0 %v788
    %1186 = vmatmul.mubr.f32.gmra.mxu0 %v786
    %v1187 = vpop.f32.mrf.mxu0
    %v1188 = vadd.f32 %v973, %v1187
    %v1189 = vpop.f32.mrf.mxu0
    %1190 = vdwg.mxu0
    %v1191 = vmul.f32 %v1046, %v1046
    %v1192 = vmul.f32 %v1048, %v1048
    %v1193 = vmul.f32 %v1117, %v1117
    %v1194 = vmul.f32 %v1119, %v1119
    %v1195 = vmul.f32 %v1188, %v1188
    %v1196 = vld [vmem:[%s15] sm:$0xff]
    %v1197 = vld [vmem:[%s15 + $0x8] sm:$0xff]
    %v1198 = vld [vmem:[%s15 + $0x10] sm:$0xff]
    %v1199 = vld [vmem:[%s15 + $0x18] sm:$0xff]
    %v1200 = vld [vmem:[%s15 + $0x20] sm:$0xff]
    %v1201 = vld [vmem:[%s15 + $0x28] sm:$0xff]
    %v1202 = vld [vmem:[%s15 + $0x30] sm:$0xff]
    %v1203 = vld [vmem:[%s15 + $0x38] sm:$0xff]
    %v1204 = vld [vmem:[%s15 + $0x40] sm:$0xff]
    %v1205 = vld [vmem:[%s15 + $0x48] sm:$0xff]
    %v1206 = vld [vmem:[%s15 + $0x50] sm:$0xff]
    %v1207 = vld [vmem:[%s15 + $0x58] sm:$0xff]
    %v1208 = vld [vmem:[%s15 + $0x60] sm:$0xff]
    %v1209 = vld [vmem:[%s15 + $0x68] sm:$0xff]
    %v1210 = vld [vmem:[%s15 + $0x70] sm:$0xff]
    %v1211 = vld [vmem:[%s15 + $0x78] sm:$0xff]
    %v1212 = vld [vmem:[%s15 + $0x80] sm:$0xff]
    %v1213 = vld [vmem:[%s15 + $0x88] sm:$0xff]
    %v1214 = vld [vmem:[%s15 + $0x90] sm:$0xff]
    %v1215 = vld [vmem:[%s15 + $0x98] sm:$0xff]
    %v1216 = vld [vmem:[%s15 + $0xa0] sm:$0xff]
    %v1217 = vld [vmem:[%s15 + $0xa8] sm:$0xff]
    %v1218 = vld [vmem:[%s15 + $0xb0] sm:$0xff]
    %v1219 = vld [vmem:[%s15 + $0xb8] sm:$0xff]
    %v1220 = vld [vmem:[%s15 + $0xc0] sm:$0xff]
    %v1221 = vld [vmem:[%s15 + $0xc8] sm:$0xff]
    %v1222 = vld [vmem:[%s15 + $0xd0] sm:$0xff]
    %v1223 = vld [vmem:[%s15 + $0xd8] sm:$0xff]
    %v1224 = vld [vmem:[%s15 + $0xe0] sm:$0xff]
    %v1225 = vld [vmem:[%s15 + $0xe8] sm:$0xff]
    %v1226 = vld [vmem:[%s15 + $0xf0] sm:$0xff]
    %v1227 = vld [vmem:[%s15 + $0xf8] sm:$0xff]
    %v1228 = vld [vmem:[%s15 + $0x100] sm:$0xff]
    %v1229 = vld [vmem:[%s15 + $0x108] sm:$0xff]
    %v1230 = vld [vmem:[%s15 + $0x110] sm:$0xff]
    %v1231 = vld [vmem:[%s15 + $0x118] sm:$0xff]
    %v1232 = vld [vmem:[%s15 + $0x120] sm:$0xff]
    %v1233 = vld [vmem:[%s15 + $0x128] sm:$0xff]
    %v1234 = vld [vmem:[%s15 + $0x130] sm:$0xff]
    %v1235 = vld [vmem:[%s15 + $0x138] sm:$0xff]
    %v1236 = vld [vmem:[%s15 + $0x140] sm:$0xff]
    %v1237 = vld [vmem:[%s15 + $0x148] sm:$0xff]
    %v1238 = vld [vmem:[%s15 + $0x150] sm:$0xff]
    %v1239 = vld [vmem:[%s15 + $0x158] sm:$0xff]
    %v1240 = vld [vmem:[%s15 + $0x160] sm:$0xff]
    %v1241 = vld [vmem:[%s15 + $0x168] sm:$0xff]
    %v1242 = vld [vmem:[%s15 + $0x170] sm:$0xff]
    %v1243 = vld [vmem:[%s15 + $0x178] sm:$0xff]
    %v1244 = vld [vmem:[%s15 + $0x180] sm:$0xff]
    %v1245 = vld [vmem:[%s15 + $0x188] sm:$0xff]
    %v1246 = vld [vmem:[%s15 + $0x190] sm:$0xff]
    %v1247 = vld [vmem:[%s15 + $0x198] sm:$0xff]
    %v1248 = vld [vmem:[%s15 + $0x1a0] sm:$0xff]
    %v1249 = vld [vmem:[%s15 + $0x1a8] sm:$0xff]
    %v1250 = vld [vmem:[%s15 + $0x1b0] sm:$0xff]
    %v1251 = vld [vmem:[%s15 + $0x1b8] sm:$0xff]
    %v1252 = vld [vmem:[%s15 + $0x1c0] sm:$0xff]
    %v1253 = vld [vmem:[%s15 + $0x1c8] sm:$0xff]
    %v1254 = vld [vmem:[%s15 + $0x1d0] sm:$0xff]
    %v1255 = vld [vmem:[%s15 + $0x1d8] sm:$0xff]
    %v1256 = vld [vmem:[%s15 + $0x1e0] sm:$0xff]
    %v1257 = vld [vmem:[%s15 + $0x1e8] sm:$0xff]
    %v1258 = vld [vmem:[%s15 + $0x1f0] sm:$0xff]
    %v1259 = vld [vmem:[%s15 + $0x1f8] sm:$0xff]
    %v1260 = vld [vmem:[%s15 + $0x200] sm:$0xff]
    %v1261 = vld [vmem:[%s15 + $0x208] sm:$0xff]
    %v1262 = vld [vmem:[%s15 + $0x210] sm:$0xff]
    %v1263 = vld [vmem:[%s15 + $0x218] sm:$0xff]
    %v1264 = vld [vmem:[%s15 + $0x220] sm:$0xff]
    %v1265 = vld [vmem:[%s15 + $0x228] sm:$0xff]
    %v1266 = vld [vmem:[%s15 + $0x230] sm:$0xff]
    %v1267 = vld [vmem:[%s15 + $0x238] sm:$0xff]
    %v1268 = vld [vmem:[%s15 + $0x240] sm:$0xff]
    %v1269 = vld [vmem:[%s15 + $0x248] sm:$0xff]
    %v1270 = vld [vmem:[%s15 + $0x250] sm:$0xff]
    %v1271 = vld [vmem:[%s15 + $0x258] sm:$0xff]
    %v1272 = vld [vmem:[%s15 + $0x260] sm:$0xff]
    %v1273 = vld [vmem:[%s15 + $0x268] sm:$0xff]
    %v1274 = vld [vmem:[%s15 + $0x270] sm:$0xff]
    %v1275 = vld [vmem:[%s15 + $0x278] sm:$0xff]
    %v1276 = vld [vmem:[%s15 + $0x280] sm:$0xff]
    %v1277 = vld [vmem:[%s15 + $0x288] sm:$0xff]
    %v1278 = vld [vmem:[%s15 + $0x290] sm:$0xff]
    %v1279 = vld [vmem:[%s15 + $0x298] sm:$0xff]
    %v1280 = vld [vmem:[%s15 + $0x2a0] sm:$0xff]
    %v1281 = vld [vmem:[%s15 + $0x2a8] sm:$0xff]
    %v1282 = vld [vmem:[%s15 + $0x2b0] sm:$0xff]
    %v1283 = vld [vmem:[%s15 + $0x2b8] sm:$0xff]
    %v1284 = vld [vmem:[%s15 + $0x2c0] sm:$0xff]
    %v1285 = vld [vmem:[%s15 + $0x2c8] sm:$0xff]
    %v1286 = vld [vmem:[%s15 + $0x2d0] sm:$0xff]
    %v1287 = vld [vmem:[%s15 + $0x2d8] sm:$0xff]
    %v1288 = vld [vmem:[%s15 + $0x2e0] sm:$0xff]
    %v1289 = vld [vmem:[%s15 + $0x2e8] sm:$0xff]
    %v1290 = vld [vmem:[%s15 + $0x2f0] sm:$0xff]
    %v1291 = vld [vmem:[%s15 + $0x2f8] sm:$0xff]
    %v1292 = vld [vmem:[%s15 + $0x300] sm:$0xff]
    %v1293 = vld [vmem:[%s15 + $0x308] sm:$0xff]
    %v1294 = vld [vmem:[%s15 + $0x310] sm:$0xff]
    %v1295 = vld [vmem:[%s15 + $0x318] sm:$0xff]
    %v1296 = vld [vmem:[%s15 + $0x320] sm:$0xff]
    %v1297 = vld [vmem:[%s15 + $0x328] sm:$0xff]
    %v1298 = vld [vmem:[%s15 + $0x330] sm:$0xff]
    %v1299 = vld [vmem:[%s15 + $0x338] sm:$0xff]
    %v1300 = vld [vmem:[%s15 + $0x340] sm:$0xff]
    %v1301 = vld [vmem:[%s15 + $0x348] sm:$0xff]
    %v1302 = vld [vmem:[%s15 + $0x350] sm:$0xff]
    %v1303 = vld [vmem:[%s15 + $0x358] sm:$0xff]
    %v1304 = vld [vmem:[%s15 + $0x360] sm:$0xff]
    %v1305 = vld [vmem:[%s15 + $0x368] sm:$0xff]
    %v1306 = vld [vmem:[%s15 + $0x370] sm:$0xff]
    %v1307 = vld [vmem:[%s15 + $0x378] sm:$0xff]
    %v1308 = vld [vmem:[%s15 + $0x380] sm:$0xff]
    %v1309 = vld [vmem:[%s15 + $0x388] sm:$0xff]
    %v1310 = vld [vmem:[%s15 + $0x390] sm:$0xff]
    %v1311 = vld [vmem:[%s15 + $0x398] sm:$0xff]
    %v1312 = vld [vmem:[%s15 + $0x3a0] sm:$0xff]
    %v1313 = vld [vmem:[%s15 + $0x3a8] sm:$0xff]
    %v1314 = vld [vmem:[%s15 + $0x3b0] sm:$0xff]
    %v1315 = vld [vmem:[%s15 + $0x3b8] sm:$0xff]
    %v1316 = vld [vmem:[%s15 + $0x3c0] sm:$0xff]
    %v1317 = vld [vmem:[%s15 + $0x3c8] sm:$0xff]
    %v1318 = vld [vmem:[%s15 + $0x3d0] sm:$0xff]
    %v1319 = vld [vmem:[%s15 + $0x3d8] sm:$0xff]
    %v1320 = vld [vmem:[%s15 + $0x3e0] sm:$0xff]
    %v1321 = vld [vmem:[%s15 + $0x3e8] sm:$0xff]
    %v1322 = vld [vmem:[%s15 + $0x3f0] sm:$0xff]
    %v1323 = vld [vmem:[%s15 + $0x3f8] sm:$0xff]
    %v1324 = vld [vmem:[%s15 + $0x400] sm:$0xff]
    %v1325 = vld [vmem:[%s15 + $0x408] sm:$0xff]
    %v1326 = vld [vmem:[%s15 + $0x410] sm:$0xff]
    %v1327 = vld [vmem:[%s15 + $0x418] sm:$0xff]
    %v1328 = vld [vmem:[%s15 + $0x420] sm:$0xff]
    %v1329 = vld [vmem:[%s15 + $0x428] sm:$0xff]
    %v1330 = vld [vmem:[%s15 + $0x430] sm:$0xff]
    %v1331 = vld [vmem:[%s15 + $0x438] sm:$0xff]
    %v1332 = vld [vmem:[%s15 + $0x440] sm:$0xff]
    %v1333 = vld [vmem:[%s15 + $0x448] sm:$0xff]
    %v1334 = vld [vmem:[%s15 + $0x450] sm:$0xff]
    %v1335 = vld [vmem:[%s15 + $0x458] sm:$0xff]
    %v1336 = vld [vmem:[%s15 + $0x460] sm:$0xff]
    %v1337 = vld [vmem:[%s15 + $0x468] sm:$0xff]
    %v1338 = vld [vmem:[%s15 + $0x470] sm:$0xff]
    %v1339 = vld [vmem:[%s15 + $0x478] sm:$0xff]
    %v1340 = vld [vmem:[%s15 + $0x480] sm:$0xff]
    %v1341 = vld [vmem:[%s15 + $0x488] sm:$0xff]
    %v1342 = vld [vmem:[%s15 + $0x490] sm:$0xff]
    %v1343 = vld [vmem:[%s15 + $0x498] sm:$0xff]
    %v1344 = vld [vmem:[%s15 + $0x4a0] sm:$0xff]
    %v1345 = vld [vmem:[%s15 + $0x4a8] sm:$0xff]
    %v1346 = vld [vmem:[%s15 + $0x4b0] sm:$0xff]
    %v1347 = vld [vmem:[%s15 + $0x4b8] sm:$0xff]
    %v1348 = vld [vmem:[%s15 + $0x4c0] sm:$0xff]
    %v1349 = vld [vmem:[%s15 + $0x4c8] sm:$0xff]
    %v1350 = vld [vmem:[%s15 + $0x4d0] sm:$0xff]
    %v1351 = vld [vmem:[%s15 + $0x4d8] sm:$0xff]
    %v1352 = vld [vmem:[%s15 + $0x4e0] sm:$0xff]
    %v1353 = vld [vmem:[%s15 + $0x4e8] sm:$0xff]
    %v1354 = vld [vmem:[%s15 + $0x4f0] sm:$0xff]
    %v1355 = vld [vmem:[%s15 + $0x4f8] sm:$0xff]
    %v1356 = vld [vmem:[%s15 + $0x500] sm:$0xff]
    %v1357 = vld [vmem:[%s15 + $0x508] sm:$0xff]
    %v1358 = vld [vmem:[%s15 + $0x510] sm:$0xff]
    %v1359 = vld [vmem:[%s15 + $0x518] sm:$0xff]
    %v1360 = vld [vmem:[%s15 + $0x520] sm:$0xff]
    %v1361 = vld [vmem:[%s15 + $0x528] sm:$0xff]
    %v1362 = vld [vmem:[%s15 + $0x530] sm:$0xff]
    %v1363 = vld [vmem:[%s15 + $0x538] sm:$0xff]
    %v1364 = vld [vmem:[%s15 + $0x540] sm:$0xff]
    %v1365 = vld [vmem:[%s15 + $0x548] sm:$0xff]
    %v1366 = vld [vmem:[%s15 + $0x550] sm:$0xff]
    %v1367 = vld [vmem:[%s15 + $0x558] sm:$0xff]
    %v1368 = vld [vmem:[%s15 + $0x560] sm:$0xff]
    %v1369 = vld [vmem:[%s15 + $0x568] sm:$0xff]
    %v1370 = vld [vmem:[%s15 + $0x570] sm:$0xff]
    %v1371 = vld [vmem:[%s15 + $0x578] sm:$0xff]
    %v1372 = vld [vmem:[%s15 + $0x580] sm:$0xff]
    %v1373 = vld [vmem:[%s15 + $0x588] sm:$0xff]
    %v1374 = vld [vmem:[%s15 + $0x590] sm:$0xff]
    %v1375 = vld [vmem:[%s15 + $0x598] sm:$0xff]
    %v1376 = vld [vmem:[%s15 + $0x5a0] sm:$0xff]
    %v1377 = vld [vmem:[%s15 + $0x5a8] sm:$0xff]
    %v1378 = vld [vmem:[%s15 + $0x5b0] sm:$0xff]
    %v1379 = vld [vmem:[%s15 + $0x5b8] sm:$0xff]
    %v1380 = vld [vmem:[%s15 + $0x5c0] sm:$0xff]
    %v1381 = vld [vmem:[%s15 + $0x5c8] sm:$0xff]
    %v1382 = vld [vmem:[%s15 + $0x5d0] sm:$0xff]
    %v1383 = vld [vmem:[%s15 + $0x5d8] sm:$0xff]
    %v1384 = vld [vmem:[%s15 + $0x5e0] sm:$0xff]
    %v1385 = vld [vmem:[%s15 + $0x5e8] sm:$0xff]
    %v1386 = vld [vmem:[%s15 + $0x5f0] sm:$0xff]
    %v1387 = vld [vmem:[%s15 + $0x5f8] sm:$0xff]
    %v1388 = vld [vmem:[%s15 + $0x600] sm:$0xff]
    %v1389 = vld [vmem:[%s15 + $0x608] sm:$0xff]
    %v1390 = vld [vmem:[%s15 + $0x610] sm:$0xff]
    %v1391 = vld [vmem:[%s15 + $0x618] sm:$0xff]
    %v1392 = vld [vmem:[%s15 + $0x620] sm:$0xff]
    %v1393 = vld [vmem:[%s15 + $0x628] sm:$0xff]
    %v1394 = vld [vmem:[%s15 + $0x630] sm:$0xff]
    %v1395 = vld [vmem:[%s15 + $0x638] sm:$0xff]
    %v1396 = vld [vmem:[%s15 + $0x640] sm:$0xff]
    %v1397 = vld [vmem:[%s15 + $0x648] sm:$0xff]
    %v1398 = vld [vmem:[%s15 + $0x650] sm:$0xff]
    %v1399 = vld [vmem:[%s15 + $0x658] sm:$0xff]
    %v1400 = vld [vmem:[%s15 + $0x660] sm:$0xff]
    %v1401 = vld [vmem:[%s15 + $0x668] sm:$0xff]
    %v1402 = vld [vmem:[%s15 + $0x670] sm:$0xff]
    %v1403 = vld [vmem:[%s15 + $0x678] sm:$0xff]
    %v1404 = vld [vmem:[%s15 + $0x680] sm:$0xff]
    %v1405 = vld [vmem:[%s15 + $0x688] sm:$0xff]
    %v1406 = vld [vmem:[%s15 + $0x690] sm:$0xff]
    %v1407 = vld [vmem:[%s15 + $0x698] sm:$0xff]
    %v1408 = vld [vmem:[%s15 + $0x6a0] sm:$0xff]
    %v1409 = vld [vmem:[%s15 + $0x6a8] sm:$0xff]
    %v1410 = vld [vmem:[%s15 + $0x6b0] sm:$0xff]
    %v1411 = vld [vmem:[%s15 + $0x6b8] sm:$0xff]
    %v1412 = vld [vmem:[%s15 + $0x6c0] sm:$0xff]
    %v1413 = vld [vmem:[%s15 + $0x6c8] sm:$0xff]
    %v1414 = vld [vmem:[%s15 + $0x6d0] sm:$0xff]
    %v1415 = vld [vmem:[%s15 + $0x6d8] sm:$0xff]
    %v1416 = vld [vmem:[%s15 + $0x6e0] sm:$0xff]
    %v1417 = vld [vmem:[%s15 + $0x6e8] sm:$0xff]
    %v1418 = vld [vmem:[%s15 + $0x6f0] sm:$0xff]
    %v1419 = vld [vmem:[%s15 + $0x6f8] sm:$0xff]
    %v1420 = vld [vmem:[%s15 + $0x700] sm:$0xff]
    %v1421 = vld [vmem:[%s15 + $0x708] sm:$0xff]
    %v1422 = vld [vmem:[%s15 + $0x710] sm:$0xff]
    %v1423 = vld [vmem:[%s15 + $0x718] sm:$0xff]
    %v1424 = vld [vmem:[%s15 + $0x720] sm:$0xff]
    %v1425 = vld [vmem:[%s15 + $0x728] sm:$0xff]
    %v1426 = vld [vmem:[%s15 + $0x730] sm:$0xff]
    %v1427 = vld [vmem:[%s15 + $0x738] sm:$0xff]
    %v1428 = vld [vmem:[%s15 + $0x740] sm:$0xff]
    %v1429 = vld [vmem:[%s15 + $0x748] sm:$0xff]
    %v1430 = vld [vmem:[%s15 + $0x750] sm:$0xff]
    %v1431 = vld [vmem:[%s15 + $0x758] sm:$0xff]
    %v1432 = vld [vmem:[%s15 + $0x760] sm:$0xff]
    %v1433 = vld [vmem:[%s15 + $0x768] sm:$0xff]
    %v1434 = vld [vmem:[%s15 + $0x770] sm:$0xff]
    %v1435 = vld [vmem:[%s15 + $0x778] sm:$0xff]
    %v1436 = vld [vmem:[%s15 + $0x780] sm:$0xff]
    %v1437 = vld [vmem:[%s15 + $0x788] sm:$0xff]
    %v1438 = vld [vmem:[%s15 + $0x790] sm:$0xff]
    %v1439 = vld [vmem:[%s15 + $0x798] sm:$0xff]
    %v1440 = vld [vmem:[%s15 + $0x7a0] sm:$0xff]
    %v1441 = vld [vmem:[%s15 + $0x7a8] sm:$0xff]
    %v1442 = vld [vmem:[%s15 + $0x7b0] sm:$0xff]
    %v1443 = vld [vmem:[%s15 + $0x7b8] sm:$0xff]
    %v1444 = vld [vmem:[%s15 + $0x7c0] sm:$0xff]
    %v1445 = vld [vmem:[%s15 + $0x7c8] sm:$0xff]
    %v1446 = vld [vmem:[%s15 + $0x7d0] sm:$0xff]
    %v1447 = vld [vmem:[%s15 + $0x7d8] sm:$0xff]
    %v1448 = vld [vmem:[%s15 + $0x7e0] sm:$0xff]
    %v1449 = vld [vmem:[%s15 + $0x7e8] sm:$0xff]
    %v1450 = vld [vmem:[%s15 + $0x7f0] sm:$0xff]
    %v1451 = vld [vmem:[%s15 + $0x7f8] sm:$0xff]
    %v1452 = vld [vmem:[%s15 + $0x800] sm:$0xff]
    %v1453 = vld [vmem:[%s15 + $0x808] sm:$0xff]
    %v1454 = vld [vmem:[%s15 + $0x810] sm:$0xff]
    %v1455 = vld [vmem:[%s15 + $0x818] sm:$0xff]
    %v1456 = vld [vmem:[%s15 + $0x820] sm:$0xff]
    %v1457 = vld [vmem:[%s15 + $0x828] sm:$0xff]
    %v1458 = vld [vmem:[%s15 + $0x830] sm:$0xff]
    %v1459 = vld [vmem:[%s15 + $0x838] sm:$0xff]
    %v1460 = vld [vmem:[%s15 + $0x840] sm:$0xff]
    %v1461 = vld [vmem:[%s15 + $0x848] sm:$0xff]
    %v1462 = vld [vmem:[%s15 + $0x850] sm:$0xff]
    %v1463 = vld [vmem:[%s15 + $0x858] sm:$0xff]
    %v1464 = vld [vmem:[%s15 + $0x860] sm:$0xff]
    %v1465 = vld [vmem:[%s15 + $0x868] sm:$0xff]
    %v1466 = vld [vmem:[%s15 + $0x870] sm:$0xff]
    %v1467 = vld [vmem:[%s15 + $0x878] sm:$0xff]
    %v1468 = vld [vmem:[%s15 + $0x880] sm:$0xff]
    %v1469 = vld [vmem:[%s15 + $0x888] sm:$0xff]
    %v1470 = vld [vmem:[%s15 + $0x890] sm:$0xff]
    %v1471 = vld [vmem:[%s15 + $0x898] sm:$0xff]
    %v1472 = vld [vmem:[%s15 + $0x8a0] sm:$0xff]
    %v1473 = vld [vmem:[%s15 + $0x8a8] sm:$0xff]
    %v1474 = vld [vmem:[%s15 + $0x8b0] sm:$0xff]
    %v1475 = vld [vmem:[%s15 + $0x8b8] sm:$0xff]
    %v1476 = vld [vmem:[%s15 + $0x8c0] sm:$0xff]
    %v1477 = vld [vmem:[%s15 + $0x8c8] sm:$0xff]
    %v1478 = vld [vmem:[%s15 + $0x8d0] sm:$0xff]
    %v1479 = vld [vmem:[%s15 + $0x8d8] sm:$0xff]
    %v1480 = vld [vmem:[%s15 + $0x8e0] sm:$0xff]
    %v1481 = vld [vmem:[%s15 + $0x8e8] sm:$0xff]
    %v1482 = vld [vmem:[%s15 + $0x8f0] sm:$0xff]
    %v1483 = vld [vmem:[%s15 + $0x8f8] sm:$0xff]
    %v1484 = vld [vmem:[%s15 + $0x900] sm:$0xff]
    %v1485 = vld [vmem:[%s15 + $0x908] sm:$0xff]
    %v1486 = vld [vmem:[%s15 + $0x910] sm:$0xff]
    %v1487 = vld [vmem:[%s15 + $0x918] sm:$0xff]
    %v1488 = vld [vmem:[%s15 + $0x920] sm:$0xff]
    %v1489 = vld [vmem:[%s15 + $0x928] sm:$0xff]
    %v1490 = vld [vmem:[%s15 + $0x930] sm:$0xff]
    %v1491 = vld [vmem:[%s15 + $0x938] sm:$0xff]
    %v1492 = vld [vmem:[%s15 + $0x940] sm:$0xff]
    %v1493 = vld [vmem:[%s15 + $0x948] sm:$0xff]
    %v1494 = vld [vmem:[%s15 + $0x950] sm:$0xff]
    %v1495 = vld [vmem:[%s15 + $0x958] sm:$0xff]
    %v1496 = vld [vmem:[%s15 + $0x960] sm:$0xff]
    %v1497 = vld [vmem:[%s15 + $0x968] sm:$0xff]
    %v1498 = vld [vmem:[%s15 + $0x970] sm:$0xff]
    %v1499 = vld [vmem:[%s15 + $0x978] sm:$0xff]
    %v1500 = vld [vmem:[%s15 + $0x980] sm:$0xff]
    %v1501 = vld [vmem:[%s15 + $0x988] sm:$0xff]
    %v1502 = vld [vmem:[%s15 + $0x990] sm:$0xff]
    %v1503 = vld [vmem:[%s15 + $0x998] sm:$0xff]
    %v1504 = vld [vmem:[%s15 + $0x9a0] sm:$0xff]
    %v1505 = vld [vmem:[%s15 + $0x9a8] sm:$0xff]
    %v1506 = vld [vmem:[%s15 + $0x9b0] sm:$0xff]
    %v1507 = vld [vmem:[%s15 + $0x9b8] sm:$0xff]
    %v1508 = vld [vmem:[%s15 + $0x9c0] sm:$0xff]
    %v1509 = vld [vmem:[%s15 + $0x9c8] sm:$0xff]
    %v1510 = vld [vmem:[%s15 + $0x9d0] sm:$0xff]
    %v1511 = vld [vmem:[%s15 + $0x9d8] sm:$0xff]
    %v1512 = vld [vmem:[%s15 + $0x9e0] sm:$0xff]
    %v1513 = vld [vmem:[%s15 + $0x9e8] sm:$0xff]
    %v1514 = vld [vmem:[%s15 + $0x9f0] sm:$0xff]
    %v1515 = vld [vmem:[%s15 + $0x9f8] sm:$0xff]
    %v1516 = vld [vmem:[%s15 + $0xa00] sm:$0xf]
    %v1517 = vld [vmem:[%s15 + $0xa08] sm:$0xf]
    %v1518 = vld [vmem:[%s15 + $0xa10] sm:$0xf]
    %v1519 = vld [vmem:[%s15 + $0xa18] sm:$0xf]
    %v1520 = vld [vmem:[%s15 + $0xa20] sm:$0xf]
    %s1521 = scalar_lea.vmem [#allocation8], 1
    %v1522 = vld [vmem:[%s1521] ss:$8 sm:$0xf]
    %v1523 = vld [vmem:[%s1521] ss:$8 sm:$0x10]
    %v1524 = vor.u32 %v1522, %v1523
    %v1526 = vlaneseq
    %v1527 = vshrl.u32 %v1526, 7
    %v1528 = vsub.s32 0, %v1527
    %v1529 = vrot.slane %v1524, %v1528
    %v1530 = vlaneseq
    %v1531 = vshrl.u32 %v1530, 7
    %v1532 = vsub.s32 1, %v1531
    %v1533 = vrot.slane %v1524, %v1532
    %v1534 = vlaneseq
    %v1535 = vshrl.u32 %v1534, 7
    %v1536 = vsub.s32 2, %v1535
    %v1537 = vrot.slane %v1524, %v1536
    %v1538 = vlaneseq
    %v1539 = vshrl.u32 %v1538, 7
    %v1540 = vsub.s32 3, %v1539
    %v1541 = vrot.slane %v1524, %v1540
    %v1542 = vlaneseq
    %v1543 = vshrl.u32 %v1542, 7
    %v1544 = vsub.s32 4, %v1543
    %v1545 = vrot.slane %v1524, %v1544
    %vm1551 = vcmask 31744
    %v1553 = vsel %vm1551, %v1195, 0
    %vm1555 = vcmask 1043456
    %v1557 = vsel %vm1555, %v1516, 0
    %v1560 = vsel %vm1555, %v1517, 0
    %v1563 = vsel %vm1555, %v1518, 0
    %v1566 = vsel %vm1555, %v1519, 0
    %v1569 = vsel %vm1555, %v1520, 0
    %1571 = vmatprep.subr.mxu0 %v1272
    %1572 = vmatpush1.msra.mxu0 %v1271
    %1573 = vmatprep.subr.mxu0 %v1267
    %1574 = vmatpush1.msra.mxu0 %v1266
    %1575 = vmatprep.subr.mxu0 %v1262
    %1576 = vmatpush1.msra.mxu0 %v1261
    %1577 = vmatprep.subr.mxu0 %v1257
    %1578 = vmatpush1.msra.mxu0 %v1256
    %1579 = vmatprep.subr.mxu0 %v1252
    %1580 = vmatpush1.msra.mxu0 %v1251
    %1581 = vmatprep.subr.mxu0 %v1247
    %1582 = vmatpush1.msra.mxu0 %v1246
    %1583 = vmatprep.subr.mxu0 %v1242
    %1584 = vmatpush1.msra.mxu0 %v1241
    %1585 = vmatprep.subr.mxu0 %v1237
    %1586 = vmatpush1.msra.mxu0 %v1236
    %1587 = vmatprep.subr.mxu0 %v1232
    %1588 = vmatpush1.msra.mxu0 %v1231
    %1589 = vmatprep.subr.mxu0 %v1227
    %1590 = vmatpush1.msra.mxu0 %v1226
    %1591 = vmatprep.subr.mxu0 %v1222
    %1592 = vmatpush1.msra.mxu0 %v1221
    %1593 = vmatprep.subr.mxu0 %v1217
    %1594 = vmatpush1.msra.mxu0 %v1216
    %1595 = vmatprep.subr.mxu0 %v1212
    %1596 = vmatpush1.msra.mxu0 %v1211
    %1597 = vmatprep.subr.mxu0 %v1207
    %1598 = vmatpush1.msra.mxu0 %v1206
    %1599 = vmatprep.subr.mxu0 %v1202
    %1600 = vmatpush1.msra.mxu0 %v1201
    %1601 = vmatprep.subr.mxu0 %v1197
    %1602 = vmatpush1.msra.mxu0 %v1196
    %1603 = vmatprep.subr.mxu0 %v1352
    %1604 = vmatpush2.msra.mxu0 %v1351
    %1605 = vmatprep.subr.mxu0 %v1347
    %1606 = vmatpush2.msra.mxu0 %v1346
    %1607 = vmatprep.subr.mxu0 %v1342
    %1608 = vmatpush2.msra.mxu0 %v1341
    %1609 = vmatprep.subr.mxu0 %v1337
    %1610 = vmatpush2.msra.mxu0 %v1336
    %1611 = vmatprep.subr.mxu0 %v1332
    %1612 = vmatpush2.msra.mxu0 %v1331
    %1613 = vmatprep.subr.mxu0 %v1327
    %1614 = vmatpush2.msra.mxu0 %v1326
    %1615 = vmatprep.subr.mxu0 %v1322
    %1616 = vmatpush2.msra.mxu0 %v1321
    %1617 = vmatprep.subr.mxu0 %v1317
    %1618 = vmatpush2.msra.mxu0 %v1316
    %1619 = vmatprep.subr.mxu0 %v1312
    %1620 = vmatpush2.msra.mxu0 %v1311
    %1621 = vmatprep.subr.mxu0 %v1307
    %1622 = vmatpush2.msra.mxu0 %v1306
    %1623 = vmatprep.subr.mxu0 %v1302
    %1624 = vmatpush2.msra.mxu0 %v1301
    %1625 = vmatprep.subr.mxu0 %v1297
    %1626 = vmatpush2.msra.mxu0 %v1296
    %1627 = vmatprep.subr.mxu0 %v1292
    %1628 = vmatpush2.msra.mxu0 %v1291
    %1629 = vmatprep.subr.mxu0 %v1287
    %1630 = vmatpush2.msra.mxu0 %v1286
    %1631 = vmatprep.subr.mxu0 %v1282
    %1632 = vmatpush2.msra.mxu0 %v1281
    %1633 = vmatprep.subr.mxu0 %v1277
    %1634 = vmatpush2.msra.mxu0 %v1276
    %1635 = vmatprep.mubr.f32.mxu0 %v1192
    %1636 = vmatmul.mubr.f32.gmra.mxu0 %v1191
    %v1637 = vpop.f32.mrf.mxu0
    %v1638 = vadd.f32 %v1529, %v1637
    %v1639 = vpop.f32.mrf.mxu0
    %v1640 = vadd.f32 %v1533, %v1639
    %1641 = vdwg.mxu0
    %1642 = vmatprep.subr.mxu0 %v1432
    %1643 = vmatpush1.msra.mxu0 %v1431
    %1644 = vmatprep.subr.mxu0 %v1427
    %1645 = vmatpush1.msra.mxu0 %v1426
    %1646 = vmatprep.subr.mxu0 %v1422
    %1647 = vmatpush1.msra.mxu0 %v1421
    %1648 = vmatprep.subr.mxu0 %v1417
    %1649 = vmatpush1.msra.mxu0 %v1416
    %1650 = vmatprep.subr.mxu0 %v1412
    %1651 = vmatpush1.msra.mxu0 %v1411
    %1652 = vmatprep.subr.mxu0 %v1407
    %1653 = vmatpush1.msra.mxu0 %v1406
    %1654 = vmatprep.subr.mxu0 %v1402
    %1655 = vmatpush1.msra.mxu0 %v1401
    %1656 = vmatprep.subr.mxu0 %v1397
    %1657 = vmatpush1.msra.mxu0 %v1396
    %1658 = vmatprep.subr.mxu0 %v1392
    %1659 = vmatpush1.msra.mxu0 %v1391
    %1660 = vmatprep.subr.mxu0 %v1387
    %1661 = vmatpush1.msra.mxu0 %v1386
    %1662 = vmatprep.subr.mxu0 %v1382
    %1663 = vmatpush1.msra.mxu0 %v1381
    %1664 = vmatprep.subr.mxu0 %v1377
    %1665 = vmatpush1.msra.mxu0 %v1376
    %1666 = vmatprep.subr.mxu0 %v1372
    %1667 = vmatpush1.msra.mxu0 %v1371
    %1668 = vmatprep.subr.mxu0 %v1367
    %1669 = vmatpush1.msra.mxu0 %v1366
    %1670 = vmatprep.subr.mxu0 %v1362
    %1671 = vmatpush1.msra.mxu0 %v1361
    %1672 = vmatprep.subr.mxu0 %v1357
    %1673 = vmatpush1.msra.mxu0 %v1356
    %1674 = vmatprep.subr.mxu0 %v1512
    %1675 = vmatpush2.msra.mxu0 %v1511
    %1676 = vmatprep.subr.mxu0 %v1507
    %1677 = vmatpush2.msra.mxu0 %v1506
    %1678 = vmatprep.subr.mxu0 %v1502
    %1679 = vmatpush2.msra.mxu0 %v1501
    %1680 = vmatprep.subr.mxu0 %v1497
    %1681 = vmatpush2.msra.mxu0 %v1496
    %1682 = vmatprep.subr.mxu0 %v1492
    %1683 = vmatpush2.msra.mxu0 %v1491
    %1684 = vmatprep.subr.mxu0 %v1487
    %1685 = vmatpush2.msra.mxu0 %v1486
    %1686 = vmatprep.subr.mxu0 %v1482
    %1687 = vmatpush2.msra.mxu0 %v1481
    %1688 = vmatprep.subr.mxu0 %v1477
    %1689 = vmatpush2.msra.mxu0 %v1476
    %1690 = vmatprep.subr.mxu0 %v1472
    %1691 = vmatpush2.msra.mxu0 %v1471
    %1692 = vmatprep.subr.mxu0 %v1467
    %1693 = vmatpush2.msra.mxu0 %v1466
    %1694 = vmatprep.subr.mxu0 %v1462
    %1695 = vmatpush2.msra.mxu0 %v1461
    %1696 = vmatprep.subr.mxu0 %v1457
    %1697 = vmatpush2.msra.mxu0 %v1456
    %1698 = vmatprep.subr.mxu0 %v1452
    %1699 = vmatpush2.msra.mxu0 %v1451
    %1700 = vmatprep.subr.mxu0 %v1447
    %1701 = vmatpush2.msra.mxu0 %v1446
    %1702 = vmatprep.subr.mxu0 %v1442
    %1703 = vmatpush2.msra.mxu0 %v1441
    %1704 = vmatprep.subr.mxu0 %v1437
    %1705 = vmatpush2.msra.mxu0 %v1436
    %1706 = vmatprep.mubr.f32.mxu0 %v1194
    %1707 = vmatmul.mubr.f32.gmra.mxu0 %v1193
    %v1708 = vpop.f32.mrf.mxu0
    %v1709 = vadd.f32 %v1638, %v1708
    %v1710 = vpop.f32.mrf.mxu0
    %v1711 = vadd.f32 %v1640, %v1710
    %1712 = vdwg.mxu0
    %1713 = vmatprep.subr.mxu0 0.0
    %1714 = vmatpush1.msra.mxu0 0.0
    %1715 = vmatprep.subr.mxu0 0.0
    %1716 = vmatpush1.msra.mxu0 0.0
    %1717 = vmatprep.subr.mxu0 0.0
    %1718 = vmatpush1.msra.mxu0 0.0
    %1719 = vmatprep.subr.mxu0 0.0
    %1720 = vmatpush1.msra.mxu0 0.0
    %1721 = vmatprep.subr.mxu0 0.0
    %1722 = vmatpush1.msra.mxu0 0.0
    %1723 = vmatprep.subr.mxu0 0.0
    %1724 = vmatpush1.msra.mxu0 0.0
    %1725 = vmatprep.subr.mxu0 0.0
    %1726 = vmatpush1.msra.mxu0 0.0
    %1727 = vmatprep.subr.mxu0 0.0
    %1728 = vmatpush1.msra.mxu0 0.0
    %1729 = vmatprep.subr.mxu0 0.0
    %1730 = vmatpush1.msra.mxu0 0.0
    %1731 = vmatprep.subr.mxu0 0.0
    %1732 = vmatpush1.msra.mxu0 0.0
    %1733 = vmatprep.subr.mxu0 0.0
    %1734 = vmatpush1.msra.mxu0 0.0
    %1735 = vmatprep.subr.mxu0 0.0
    %1736 = vmatpush1.msra.mxu0 0.0
    %1737 = vmatprep.subr.mxu0 0.0
    %1738 = vmatpush1.msra.mxu0 0.0
    %1739 = vmatprep.subr.mxu0 0.0
    %1740 = vmatpush1.msra.mxu0 0.0
    %1741 = vmatprep.subr.mxu0 0.0
    %1742 = vmatpush1.msra.mxu0 0.0
    %1743 = vmatprep.subr.mxu0 %v1560
    %1744 = vmatpush1.msra.mxu0 %v1557
    %1745 = vmatprep.subr.mxu0 0.0
    %1746 = vmatpush2.msra.mxu0 0.0
    %1747 = vmatprep.subr.mxu0 0.0
    %1748 = vmatpush2.msra.mxu0 0.0
    %1749 = vmatprep.subr.mxu0 0.0
    %1750 = vmatpush2.msra.mxu0 0.0
    %1751 = vmatprep.subr.mxu0 0.0
    %1752 = vmatpush2.msra.mxu0 0.0
    %1753 = vmatprep.subr.mxu0 0.0
    %1754 = vmatpush2.msra.mxu0 0.0
    %1755 = vmatprep.subr.mxu0 0.0
    %1756 = vmatpush2.msra.mxu0 0.0
    %1757 = vmatprep.subr.mxu0 0.0
    %1758 = vmatpush2.msra.mxu0 0.0
    %1759 = vmatprep.subr.mxu0 0.0
    %1760 = vmatpush2.msra.mxu0 0.0
    %1761 = vmatprep.subr.mxu0 0.0
    %1762 = vmatpush2.msra.mxu0 0.0
    %1763 = vmatprep.subr.mxu0 0.0
    %1764 = vmatpush2.msra.mxu0 0.0
    %1765 = vmatprep.subr.mxu0 0.0
    %1766 = vmatpush2.msra.mxu0 0.0
    %1767 = vmatprep.subr.mxu0 0.0
    %1768 = vmatpush2.msra.mxu0 0.0
    %1769 = vmatprep.subr.mxu0 0.0
    %1770 = vmatpush2.msra.mxu0 0.0
    %1771 = vmatprep.subr.mxu0 0.0
    %1772 = vmatpush2.msra.mxu0 0.0
    %1773 = vmatprep.subr.mxu0 0.0
    %1774 = vmatpush2.msra.mxu0 0.0
    %1775 = vmatprep.subr.mxu0 0.0
    %1776 = vmatpush2.msra.mxu0 0.0
    %1777 = vmatprep.mubr.f32.mxu0 0.0
    %1778 = vmatmul.mubr.f32.gmra.mxu0 %v1553
    %v1779 = vpop.f32.mrf.mxu0
    %v1780 = vadd.f32 %v1709, %v1779
    %v1781 = vpop.f32.mrf.mxu0
    %v1782 = vadd.f32 %v1711, %v1781
    %1783 = vdwg.mxu0
    %1784 = vmatprep.subr.mxu0 %v1274
    %1785 = vmatpush1.msra.mxu0 %v1273
    %1786 = vmatprep.subr.mxu0 %v1269
    %1787 = vmatpush1.msra.mxu0 %v1268
    %1788 = vmatprep.subr.mxu0 %v1264
    %1789 = vmatpush1.msra.mxu0 %v1263
    %1790 = vmatprep.subr.mxu0 %v1259
    %1791 = vmatpush1.msra.mxu0 %v1258
    %1792 = vmatprep.subr.mxu0 %v1254
    %1793 = vmatpush1.msra.mxu0 %v1253
    %1794 = vmatprep.subr.mxu0 %v1249
    %1795 = vmatpush1.msra.mxu0 %v1248
    %1796 = vmatprep.subr.mxu0 %v1244
    %1797 = vmatpush1.msra.mxu0 %v1243
    %1798 = vmatprep.subr.mxu0 %v1239
    %1799 = vmatpush1.msra.mxu0 %v1238
    %1800 = vmatprep.subr.mxu0 %v1234
    %1801 = vmatpush1.msra.mxu0 %v1233
    %1802 = vmatprep.subr.mxu0 %v1229
    %1803 = vmatpush1.msra.mxu0 %v1228
    %1804 = vmatprep.subr.mxu0 %v1224
    %1805 = vmatpush1.msra.mxu0 %v1223
    %1806 = vmatprep.subr.mxu0 %v1219
    %1807 = vmatpush1.msra.mxu0 %v1218
    %1808 = vmatprep.subr.mxu0 %v1214
    %1809 = vmatpush1.msra.mxu0 %v1213
    %1810 = vmatprep.subr.mxu0 %v1209
    %1811 = vmatpush1.msra.mxu0 %v1208
    %1812 = vmatprep.subr.mxu0 %v1204
    %1813 = vmatpush1.msra.mxu0 %v1203
    %1814 = vmatprep.subr.mxu0 %v1199
    %1815 = vmatpush1.msra.mxu0 %v1198
    %1816 = vmatprep.subr.mxu0 %v1354
    %1817 = vmatpush2.msra.mxu0 %v1353
    %1818 = vmatprep.subr.mxu0 %v1349
    %1819 = vmatpush2.msra.mxu0 %v1348
    %1820 = vmatprep.subr.mxu0 %v1344
    %1821 = vmatpush2.msra.mxu0 %v1343
    %1822 = vmatprep.subr.mxu0 %v1339
    %1823 = vmatpush2.msra.mxu0 %v1338
    %1824 = vmatprep.subr.mxu0 %v1334
    %1825 = vmatpush2.msra.mxu0 %v1333
    %1826 = vmatprep.subr.mxu0 %v1329
    %1827 = vmatpush2.msra.mxu0 %v1328
    %1828 = vmatprep.subr.mxu0 %v1324
    %1829 = vmatpush2.msra.mxu0 %v1323
    %1830 = vmatprep.subr.mxu0 %v1319
    %1831 = vmatpush2.msra.mxu0 %v1318
    %1832 = vmatprep.subr.mxu0 %v1314
    %1833 = vmatpush2.msra.mxu0 %v1313
    %1834 = vmatprep.subr.mxu0 %v1309
    %1835 = vmatpush2.msra.mxu0 %v1308
    %1836 = vmatprep.subr.mxu0 %v1304
    %1837 = vmatpush2.msra.mxu0 %v1303
    %1838 = vmatprep.subr.mxu0 %v1299
    %1839 = vmatpush2.msra.mxu0 %v1298
    %1840 = vmatprep.subr.mxu0 %v1294
    %1841 = vmatpush2.msra.mxu0 %v1293
    %1842 = vmatprep.subr.mxu0 %v1289
    %1843 = vmatpush2.msra.mxu0 %v1288
    %1844 = vmatprep.subr.mxu0 %v1284
    %1845 = vmatpush2.msra.mxu0 %v1283
    %1846 = vmatprep.subr.mxu0 %v1279
    %1847 = vmatpush2.msra.mxu0 %v1278
    %1848 = vmatprep.mubr.f32.mxu0 %v1192
    %1849 = vmatmul.mubr.f32.gmra.mxu0 %v1191
    %v1850 = vpop.f32.mrf.mxu0
    %v1851 = vadd.f32 %v1537, %v1850
    %v1852 = vpop.f32.mrf.mxu0
    %v1853 = vadd.f32 %v1541, %v1852
    %1854 = vdwg.mxu0
    %1855 = vmatprep.subr.mxu0 %v1434
    %1856 = vmatpush1.msra.mxu0 %v1433
    %1857 = vmatprep.subr.mxu0 %v1429
    %1858 = vmatpush1.msra.mxu0 %v1428
    %1859 = vmatprep.subr.mxu0 %v1424
    %1860 = vmatpush1.msra.mxu0 %v1423
    %1861 = vmatprep.subr.mxu0 %v1419
    %1862 = vmatpush1.msra.mxu0 %v1418
    %1863 = vmatprep.subr.mxu0 %v1414
    %1864 = vmatpush1.msra.mxu0 %v1413
    %1865 = vmatprep.subr.mxu0 %v1409
    %1866 = vmatpush1.msra.mxu0 %v1408
    %1867 = vmatprep.subr.mxu0 %v1404
    %1868 = vmatpush1.msra.mxu0 %v1403
    %1869 = vmatprep.subr.mxu0 %v1399
    %1870 = vmatpush1.msra.mxu0 %v1398
    %1871 = vmatprep.subr.mxu0 %v1394
    %1872 = vmatpush1.msra.mxu0 %v1393
    %1873 = vmatprep.subr.mxu0 %v1389
    %1874 = vmatpush1.msra.mxu0 %v1388
    %1875 = vmatprep.subr.mxu0 %v1384
    %1876 = vmatpush1.msra.mxu0 %v1383
    %1877 = vmatprep.subr.mxu0 %v1379
    %1878 = vmatpush1.msra.mxu0 %v1378
    %1879 = vmatprep.subr.mxu0 %v1374
    %1880 = vmatpush1.msra.mxu0 %v1373
    %1881 = vmatprep.subr.mxu0 %v1369
    %1882 = vmatpush1.msra.mxu0 %v1368
    %1883 = vmatprep.subr.mxu0 %v1364
    %1884 = vmatpush1.msra.mxu0 %v1363
    %1885 = vmatprep.subr.mxu0 %v1359
    %1886 = vmatpush1.msra.mxu0 %v1358
    %1887 = vmatprep.subr.mxu0 %v1514
    %1888 = vmatpush2.msra.mxu0 %v1513
    %1889 = vmatprep.subr.mxu0 %v1509
    %1890 = vmatpush2.msra.mxu0 %v1508
    %1891 = vmatprep.subr.mxu0 %v1504
    %1892 = vmatpush2.msra.mxu0 %v1503
    %1893 = vmatprep.subr.mxu0 %v1499
    %1894 = vmatpush2.msra.mxu0 %v1498
    %1895 = vmatprep.subr.mxu0 %v1494
    %1896 = vmatpush2.msra.mxu0 %v1493
    %1897 = vmatprep.subr.mxu0 %v1489
    %1898 = vmatpush2.msra.mxu0 %v1488
    %1899 = vmatprep.subr.mxu0 %v1484
    %1900 = vmatpush2.msra.mxu0 %v1483
    %1901 = vmatprep.subr.mxu0 %v1479
    %1902 = vmatpush2.msra.mxu0 %v1478
    %1903 = vmatprep.subr.mxu0 %v1474
    %1904 = vmatpush2.msra.mxu0 %v1473
    %1905 = vmatprep.subr.mxu0 %v1469
    %1906 = vmatpush2.msra.mxu0 %v1468
    %1907 = vmatprep.subr.mxu0 %v1464
    %1908 = vmatpush2.msra.mxu0 %v1463
    %1909 = vmatprep.subr.mxu0 %v1459
    %1910 = vmatpush2.msra.mxu0 %v1458
    %1911 = vmatprep.subr.mxu0 %v1454
    %1912 = vmatpush2.msra.mxu0 %v1453
    %1913 = vmatprep.subr.mxu0 %v1449
    %1914 = vmatpush2.msra.mxu0 %v1448
    %1915 = vmatprep.subr.mxu0 %v1444
    %1916 = vmatpush2.msra.mxu0 %v1443
    %1917 = vmatprep.subr.mxu0 %v1439
    %1918 = vmatpush2.msra.mxu0 %v1438
    %1919 = vmatprep.mubr.f32.mxu0 %v1194
    %1920 = vmatmul.mubr.f32.gmra.mxu0 %v1193
    %v1921 = vpop.f32.mrf.mxu0
    %v1922 = vadd.f32 %v1851, %v1921
    %v1923 = vpop.f32.mrf.mxu0
    %v1924 = vadd.f32 %v1853, %v1923
    %1925 = vdwg.mxu0
    %1926 = vmatprep.subr.mxu0 0.0
    %1927 = vmatpush1.msra.mxu0 0.0
    %1928 = vmatprep.subr.mxu0 0.0
    %1929 = vmatpush1.msra.mxu0 0.0
    %1930 = vmatprep.subr.mxu0 0.0
    %1931 = vmatpush1.msra.mxu0 0.0
    %1932 = vmatprep.subr.mxu0 0.0
    %1933 = vmatpush1.msra.mxu0 0.0
    %1934 = vmatprep.subr.mxu0 0.0
    %1935 = vmatpush1.msra.mxu0 0.0
    %1936 = vmatprep.subr.mxu0 0.0
    %1937 = vmatpush1.msra.mxu0 0.0
    %1938 = vmatprep.subr.mxu0 0.0
    %1939 = vmatpush1.msra.mxu0 0.0
    %1940 = vmatprep.subr.mxu0 0.0
    %1941 = vmatpush1.msra.mxu0 0.0
    %1942 = vmatprep.subr.mxu0 0.0
    %1943 = vmatpush1.msra.mxu0 0.0
    %1944 = vmatprep.subr.mxu0 0.0
    %1945 = vmatpush1.msra.mxu0 0.0
    %1946 = vmatprep.subr.mxu0 0.0
    %1947 = vmatpush1.msra.mxu0 0.0
    %1948 = vmatprep.subr.mxu0 0.0
    %1949 = vmatpush1.msra.mxu0 0.0
    %1950 = vmatprep.subr.mxu0 0.0
    %1951 = vmatpush1.msra.mxu0 0.0
    %1952 = vmatprep.subr.mxu0 0.0
    %1953 = vmatpush1.msra.mxu0 0.0
    %1954 = vmatprep.subr.mxu0 0.0
    %1955 = vmatpush1.msra.mxu0 0.0
    %1956 = vmatprep.subr.mxu0 %v1566
    %1957 = vmatpush1.msra.mxu0 %v1563
    %1958 = vmatprep.subr.mxu0 0.0
    %1959 = vmatpush2.msra.mxu0 0.0
    %1960 = vmatprep.subr.mxu0 0.0
    %1961 = vmatpush2.msra.mxu0 0.0
    %1962 = vmatprep.subr.mxu0 0.0
    %1963 = vmatpush2.msra.mxu0 0.0
    %1964 = vmatprep.subr.mxu0 0.0
    %1965 = vmatpush2.msra.mxu0 0.0
    %1966 = vmatprep.subr.mxu0 0.0
    %1967 = vmatpush2.msra.mxu0 0.0
    %1968 = vmatprep.subr.mxu0 0.0
    %1969 = vmatpush2.msra.mxu0 0.0
    %1970 = vmatprep.subr.mxu0 0.0
    %1971 = vmatpush2.msra.mxu0 0.0
    %1972 = vmatprep.subr.mxu0 0.0
    %1973 = vmatpush2.msra.mxu0 0.0
    %1974 = vmatprep.subr.mxu0 0.0
    %1975 = vmatpush2.msra.mxu0 0.0
    %1976 = vmatprep.subr.mxu0 0.0
    %1977 = vmatpush2.msra.mxu0 0.0
    %1978 = vmatprep.subr.mxu0 0.0
    %1979 = vmatpush2.msra.mxu0 0.0
    %1980 = vmatprep.subr.mxu0 0.0
    %1981 = vmatpush2.msra.mxu0 0.0
    %1982 = vmatprep.subr.mxu0 0.0
    %1983 = vmatpush2.msra.mxu0 0.0
    %1984 = vmatprep.subr.mxu0 0.0
    %1985 = vmatpush2.msra.mxu0 0.0
    %1986 = vmatprep.subr.mxu0 0.0
    %1987 = vmatpush2.msra.mxu0 0.0
    %1988 = vmatprep.subr.mxu0 0.0
    %1989 = vmatpush2.msra.mxu0 0.0
    %1990 = vmatprep.mubr.f32.mxu0 0.0
    %1991 = vmatmul.mubr.f32.gmra.mxu0 %v1553
    %v1992 = vpop.f32.mrf.mxu0
    %v1993 = vadd.f32 %v1922, %v1992
    %v1994 = vpop.f32.mrf.mxu0
    %v1995 = vadd.f32 %v1924, %v1994
    %1996 = vdwg.mxu0
    %1997 = vmatprep.subr.mxu0 0.0
    %1998 = vmatpush1.msra.mxu0 %v1275
    %1999 = vmatprep.subr.mxu0 0.0
    %2000 = vmatpush1.msra.mxu0 %v1270
    %2001 = vmatprep.subr.mxu0 0.0
    %2002 = vmatpush1.msra.mxu0 %v1265
    %2003 = vmatprep.subr.mxu0 0.0
    %2004 = vmatpush1.msra.mxu0 %v1260
    %2005 = vmatprep.subr.mxu0 0.0
    %2006 = vmatpush1.msra.mxu0 %v1255
    %2007 = vmatprep.subr.mxu0 0.0
    %2008 = vmatpush1.msra.mxu0 %v1250
    %2009 = vmatprep.subr.mxu0 0.0
    %2010 = vmatpush1.msra.mxu0 %v1245
    %2011 = vmatprep.subr.mxu0 0.0
    %2012 = vmatpush1.msra.mxu0 %v1240
    %2013 = vmatprep.subr.mxu0 0.0
    %2014 = vmatpush1.msra.mxu0 %v1235
    %2015 = vmatprep.subr.mxu0 0.0
    %2016 = vmatpush1.msra.mxu0 %v1230
    %2017 = vmatprep.subr.mxu0 0.0
    %2018 = vmatpush1.msra.mxu0 %v1225
    %2019 = vmatprep.subr.mxu0 0.0
    %2020 = vmatpush1.msra.mxu0 %v1220
    %2021 = vmatprep.subr.mxu0 0.0
    %2022 = vmatpush1.msra.mxu0 %v1215
    %2023 = vmatprep.subr.mxu0 0.0
    %2024 = vmatpush1.msra.mxu0 %v1210
    %2025 = vmatprep.subr.mxu0 0.0
    %2026 = vmatpush1.msra.mxu0 %v1205
    %2027 = vmatprep.subr.mxu0 0.0
    %2028 = vmatpush1.msra.mxu0 %v1200
    %2029 = vmatprep.subr.mxu0 0.0
    %2030 = vmatpush2.msra.mxu0 %v1355
    %2031 = vmatprep.subr.mxu0 0.0
    %2032 = vmatpush2.msra.mxu0 %v1350
    %2033 = vmatprep.subr.mxu0 0.0
    %2034 = vmatpush2.msra.mxu0 %v1345
    %2035 = vmatprep.subr.mxu0 0.0
    %2036 = vmatpush2.msra.mxu0 %v1340
    %2037 = vmatprep.subr.mxu0 0.0
    %2038 = vmatpush2.msra.mxu0 %v1335
    %2039 = vmatprep.subr.mxu0 0.0
    %2040 = vmatpush2.msra.mxu0 %v1330
    %2041 = vmatprep.subr.mxu0 0.0
    %2042 = vmatpush2.msra.mxu0 %v1325
    %2043 = vmatprep.subr.mxu0 0.0
    %2044 = vmatpush2.msra.mxu0 %v1320
    %2045 = vmatprep.subr.mxu0 0.0
    %2046 = vmatpush2.msra.mxu0 %v1315
    %2047 = vmatprep.subr.mxu0 0.0
    %2048 = vmatpush2.msra.mxu0 %v1310
    %2049 = vmatprep.subr.mxu0 0.0
    %2050 = vmatpush2.msra.mxu0 %v1305
    %2051 = vmatprep.subr.mxu0 0.0
    %2052 = vmatpush2.msra.mxu0 %v1300
    %2053 = vmatprep.subr.mxu0 0.0
    %2054 = vmatpush2.msra.mxu0 %v1295
    %2055 = vmatprep.subr.mxu0 0.0
    %2056 = vmatpush2.msra.mxu0 %v1290
    %2057 = vmatprep.subr.mxu0 0.0
    %2058 = vmatpush2.msra.mxu0 %v1285
    %2059 = vmatprep.subr.mxu0 0.0
    %2060 = vmatpush2.msra.mxu0 %v1280
    %2061 = vmatprep.mubr.f32.mxu0 %v1192
    %2062 = vmatmul.mubr.f32.gmra.mxu0 %v1191
    %v2063 = vpop.f32.mrf.mxu0
    %v2064 = vadd.f32 %v1545, %v2063
    %v2065 = vpop.f32.mrf.mxu0
    %2066 = vdwg.mxu0
    %2067 = vmatprep.subr.mxu0 0.0
    %2068 = vmatpush1.msra.mxu0 %v1435
    %2069 = vmatprep.subr.mxu0 0.0
    %2070 = vmatpush1.msra.mxu0 %v1430
    %2071 = vmatprep.subr.mxu0 0.0
    %2072 = vmatpush1.msra.mxu0 %v1425
    %2073 = vmatprep.subr.mxu0 0.0
    %2074 = vmatpush1.msra.mxu0 %v1420
    %2075 = vmatprep.subr.mxu0 0.0
    %2076 = vmatpush1.msra.mxu0 %v1415
    %2077 = vmatprep.subr.mxu0 0.0
    %2078 = vmatpush1.msra.mxu0 %v1410
    %2079 = vmatprep.subr.mxu0 0.0
    %2080 = vmatpush1.msra.mxu0 %v1405
    %2081 = vmatprep.subr.mxu0 0.0
    %2082 = vmatpush1.msra.mxu0 %v1400
    %2083 = vmatprep.subr.mxu0 0.0
    %2084 = vmatpush1.msra.mxu0 %v1395
    %2085 = vmatprep.subr.mxu0 0.0
    %2086 = vmatpush1.msra.mxu0 %v1390
    %2087 = vmatprep.subr.mxu0 0.0
    %2088 = vmatpush1.msra.mxu0 %v1385
    %2089 = vmatprep.subr.mxu0 0.0
    %2090 = vmatpush1.msra.mxu0 %v1380
    %2091 = vmatprep.subr.mxu0 0.0
    %2092 = vmatpush1.msra.mxu0 %v1375
    %2093 = vmatprep.subr.mxu0 0.0
    %2094 = vmatpush1.msra.mxu0 %v1370
    %2095 = vmatprep.subr.mxu0 0.0
    %2096 = vmatpush1.msra.mxu0 %v1365
    %2097 = vmatprep.subr.mxu0 0.0
    %2098 = vmatpush1.msra.mxu0 %v1360
    %2099 = vmatprep.subr.mxu0 0.0
    %2100 = vmatpush2.msra.mxu0 %v1515
    %2101 = vmatprep.subr.mxu0 0.0
    %2102 = vmatpush2.msra.mxu0 %v1510
    %2103 = vmatprep.subr.mxu0 0.0
    %2104 = vmatpush2.msra.mxu0 %v1505
    %2105 = vmatprep.subr.mxu0 0.0
    %2106 = vmatpush2.msra.mxu0 %v1500
    %2107 = vmatprep.subr.mxu0 0.0
    %2108 = vmatpush2.msra.mxu0 %v1495
    %2109 = vmatprep.subr.mxu0 0.0
    %2110 = vmatpush2.msra.mxu0 %v1490
    %2111 = vmatprep.subr.mxu0 0.0
    %2112 = vmatpush2.msra.mxu0 %v1485
    %2113 = vmatprep.subr.mxu0 0.0
    %2114 = vmatpush2.msra.mxu0 %v1480
    %2115 = vmatprep.subr.mxu0 0.0
    %2116 = vmatpush2.msra.mxu0 %v1475
    %2117 = vmatprep.subr.mxu0 0.0
    %2118 = vmatpush2.msra.mxu0 %v1470
    %2119 = vmatprep.subr.mxu0 0.0
    %2120 = vmatpush2.msra.mxu0 %v1465
    %2121 = vmatprep.subr.mxu0 0.0
    %2122 = vmatpush2.msra.mxu0 %v1460
    %2123 = vmatprep.subr.mxu0 0.0
    %2124 = vmatpush2.msra.mxu0 %v1455
    %2125 = vmatprep.subr.mxu0 0.0
    %2126 = vmatpush2.msra.mxu0 %v1450
    %2127 = vmatprep.subr.mxu0 0.0
    %2128 = vmatpush2.msra.mxu0 %v1445
    %2129 = vmatprep.subr.mxu0 0.0
    %2130 = vmatpush2.msra.mxu0 %v1440
    %2131 = vmatprep.mubr.f32.mxu0 %v1194
    %2132 = vmatmul.mubr.f32.gmra.mxu0 %v1193
    %v2133 = vpop.f32.mrf.mxu0
    %v2134 = vadd.f32 %v2064, %v2133
    %v2135 = vpop.f32.mrf.mxu0
    %2136 = vdwg.mxu0
    %2137 = vmatprep.subr.mxu0 0.0
    %2138 = vmatpush1.msra.mxu0 0.0
    %2139 = vmatprep.subr.mxu0 0.0
    %2140 = vmatpush1.msra.mxu0 0.0
    %2141 = vmatprep.subr.mxu0 0.0
    %2142 = vmatpush1.msra.mxu0 0.0
    %2143 = vmatprep.subr.mxu0 0.0
    %2144 = vmatpush1.msra.mxu0 0.0
    %2145 = vmatprep.subr.mxu0 0.0
    %2146 = vmatpush1.msra.mxu0 0.0
    %2147 = vmatprep.subr.mxu0 0.0
    %2148 = vmatpush1.msra.mxu0 0.0
    %2149 = vmatprep.subr.mxu0 0.0
    %2150 = vmatpush1.msra.mxu0 0.0
    %2151 = vmatprep.subr.mxu0 0.0
    %2152 = vmatpush1.msra.mxu0 0.0
    %2153 = vmatprep.subr.mxu0 0.0
    %2154 = vmatpush1.msra.mxu0 0.0
    %2155 = vmatprep.subr.mxu0 0.0
    %2156 = vmatpush1.msra.mxu0 0.0
    %2157 = vmatprep.subr.mxu0 0.0
    %2158 = vmatpush1.msra.mxu0 0.0
    %2159 = vmatprep.subr.mxu0 0.0
    %2160 = vmatpush1.msra.mxu0 0.0
    %2161 = vmatprep.subr.mxu0 0.0
    %2162 = vmatpush1.msra.mxu0 0.0
    %2163 = vmatprep.subr.mxu0 0.0
    %2164 = vmatpush1.msra.mxu0 0.0
    %2165 = vmatprep.subr.mxu0 0.0
    %2166 = vmatpush1.msra.mxu0 0.0
    %2167 = vmatprep.subr.mxu0 0.0
    %2168 = vmatpush1.msra.mxu0 %v1569
    %2169 = vmatprep.subr.mxu0 0.0
    %2170 = vmatpush2.msra.mxu0 0.0
    %2171 = vmatprep.subr.mxu0 0.0
    %2172 = vmatpush2.msra.mxu0 0.0
    %2173 = vmatprep.subr.mxu0 0.0
    %2174 = vmatpush2.msra.mxu0 0.0
    %2175 = vmatprep.subr.mxu0 0.0
    %2176 = vmatpush2.msra.mxu0 0.0
    %2177 = vmatprep.subr.mxu0 0.0
    %2178 = vmatpush2.msra.mxu0 0.0
    %2179 = vmatprep.subr.mxu0 0.0
    %2180 = vmatpush2.msra.mxu0 0.0
    %2181 = vmatprep.subr.mxu0 0.0
    %2182 = vmatpush2.msra.mxu0 0.0
    %2183 = vmatprep.subr.mxu0 0.0
    %2184 = vmatpush2.msra.mxu0 0.0
    %2185 = vmatprep.subr.mxu0 0.0
    %2186 = vmatpush2.msra.mxu0 0.0
    %2187 = vmatprep.subr.mxu0 0.0
    %2188 = vmatpush2.msra.mxu0 0.0
    %2189 = vmatprep.subr.mxu0 0.0
    %2190 = vmatpush2.msra.mxu0 0.0
    %2191 = vmatprep.subr.mxu0 0.0
    %2192 = vmatpush2.msra.mxu0 0.0
    %2193 = vmatprep.subr.mxu0 0.0
    %2194 = vmatpush2.msra.mxu0 0.0
    %2195 = vmatprep.subr.mxu0 0.0
    %2196 = vmatpush2.msra.mxu0 0.0
    %2197 = vmatprep.subr.mxu0 0.0
    %2198 = vmatpush2.msra.mxu0 0.0
    %2199 = vmatprep.subr.mxu0 0.0
    %2200 = vmatpush2.msra.mxu0 0.0
    %2201 = vmatprep.mubr.f32.mxu0 0.0
    %2202 = vmatmul.mubr.f32.gmra.mxu0 %v1553
    %v2203 = vpop.f32.mrf.mxu0
    %v2204 = vadd.f32 %v2134, %v2203
    %v2205 = vpop.f32.mrf.mxu0
    %2206 = vdwg.mxu0
    %v2207 = vmax.f32 %v1780, 1e-06
    %v2208 = vmax.f32 %v1782, 1e-06
    %v2209 = vmax.f32 %v1993, 1e-06
    %v2210 = vmax.f32 %v1995, 1e-06
    %v2211 = vmax.f32 %v2204, 1e-06
    %v2212 = vrsqrt.pop %v2207
    %v2213 = vrsqrt.pop %v2208
    %v2214 = vrsqrt.pop %v2209
    %v2215 = vrsqrt.pop %v2210
    %v2216 = vrsqrt.pop %v2211
    %v2217 = vmul.f32 %v1046, %v2212
    %v2218 = vmul.f32 %v1048, %v2213
    %v2219 = vmul.f32 %v1117, %v2214
    %v2220 = vmul.f32 %v1119, %v2215
    %v2221 = vmul.f32 %v1188, %v2216
    %v2222 = vld [vmem:[%s17] sm:$0xff]
    %v2223 = vld [vmem:[%s17 + $0x8] sm:$0xff]
    %v2224 = vld [vmem:[%s17 + $0x10] sm:$0xff]
    %v2225 = vld [vmem:[%s17 + $0x18] sm:$0xff]
    %v2226 = vld [vmem:[%s17 + $0x20] sm:$0xff]
    %v2227 = vld [vmem:[%s17 + $0x28] sm:$0xff]
    %v2228 = vld [vmem:[%s17 + $0x30] sm:$0xff]
    %v2229 = vld [vmem:[%s17 + $0x38] sm:$0xff]
    %v2230 = vld [vmem:[%s17 + $0x40] sm:$0xff]
    %v2231 = vld [vmem:[%s17 + $0x48] sm:$0xff]
    %v2232 = vld [vmem:[%s17 + $0x50] sm:$0xff]
    %v2233 = vld [vmem:[%s17 + $0x58] sm:$0xff]
    %v2234 = vld [vmem:[%s17 + $0x60] sm:$0xff]
    %v2235 = vld [vmem:[%s17 + $0x68] sm:$0xff]
    %v2236 = vld [vmem:[%s17 + $0x70] sm:$0xff]
    %v2237 = vld [vmem:[%s17 + $0x78] sm:$0xff]
    %v2238 = vld [vmem:[%s17 + $0x80] sm:$0xff]
    %v2239 = vld [vmem:[%s17 + $0x88] sm:$0xff]
    %v2240 = vld [vmem:[%s17 + $0x90] sm:$0xff]
    %v2241 = vld [vmem:[%s17 + $0x98] sm:$0xff]
    %v2242 = vld [vmem:[%s17 + $0xa0] sm:$0xff]
    %v2243 = vld [vmem:[%s17 + $0xa8] sm:$0xff]
    %v2244 = vld [vmem:[%s17 + $0xb0] sm:$0xff]
    %v2245 = vld [vmem:[%s17 + $0xb8] sm:$0xff]
    %v2246 = vld [vmem:[%s17 + $0xc0] sm:$0xff]
    %v2247 = vld [vmem:[%s17 + $0xc8] sm:$0xff]
    %v2248 = vld [vmem:[%s17 + $0xd0] sm:$0xff]
    %v2249 = vld [vmem:[%s17 + $0xd8] sm:$0xff]
    %v2250 = vld [vmem:[%s17 + $0xe0] sm:$0xff]
    %v2251 = vld [vmem:[%s17 + $0xe8] sm:$0xff]
    %v2252 = vld [vmem:[%s17 + $0xf0] sm:$0xff]
    %v2253 = vld [vmem:[%s17 + $0xf8] sm:$0xff]
    %v2254 = vld [vmem:[%s17 + $0x100] sm:$0xff]
    %v2255 = vld [vmem:[%s17 + $0x108] sm:$0xff]
    %v2256 = vld [vmem:[%s17 + $0x110] sm:$0xff]
    %v2257 = vld [vmem:[%s17 + $0x118] sm:$0xff]
    %v2258 = vld [vmem:[%s17 + $0x120] sm:$0xff]
    %v2259 = vld [vmem:[%s17 + $0x128] sm:$0xff]
    %v2260 = vld [vmem:[%s17 + $0x130] sm:$0xff]
    %v2261 = vld [vmem:[%s17 + $0x138] sm:$0xff]
    %v2262 = vld [vmem:[%s17 + $0x140] sm:$0xff]
    %v2263 = vld [vmem:[%s17 + $0x148] sm:$0xff]
    %v2264 = vld [vmem:[%s17 + $0x150] sm:$0xff]
    %v2265 = vld [vmem:[%s17 + $0x158] sm:$0xff]
    %v2266 = vld [vmem:[%s17 + $0x160] sm:$0xff]
    %v2267 = vld [vmem:[%s17 + $0x168] sm:$0xff]
    %v2268 = vld [vmem:[%s17 + $0x170] sm:$0xff]
    %v2269 = vld [vmem:[%s17 + $0x178] sm:$0xff]
    %v2270 = vld [vmem:[%s17 + $0x180] sm:$0xff]
    %v2271 = vld [vmem:[%s17 + $0x188] sm:$0xff]
    %v2272 = vld [vmem:[%s17 + $0x190] sm:$0xff]
    %v2273 = vld [vmem:[%s17 + $0x198] sm:$0xff]
    %v2274 = vld [vmem:[%s17 + $0x1a0] sm:$0xff]
    %v2275 = vld [vmem:[%s17 + $0x1a8] sm:$0xff]
    %v2276 = vld [vmem:[%s17 + $0x1b0] sm:$0xff]
    %v2277 = vld [vmem:[%s17 + $0x1b8] sm:$0xff]
    %v2278 = vld [vmem:[%s17 + $0x1c0] sm:$0xff]
    %v2279 = vld [vmem:[%s17 + $0x1c8] sm:$0xff]
    %v2280 = vld [vmem:[%s17 + $0x1d0] sm:$0xff]
    %v2281 = vld [vmem:[%s17 + $0x1d8] sm:$0xff]
    %v2282 = vld [vmem:[%s17 + $0x1e0] sm:$0xff]
    %v2283 = vld [vmem:[%s17 + $0x1e8] sm:$0xff]
    %v2284 = vld [vmem:[%s17 + $0x1f0] sm:$0xff]
    %v2285 = vld [vmem:[%s17 + $0x1f8] sm:$0xff]
    %v2286 = vld [vmem:[%s17 + $0x200] sm:$0xff]
    %v2287 = vld [vmem:[%s17 + $0x208] sm:$0xff]
    %v2288 = vld [vmem:[%s17 + $0x210] sm:$0xff]
    %v2289 = vld [vmem:[%s17 + $0x218] sm:$0xff]
    %v2290 = vld [vmem:[%s17 + $0x220] sm:$0xff]
    %v2291 = vld [vmem:[%s17 + $0x228] sm:$0xff]
    %v2292 = vld [vmem:[%s17 + $0x230] sm:$0xff]
    %v2293 = vld [vmem:[%s17 + $0x238] sm:$0xff]
    %v2294 = vld [vmem:[%s17 + $0x240] sm:$0xff]
    %v2295 = vld [vmem:[%s17 + $0x248] sm:$0xff]
    %v2296 = vld [vmem:[%s17 + $0x250] sm:$0xff]
    %v2297 = vld [vmem:[%s17 + $0x258] sm:$0xff]
    %v2298 = vld [vmem:[%s17 + $0x260] sm:$0xff]
    %v2299 = vld [vmem:[%s17 + $0x268] sm:$0xff]
    %v2300 = vld [vmem:[%s17 + $0x270] sm:$0xff]
    %v2301 = vld [vmem:[%s17 + $0x278] sm:$0xff]
    %v2302 = vld [vmem:[%s17 + $0x280] sm:$0xff]
    %v2303 = vld [vmem:[%s17 + $0x288] sm:$0xff]
    %v2304 = vld [vmem:[%s17 + $0x290] sm:$0xff]
    %v2305 = vld [vmem:[%s17 + $0x298] sm:$0xff]
    %v2306 = vld [vmem:[%s17 + $0x2a0] sm:$0xff]
    %v2307 = vld [vmem:[%s17 + $0x2a8] sm:$0xff]
    %v2308 = vld [vmem:[%s17 + $0x2b0] sm:$0xff]
    %v2309 = vld [vmem:[%s17 + $0x2b8] sm:$0xff]
    %v2310 = vld [vmem:[%s17 + $0x2c0] sm:$0xff]
    %v2311 = vld [vmem:[%s17 + $0x2c8] sm:$0xff]
    %v2312 = vld [vmem:[%s17 + $0x2d0] sm:$0xff]
    %v2313 = vld [vmem:[%s17 + $0x2d8] sm:$0xff]
    %v2314 = vld [vmem:[%s17 + $0x2e0] sm:$0xff]
    %v2315 = vld [vmem:[%s17 + $0x2e8] sm:$0xff]
    %v2316 = vld [vmem:[%s17 + $0x2f0] sm:$0xff]
    %v2317 = vld [vmem:[%s17 + $0x2f8] sm:$0xff]
    %v2318 = vld [vmem:[%s17 + $0x300] sm:$0xff]
    %v2319 = vld [vmem:[%s17 + $0x308] sm:$0xff]
    %v2320 = vld [vmem:[%s17 + $0x310] sm:$0xff]
    %v2321 = vld [vmem:[%s17 + $0x318] sm:$0xff]
    %v2322 = vld [vmem:[%s17 + $0x320] sm:$0xff]
    %v2323 = vld [vmem:[%s17 + $0x328] sm:$0xff]
    %v2324 = vld [vmem:[%s17 + $0x330] sm:$0xff]
    %v2325 = vld [vmem:[%s17 + $0x338] sm:$0xff]
    %v2326 = vld [vmem:[%s17 + $0x340] sm:$0xff]
    %v2327 = vld [vmem:[%s17 + $0x348] sm:$0xff]
    %v2328 = vld [vmem:[%s17 + $0x350] sm:$0xff]
    %v2329 = vld [vmem:[%s17 + $0x358] sm:$0xff]
    %v2330 = vld [vmem:[%s17 + $0x360] sm:$0xff]
    %v2331 = vld [vmem:[%s17 + $0x368] sm:$0xff]
    %v2332 = vld [vmem:[%s17 + $0x370] sm:$0xff]
    %v2333 = vld [vmem:[%s17 + $0x378] sm:$0xff]
    %v2334 = vld [vmem:[%s17 + $0x380] sm:$0xff]
    %v2335 = vld [vmem:[%s17 + $0x388] sm:$0xff]
    %v2336 = vld [vmem:[%s17 + $0x390] sm:$0xff]
    %v2337 = vld [vmem:[%s17 + $0x398] sm:$0xff]
    %v2338 = vld [vmem:[%s17 + $0x3a0] sm:$0xff]
    %v2339 = vld [vmem:[%s17 + $0x3a8] sm:$0xff]
    %v2340 = vld [vmem:[%s17 + $0x3b0] sm:$0xff]
    %v2341 = vld [vmem:[%s17 + $0x3b8] sm:$0xff]
    %v2342 = vld [vmem:[%s17 + $0x3c0] sm:$0xff]
    %v2343 = vld [vmem:[%s17 + $0x3c8] sm:$0xff]
    %v2344 = vld [vmem:[%s17 + $0x3d0] sm:$0xff]
    %v2345 = vld [vmem:[%s17 + $0x3d8] sm:$0xff]
    %v2346 = vld [vmem:[%s17 + $0x3e0] sm:$0xff]
    %v2347 = vld [vmem:[%s17 + $0x3e8] sm:$0xff]
    %v2348 = vld [vmem:[%s17 + $0x3f0] sm:$0xff]
    %v2349 = vld [vmem:[%s17 + $0x3f8] sm:$0xff]
    %v2350 = vld [vmem:[%s17 + $0x400] sm:$0xf]
    %v2351 = vld [vmem:[%s17 + $0x408] sm:$0xf]
    %s2352 = scalar_lea.vmem [#allocation8], 2
    %v2353 = vld [vmem:[%s2352] ss:$8 sm:$0x3]
    %v2355 = vlaneseq
    %v2356 = vshrl.u32 %v2355, 7
    %v2357 = vsub.s32 0, %v2356
    %v2358 = vrot.slane %v2353, %v2357
    %v2359 = vlaneseq
    %v2360 = vshrl.u32 %v2359, 7
    %v2361 = vsub.s32 1, %v2360
    %v2362 = vrot.slane %v2353, %v2361
    %v2366 = vsel %vm1551, %v2221, 0
    %v2369 = vsel %vm1555, %v2350, 0
    %v2372 = vsel %vm1555, %v2351, 0
    %2374 = vmatprep.subr.mxu0 %v2253
    %2375 = vmatpush1.msra.mxu0 %v2252
    %2376 = vmatprep.subr.mxu0 %v2251
    %2377 = vmatpush1.msra.mxu0 %v2250
    %2378 = vmatprep.subr.mxu0 %v2249
    %2379 = vmatpush1.msra.mxu0 %v2248
    %2380 = vmatprep.subr.mxu0 %v2247
    %2381 = vmatpush1.msra.mxu0 %v2246
    %2382 = vmatprep.subr.mxu0 %v2245
    %2383 = vmatpush1.msra.mxu0 %v2244
    %2384 = vmatprep.subr.mxu0 %v2243
    %2385 = vmatpush1.msra.mxu0 %v2242
    %2386 = vmatprep.subr.mxu0 %v2241
    %2387 = vmatpush1.msra.mxu0 %v2240
    %2388 = vmatprep.subr.mxu0 %v2239
    %2389 = vmatpush1.msra.mxu0 %v2238
    %2390 = vmatprep.subr.mxu0 %v2237
    %2391 = vmatpush1.msra.mxu0 %v2236
    %2392 = vmatprep.subr.mxu0 %v2235
    %2393 = vmatpush1.msra.mxu0 %v2234
    %2394 = vmatprep.subr.mxu0 %v2233
    %2395 = vmatpush1.msra.mxu0 %v2232
    %2396 = vmatprep.subr.mxu0 %v2231
    %2397 = vmatpush1.msra.mxu0 %v2230
    %2398 = vmatprep.subr.mxu0 %v2229
    %2399 = vmatpush1.msra.mxu0 %v2228
    %2400 = vmatprep.subr.mxu0 %v2227
    %2401 = vmatpush1.msra.mxu0 %v2226
    %2402 = vmatprep.subr.mxu0 %v2225
    %2403 = vmatpush1.msra.mxu0 %v2224
    %2404 = vmatprep.subr.mxu0 %v2223
    %2405 = vmatpush1.msra.mxu0 %v2222
    %2406 = vmatprep.subr.mxu0 %v2285
    %2407 = vmatpush2.msra.mxu0 %v2284
    %2408 = vmatprep.subr.mxu0 %v2283
    %2409 = vmatpush2.msra.mxu0 %v2282
    %2410 = vmatprep.subr.mxu0 %v2281
    %2411 = vmatpush2.msra.mxu0 %v2280
    %2412 = vmatprep.subr.mxu0 %v2279
    %2413 = vmatpush2.msra.mxu0 %v2278
    %2414 = vmatprep.subr.mxu0 %v2277
    %2415 = vmatpush2.msra.mxu0 %v2276
    %2416 = vmatprep.subr.mxu0 %v2275
    %2417 = vmatpush2.msra.mxu0 %v2274
    %2418 = vmatprep.subr.mxu0 %v2273
    %2419 = vmatpush2.msra.mxu0 %v2272
    %2420 = vmatprep.subr.mxu0 %v2271
    %2421 = vmatpush2.msra.mxu0 %v2270
    %2422 = vmatprep.subr.mxu0 %v2269
    %2423 = vmatpush2.msra.mxu0 %v2268
    %2424 = vmatprep.subr.mxu0 %v2267
    %2425 = vmatpush2.msra.mxu0 %v2266
    %2426 = vmatprep.subr.mxu0 %v2265
    %2427 = vmatpush2.msra.mxu0 %v2264
    %2428 = vmatprep.subr.mxu0 %v2263
    %2429 = vmatpush2.msra.mxu0 %v2262
    %2430 = vmatprep.subr.mxu0 %v2261
    %2431 = vmatpush2.msra.mxu0 %v2260
    %2432 = vmatprep.subr.mxu0 %v2259
    %2433 = vmatpush2.msra.mxu0 %v2258
    %2434 = vmatprep.subr.mxu0 %v2257
    %2435 = vmatpush2.msra.mxu0 %v2256
    %2436 = vmatprep.subr.mxu0 %v2255
    %2437 = vmatpush2.msra.mxu0 %v2254
    %2438 = vmatprep.mubr.f32.mxu0 %v2218
    %2439 = vmatmul.mubr.f32.gmra.mxu0 %v2217
    %v2440 = vpop.f32.mrf.mxu0
    %v2441 = vadd.f32 %v2358, %v2440
    %v2442 = vpop.f32.mrf.mxu0
    %v2443 = vadd.f32 %v2362, %v2442
    %2444 = vdwg.mxu0
    %2445 = vmatprep.subr.mxu0 %v2317
    %2446 = vmatpush1.msra.mxu0 %v2316
    %2447 = vmatprep.subr.mxu0 %v2315
    %2448 = vmatpush1.msra.mxu0 %v2314
    %2449 = vmatprep.subr.mxu0 %v2313
    %2450 = vmatpush1.msra.mxu0 %v2312
    %2451 = vmatprep.subr.mxu0 %v2311
    %2452 = vmatpush1.msra.mxu0 %v2310
    %2453 = vmatprep.subr.mxu0 %v2309
    %2454 = vmatpush1.msra.mxu0 %v2308
    %2455 = vmatprep.subr.mxu0 %v2307
    %2456 = vmatpush1.msra.mxu0 %v2306
    %2457 = vmatprep.subr.mxu0 %v2305
    %2458 = vmatpush1.msra.mxu0 %v2304
    %2459 = vmatprep.subr.mxu0 %v2303
    %2460 = vmatpush1.msra.mxu0 %v2302
    %2461 = vmatprep.subr.mxu0 %v2301
    %2462 = vmatpush1.msra.mxu0 %v2300
    %2463 = vmatprep.subr.mxu0 %v2299
    %2464 = vmatpush1.msra.mxu0 %v2298
    %2465 = vmatprep.subr.mxu0 %v2297
    %2466 = vmatpush1.msra.mxu0 %v2296
    %2467 = vmatprep.subr.mxu0 %v2295
    %2468 = vmatpush1.msra.mxu0 %v2294
    %2469 = vmatprep.subr.mxu0 %v2293
    %2470 = vmatpush1.msra.mxu0 %v2292
    %2471 = vmatprep.subr.mxu0 %v2291
    %2472 = vmatpush1.msra.mxu0 %v2290
    %2473 = vmatprep.subr.mxu0 %v2289
    %2474 = vmatpush1.msra.mxu0 %v2288
    %2475 = vmatprep.subr.mxu0 %v2287
    %2476 = vmatpush1.msra.mxu0 %v2286
    %2477 = vmatprep.subr.mxu0 %v2349
    %2478 = vmatpush2.msra.mxu0 %v2348
    %2479 = vmatprep.subr.mxu0 %v2347
    %2480 = vmatpush2.msra.mxu0 %v2346
    %2481 = vmatprep.subr.mxu0 %v2345
    %2482 = vmatpush2.msra.mxu0 %v2344
    %2483 = vmatprep.subr.mxu0 %v2343
    %2484 = vmatpush2.msra.mxu0 %v2342
    %2485 = vmatprep.subr.mxu0 %v2341
    %2486 = vmatpush2.msra.mxu0 %v2340
    %2487 = vmatprep.subr.mxu0 %v2339
    %2488 = vmatpush2.msra.mxu0 %v2338
    %2489 = vmatprep.subr.mxu0 %v2337
    %2490 = vmatpush2.msra.mxu0 %v2336
    %2491 = vmatprep.subr.mxu0 %v2335
    %2492 = vmatpush2.msra.mxu0 %v2334
    %2493 = vmatprep.subr.mxu0 %v2333
    %2494 = vmatpush2.msra.mxu0 %v2332
    %2495 = vmatprep.subr.mxu0 %v2331
    %2496 = vmatpush2.msra.mxu0 %v2330
    %2497 = vmatprep.subr.mxu0 %v2329
    %2498 = vmatpush2.msra.mxu0 %v2328
    %2499 = vmatprep.subr.mxu0 %v2327
    %2500 = vmatpush2.msra.mxu0 %v2326
    %2501 = vmatprep.subr.mxu0 %v2325
    %2502 = vmatpush2.msra.mxu0 %v2324
    %2503 = vmatprep.subr.mxu0 %v2323
    %2504 = vmatpush2.msra.mxu0 %v2322
    %2505 = vmatprep.subr.mxu0 %v2321
    %2506 = vmatpush2.msra.mxu0 %v2320
    %2507 = vmatprep.subr.mxu0 %v2319
    %2508 = vmatpush2.msra.mxu0 %v2318
    %2509 = vmatprep.mubr.f32.mxu0 %v2220
    %2510 = vmatmul.mubr.f32.gmra.mxu0 %v2219
    %v2511 = vpop.f32.mrf.mxu0
    %v2512 = vadd.f32 %v2441, %v2511
    %v2513 = vpop.f32.mrf.mxu0
    %v2514 = vadd.f32 %v2443, %v2513
    %2515 = vdwg.mxu0
    %2516 = vmatprep.subr.mxu0 0.0
    %2517 = vmatpush1.msra.mxu0 0.0
    %2518 = vmatprep.subr.mxu0 0.0
    %2519 = vmatpush1.msra.mxu0 0.0
    %2520 = vmatprep.subr.mxu0 0.0
    %2521 = vmatpush1.msra.mxu0 0.0
    %2522 = vmatprep.subr.mxu0 0.0
    %2523 = vmatpush1.msra.mxu0 0.0
    %2524 = vmatprep.subr.mxu0 0.0
    %2525 = vmatpush1.msra.mxu0 0.0
    %2526 = vmatprep.subr.mxu0 0.0
    %2527 = vmatpush1.msra.mxu0 0.0
    %2528 = vmatprep.subr.mxu0 0.0
    %2529 = vmatpush1.msra.mxu0 0.0
    %2530 = vmatprep.subr.mxu0 0.0
    %2531 = vmatpush1.msra.mxu0 0.0
    %2532 = vmatprep.subr.mxu0 0.0
    %2533 = vmatpush1.msra.mxu0 0.0
    %2534 = vmatprep.subr.mxu0 0.0
    %2535 = vmatpush1.msra.mxu0 0.0
    %2536 = vmatprep.subr.mxu0 0.0
    %2537 = vmatpush1.msra.mxu0 0.0
    %2538 = vmatprep.subr.mxu0 0.0
    %2539 = vmatpush1.msra.mxu0 0.0
    %2540 = vmatprep.subr.mxu0 0.0
    %2541 = vmatpush1.msra.mxu0 0.0
    %2542 = vmatprep.subr.mxu0 0.0
    %2543 = vmatpush1.msra.mxu0 0.0
    %2544 = vmatprep.subr.mxu0 0.0
    %2545 = vmatpush1.msra.mxu0 0.0
    %2546 = vmatprep.subr.mxu0 %v2372
    %2547 = vmatpush1.msra.mxu0 %v2369
    %2548 = vmatprep.subr.mxu0 0.0
    %2549 = vmatpush2.msra.mxu0 0.0
    %2550 = vmatprep.subr.mxu0 0.0
    %2551 = vmatpush2.msra.mxu0 0.0
    %2552 = vmatprep.subr.mxu0 0.0
    %2553 = vmatpush2.msra.mxu0 0.0
    %2554 = vmatprep.subr.mxu0 0.0
    %2555 = vmatpush2.msra.mxu0 0.0
    %2556 = vmatprep.subr.mxu0 0.0
    %2557 = vmatpush2.msra.mxu0 0.0
    %2558 = vmatprep.subr.mxu0 0.0
    %2559 = vmatpush2.msra.mxu0 0.0
    %2560 = vmatprep.subr.mxu0 0.0
    %2561 = vmatpush2.msra.mxu0 0.0
    %2562 = vmatprep.subr.mxu0 0.0
    %2563 = vmatpush2.msra.mxu0 0.0
    %2564 = vmatprep.subr.mxu0 0.0
    %2565 = vmatpush2.msra.mxu0 0.0
    %2566 = vmatprep.subr.mxu0 0.0
    %2567 = vmatpush2.msra.mxu0 0.0
    %2568 = vmatprep.subr.mxu0 0.0
    %2569 = vmatpush2.msra.mxu0 0.0
    %2570 = vmatprep.subr.mxu0 0.0
    %2571 = vmatpush2.msra.mxu0 0.0
    %2572 = vmatprep.subr.mxu0 0.0
    %2573 = vmatpush2.msra.mxu0 0.0
    %2574 = vmatprep.subr.mxu0 0.0
    %2575 = vmatpush2.msra.mxu0 0.0
    %2576 = vmatprep.subr.mxu0 0.0
    %2577 = vmatpush2.msra.mxu0 0.0
    %2578 = vmatprep.subr.mxu0 0.0
    %2579 = vmatpush2.msra.mxu0 0.0
    %2580 = vmatprep.mubr.f32.mxu0 0.0
    %2581 = vmatmul.mubr.f32.gmra.mxu0 %v2366
    %v2582 = vpop.f32.mrf.mxu0
    %v2583 = vadd.f32 %v2512, %v2582
    %v2584 = vpop.f32.mrf.mxu0
    %v2585 = vadd.f32 %v2514, %v2584
    %2586 = vdwg.mxu0
    %v2587 = vmul.f32 %v2583, %v2583
    %v2588 = vmul.f32 %v2585, %v2585
    %v2589 = vld [vmem:[#allocation10] sm:$0xff]
    %v2590 = vld [vmem:[#allocation10 + $0x8] sm:$0xff]
    %v2591 = vld [vmem:[#allocation10 + $0x10] sm:$0xff]
    %v2592 = vld [vmem:[#allocation10 + $0x18] sm:$0xff]
    %v2593 = vld [vmem:[#allocation10 + $0x20] sm:$0xff]
    %v2594 = vld [vmem:[#allocation10 + $0x28] sm:$0xff]
    %v2595 = vld [vmem:[#allocation10 + $0x30] sm:$0xff]
    %v2596 = vld [vmem:[#allocation10 + $0x38] sm:$0xff]
    %v2597 = vld [vmem:[#allocation10 + $0x40] sm:$0xff]
    %v2598 = vld [vmem:[#allocation10 + $0x48] sm:$0xff]
    %v2599 = vld [vmem:[#allocation10 + $0x50] sm:$0xff]
    %v2600 = vld [vmem:[#allocation10 + $0x58] sm:$0xff]
    %v2601 = vld [vmem:[#allocation10 + $0x60] sm:$0xff]
    %v2602 = vld [vmem:[#allocation10 + $0x68] sm:$0xff]
    %v2603 = vld [vmem:[#allocation10 + $0x70] sm:$0xff]
    %v2604 = vld [vmem:[#allocation10 + $0x78] sm:$0xff]
    %v2605 = vld [vmem:[#allocation10 + $0x80] sm:$0xff]
    %v2606 = vld [vmem:[#allocation10 + $0x88] sm:$0xff]
    %v2607 = vld [vmem:[#allocation10 + $0x90] sm:$0xff]
    %v2608 = vld [vmem:[#allocation10 + $0x98] sm:$0xff]
    %v2609 = vld [vmem:[#allocation10 + $0xa0] sm:$0xff]
    %v2610 = vld [vmem:[#allocation10 + $0xa8] sm:$0xff]
    %v2611 = vld [vmem:[#allocation10 + $0xb0] sm:$0xff]
    %v2612 = vld [vmem:[#allocation10 + $0xb8] sm:$0xff]
    %v2613 = vld [vmem:[#allocation10 + $0xc0] sm:$0xff]
    %v2614 = vld [vmem:[#allocation10 + $0xc8] sm:$0xff]
    %v2615 = vld [vmem:[#allocation10 + $0xd0] sm:$0xff]
    %v2616 = vld [vmem:[#allocation10 + $0xd8] sm:$0xff]
    %v2617 = vld [vmem:[#allocation10 + $0xe0] sm:$0xff]
    %v2618 = vld [vmem:[#allocation10 + $0xe8] sm:$0xff]
    %v2619 = vld [vmem:[#allocation10 + $0xf0] sm:$0xff]
    %v2620 = vld [vmem:[#allocation10 + $0xf8] sm:$0xff]
    %v2621 = vld [vmem:[#allocation10 + $0x100] sm:$0xff]
    %v2622 = vld [vmem:[#allocation10 + $0x108] sm:$0xff]
    %v2623 = vld [vmem:[#allocation10 + $0x110] sm:$0xff]
    %v2624 = vld [vmem:[#allocation10 + $0x118] sm:$0xff]
    %v2625 = vld [vmem:[#allocation10 + $0x120] sm:$0xff]
    %v2626 = vld [vmem:[#allocation10 + $0x128] sm:$0xff]
    %v2627 = vld [vmem:[#allocation10 + $0x130] sm:$0xff]
    %v2628 = vld [vmem:[#allocation10 + $0x138] sm:$0xff]
    %v2629 = vld [vmem:[#allocation10 + $0x140] sm:$0xff]
    %v2630 = vld [vmem:[#allocation10 + $0x148] sm:$0xff]
    %v2631 = vld [vmem:[#allocation10 + $0x150] sm:$0xff]
    %v2632 = vld [vmem:[#allocation10 + $0x158] sm:$0xff]
    %v2633 = vld [vmem:[#allocation10 + $0x160] sm:$0xff]
    %v2634 = vld [vmem:[#allocation10 + $0x168] sm:$0xff]
    %v2635 = vld [vmem:[#allocation10 + $0x170] sm:$0xff]
    %v2636 = vld [vmem:[#allocation10 + $0x178] sm:$0xff]
    %v2637 = vld [vmem:[#allocation10 + $0x180] sm:$0xff]
    %v2638 = vld [vmem:[#allocation10 + $0x188] sm:$0xff]
    %v2639 = vld [vmem:[#allocation10 + $0x190] sm:$0xff]
    %v2640 = vld [vmem:[#allocation10 + $0x198] sm:$0xff]
    %v2641 = vld [vmem:[#allocation10 + $0x1a0] sm:$0xff]
    %v2642 = vld [vmem:[#allocation10 + $0x1a8] sm:$0xff]
    %v2643 = vld [vmem:[#allocation10 + $0x1b0] sm:$0xff]
    %v2644 = vld [vmem:[#allocation10 + $0x1b8] sm:$0xff]
    %v2645 = vld [vmem:[#allocation10 + $0x1c0] sm:$0xff]
    %v2646 = vld [vmem:[#allocation10 + $0x1c8] sm:$0xff]
    %v2647 = vld [vmem:[#allocation10 + $0x1d0] sm:$0xff]
    %v2648 = vld [vmem:[#allocation10 + $0x1d8] sm:$0xff]
    %v2649 = vld [vmem:[#allocation10 + $0x1e0] sm:$0xff]
    %v2650 = vld [vmem:[#allocation10 + $0x1e8] sm:$0xff]
    %v2651 = vld [vmem:[#allocation10 + $0x1f0] sm:$0xff]
    %v2652 = vld [vmem:[#allocation10 + $0x1f8] sm:$0xff]
    %s2653 = scalar_lea.vmem [#allocation8], 3
    %v2654 = vld [vmem:[%s2653] ss:$8 sm:$0x3]
    %v2656 = vlaneseq
    %v2657 = vshrl.u32 %v2656, 7
    %v2658 = vsub.s32 0, %v2657
    %v2659 = vrot.slane %v2654, %v2658
    %v2660 = vlaneseq
    %v2661 = vshrl.u32 %v2660, 7
    %v2662 = vsub.s32 1, %v2661
    %v2663 = vrot.slane %v2654, %v2662
    %2666 = vmatprep.subr.mxu0 %v2620
    %2667 = vmatpush1.msra.mxu0 %v2619
    %2668 = vmatprep.subr.mxu0 %v2618
    %2669 = vmatpush1.msra.mxu0 %v2617
    %2670 = vmatprep.subr.mxu0 %v2616
    %2671 = vmatpush1.msra.mxu0 %v2615
    %2672 = vmatprep.subr.mxu0 %v2614
    %2673 = vmatpush1.msra.mxu0 %v2613
    %2674 = vmatprep.subr.mxu0 %v2612
    %2675 = vmatpush1.msra.mxu0 %v2611
    %2676 = vmatprep.subr.mxu0 %v2610
    %2677 = vmatpush1.msra.mxu0 %v2609
    %2678 = vmatprep.subr.mxu0 %v2608
    %2679 = vmatpush1.msra.mxu0 %v2607
    %2680 = vmatprep.subr.mxu0 %v2606
    %2681 = vmatpush1.msra.mxu0 %v2605
    %2682 = vmatprep.subr.mxu0 %v2604
    %2683 = vmatpush1.msra.mxu0 %v2603
    %2684 = vmatprep.subr.mxu0 %v2602
    %2685 = vmatpush1.msra.mxu0 %v2601
    %2686 = vmatprep.subr.mxu0 %v2600
    %2687 = vmatpush1.msra.mxu0 %v2599
    %2688 = vmatprep.subr.mxu0 %v2598
    %2689 = vmatpush1.msra.mxu0 %v2597
    %2690 = vmatprep.subr.mxu0 %v2596
    %2691 = vmatpush1.msra.mxu0 %v2595
    %2692 = vmatprep.subr.mxu0 %v2594
    %2693 = vmatpush1.msra.mxu0 %v2593
    %2694 = vmatprep.subr.mxu0 %v2592
    %2695 = vmatpush1.msra.mxu0 %v2591
    %2696 = vmatprep.subr.mxu0 %v2590
    %2697 = vmatpush1.msra.mxu0 %v2589
    %2698 = vmatprep.subr.mxu0 %v2652
    %2699 = vmatpush2.msra.mxu0 %v2651
    %2700 = vmatprep.subr.mxu0 %v2650
    %2701 = vmatpush2.msra.mxu0 %v2649
    %2702 = vmatprep.subr.mxu0 %v2648
    %2703 = vmatpush2.msra.mxu0 %v2647
    %2704 = vmatprep.subr.mxu0 %v2646
    %2705 = vmatpush2.msra.mxu0 %v2645
    %2706 = vmatprep.subr.mxu0 %v2644
    %2707 = vmatpush2.msra.mxu0 %v2643
    %2708 = vmatprep.subr.mxu0 %v2642
    %2709 = vmatpush2.msra.mxu0 %v2641
    %2710 = vmatprep.subr.mxu0 %v2640
    %2711 = vmatpush2.msra.mxu0 %v2639
    %2712 = vmatprep.subr.mxu0 %v2638
    %2713 = vmatpush2.msra.mxu0 %v2637
    %2714 = vmatprep.subr.mxu0 %v2636
    %2715 = vmatpush2.msra.mxu0 %v2635
    %2716 = vmatprep.subr.mxu0 %v2634
    %2717 = vmatpush2.msra.mxu0 %v2633
    %2718 = vmatprep.subr.mxu0 %v2632
    %2719 = vmatpush2.msra.mxu0 %v2631
    %2720 = vmatprep.subr.mxu0 %v2630
    %2721 = vmatpush2.msra.mxu0 %v2629
    %2722 = vmatprep.subr.mxu0 %v2628
    %2723 = vmatpush2.msra.mxu0 %v2627
    %2724 = vmatprep.subr.mxu0 %v2626
    %2725 = vmatpush2.msra.mxu0 %v2625
    %2726 = vmatprep.subr.mxu0 %v2624
    %2727 = vmatpush2.msra.mxu0 %v2623
    %2728 = vmatprep.subr.mxu0 %v2622
    %2729 = vmatpush2.msra.mxu0 %v2621
    %2730 = vmatprep.mubr.f32.mxu0 %v2588
    %2731 = vmatmul.mubr.f32.gmra.mxu0 %v2587
    %v2732 = vpop.f32.mrf.mxu0
    %v2733 = vadd.f32 %v2659, %v2732
    %v2734 = vpop.f32.mrf.mxu0
    %v2735 = vadd.f32 %v2663, %v2734
    %2736 = vdwg.mxu0
    %v2737 = vmax.f32 %v2733, 1e-06
    %v2738 = vmax.f32 %v2735, 1e-06
    %v2739 = vrsqrt.pop %v2737
    %v2740 = vrsqrt.pop %v2738
    %v2741 = vmul.f32 %v2583, %v2739
    %v2742 = vmul.f32 %v2585, %v2740
    %v2743 = vld [vmem:[#allocation11] sm:$0xff]
    %v2744 = vld [vmem:[#allocation11 + $0x8] sm:$0xff]
    %v2745 = vld [vmem:[#allocation11 + $0x10] sm:$0xff]
    %v2746 = vld [vmem:[#allocation11 + $0x18] sm:$0xff]
    %v2747 = vld [vmem:[#allocation11 + $0x20] sm:$0xff]
    %v2748 = vld [vmem:[#allocation11 + $0x28] sm:$0xff]
    %v2749 = vld [vmem:[#allocation11 + $0x30] sm:$0xff]
    %v2750 = vld [vmem:[#allocation11 + $0x38] sm:$0xff]
    %v2751 = vld [vmem:[#allocation11 + $0x40] sm:$0xff]
    %v2752 = vld [vmem:[#allocation11 + $0x48] sm:$0xff]
    %v2753 = vld [vmem:[#allocation11 + $0x50] sm:$0xff]
    %v2754 = vld [vmem:[#allocation11 + $0x58] sm:$0xff]
    %v2755 = vld [vmem:[#allocation11 + $0x60] sm:$0xff]
    %v2756 = vld [vmem:[#allocation11 + $0x68] sm:$0xff]
    %v2757 = vld [vmem:[#allocation11 + $0x70] sm:$0xff]
    %v2758 = vld [vmem:[#allocation11 + $0x78] sm:$0xff]
    %v2759 = vld [vmem:[#allocation11 + $0x80] sm:$0xff]
    %v2760 = vld [vmem:[#allocation11 + $0x88] sm:$0xff]
    %v2761 = vld [vmem:[#allocation11 + $0x90] sm:$0xff]
    %v2762 = vld [vmem:[#allocation11 + $0x98] sm:$0xff]
    %v2763 = vld [vmem:[#allocation11 + $0xa0] sm:$0xff]
    %v2764 = vld [vmem:[#allocation11 + $0xa8] sm:$0xff]
    %v2765 = vld [vmem:[#allocation11 + $0xb0] sm:$0xff]
    %v2766 = vld [vmem:[#allocation11 + $0xb8] sm:$0xff]
    %v2767 = vld [vmem:[#allocation11 + $0xc0] sm:$0xff]
    %v2768 = vld [vmem:[#allocation11 + $0xc8] sm:$0xff]
    %v2769 = vld [vmem:[#allocation11 + $0xd0] sm:$0xff]
    %v2770 = vld [vmem:[#allocation11 + $0xd8] sm:$0xff]
    %v2771 = vld [vmem:[#allocation11 + $0xe0] sm:$0xff]
    %v2772 = vld [vmem:[#allocation11 + $0xe8] sm:$0xff]
    %v2773 = vld [vmem:[#allocation11 + $0xf0] sm:$0xff]
    %v2774 = vld [vmem:[#allocation11 + $0xf8] sm:$0xff]
    %v2775 = vld [vmem:[#allocation8 + $0x4] ss:$0 sm:$0xff]
    %2776 = vmatprep.subr.mxu0 0.0
    %2777 = vmatpush1.msra.mxu0 %v2758
    %2778 = vmatprep.subr.mxu0 0.0
    %2779 = vmatpush1.msra.mxu0 %v2757
    %2780 = vmatprep.subr.mxu0 0.0
    %2781 = vmatpush1.msra.mxu0 %v2756
    %2782 = vmatprep.subr.mxu0 0.0
    %2783 = vmatpush1.msra.mxu0 %v2755
    %2784 = vmatprep.subr.mxu0 0.0
    %2785 = vmatpush1.msra.mxu0 %v2754
    %2786 = vmatprep.subr.mxu0 0.0
    %2787 = vmatpush1.msra.mxu0 %v2753
    %2788 = vmatprep.subr.mxu0 0.0
    %2789 = vmatpush1.msra.mxu0 %v2752
    %2790 = vmatprep.subr.mxu0 0.0
    %2791 = vmatpush1.msra.mxu0 %v2751
    %2792 = vmatprep.subr.mxu0 0.0
    %2793 = vmatpush1.msra.mxu0 %v2750
    %2794 = vmatprep.subr.mxu0 0.0
    %2795 = vmatpush1.msra.mxu0 %v2749
    %2796 = vmatprep.subr.mxu0 0.0
    %2797 = vmatpush1.msra.mxu0 %v2748
    %2798 = vmatprep.subr.mxu0 0.0
    %2799 = vmatpush1.msra.mxu0 %v2747
    %2800 = vmatprep.subr.mxu0 0.0
    %2801 = vmatpush1.msra.mxu0 %v2746
    %2802 = vmatprep.subr.mxu0 0.0
    %2803 = vmatpush1.msra.mxu0 %v2745
    %2804 = vmatprep.subr.mxu0 0.0
    %2805 = vmatpush1.msra.mxu0 %v2744
    %2806 = vmatprep.subr.mxu0 0.0
    %2807 = vmatpush1.msra.mxu0 %v2743
    %2808 = vmatprep.subr.mxu0 0.0
    %2809 = vmatpush2.msra.mxu0 %v2774
    %2810 = vmatprep.subr.mxu0 0.0
    %2811 = vmatpush2.msra.mxu0 %v2773
    %2812 = vmatprep.subr.mxu0 0.0
    %2813 = vmatpush2.msra.mxu0 %v2772
    %2814 = vmatprep.subr.mxu0 0.0
    %2815 = vmatpush2.msra.mxu0 %v2771
    %2816 = vmatprep.subr.mxu0 0.0
    %2817 = vmatpush2.msra.mxu0 %v2770
    %2818 = vmatprep.subr.mxu0 0.0
    %2819 = vmatpush2.msra.mxu0 %v2769
    %2820 = vmatprep.subr.mxu0 0.0
    %2821 = vmatpush2.msra.mxu0 %v2768
    %2822 = vmatprep.subr.mxu0 0.0
    %2823 = vmatpush2.msra.mxu0 %v2767
    %2824 = vmatprep.subr.mxu0 0.0
    %2825 = vmatpush2.msra.mxu0 %v2766
    %2826 = vmatprep.subr.mxu0 0.0
    %2827 = vmatpush2.msra.mxu0 %v2765
    %2828 = vmatprep.subr.mxu0 0.0
    %2829 = vmatpush2.msra.mxu0 %v2764
    %2830 = vmatprep.subr.mxu0 0.0
    %2831 = vmatpush2.msra.mxu0 %v2763
    %2832 = vmatprep.subr.mxu0 0.0
    %2833 = vmatpush2.msra.mxu0 %v2762
    %2834 = vmatprep.subr.mxu0 0.0
    %2835 = vmatpush2.msra.mxu0 %v2761
    %2836 = vmatprep.subr.mxu0 0.0
    %2837 = vmatpush2.msra.mxu0 %v2760
    %2838 = vmatprep.subr.mxu0 0.0
    %2839 = vmatpush2.msra.mxu0 %v2759
    %2840 = vmatprep.mubr.f32.mxu0 %v2742
    %2841 = vmatmul.mubr.f32.gmra.mxu0 %v2741
    %v2842 = vpop.f32.mrf.mxu0
    %v2843 = vadd.f32 %v2775, %v2842
    %v2844 = vpop.f32.mrf.mxu0
    %2845 = vdwg.mxu0
    %v2846 = vmax.f32 %v2843, 0.0
    %v2847 = vld [vmem:[%s23] sm:$0xff]
    %v2848 = vld [vmem:[%s23 + $0x8] sm:$0xff]
    %v2849 = vld [vmem:[%s23 + $0x10] sm:$0xff]
    %v2850 = vld [vmem:[%s23 + $0x18] sm:$0xff]
    %v2851 = vld [vmem:[%s23 + $0x20] sm:$0xff]
    %v2852 = vld [vmem:[%s23 + $0x28] sm:$0xff]
    %v2853 = vld [vmem:[%s23 + $0x30] sm:$0xff]
    %v2854 = vld [vmem:[%s23 + $0x38] sm:$0xff]
    %v2855 = vld [vmem:[%s23 + $0x40] sm:$0xff]
    %v2856 = vld [vmem:[%s23 + $0x48] sm:$0xff]
    %v2857 = vld [vmem:[%s23 + $0x50] sm:$0xff]
    %v2858 = vld [vmem:[%s23 + $0x58] sm:$0xff]
    %v2859 = vld [vmem:[%s23 + $0x60] sm:$0xff]
    %v2860 = vld [vmem:[%s23 + $0x68] sm:$0xff]
    %v2861 = vld [vmem:[%s23 + $0x70] sm:$0xff]
    %v2862 = vld [vmem:[%s23 + $0x78] sm:$0xf]
    %v2863 = vld [vmem:[#allocation8 + $0x5] ss:$0 sm:$0xff]
    %vm2864 = vcmask 1014784
    %v2866 = vsel %vm2864, %v2846, 0
    %v2869 = vsel %vm1555, %v2862, 0
    %2871 = vmatprep.subr.mxu0 0.0
    %2872 = vmatpush1.msra.mxu0 %v2869
    %2873 = vmatprep.subr.mxu0 0.0
    %2874 = vmatpush1.msra.mxu0 %v2861
    %2875 = vmatprep.subr.mxu0 0.0
    %2876 = vmatpush1.msra.mxu0 %v2860
    %2877 = vmatprep.subr.mxu0 0.0
    %2878 = vmatpush1.msra.mxu0 %v2859
    %2879 = vmatprep.subr.mxu0 0.0
    %2880 = vmatpush1.msra.mxu0 %v2858
    %2881 = vmatprep.subr.mxu0 0.0
    %2882 = vmatpush1.msra.mxu0 %v2857
    %2883 = vmatprep.subr.mxu0 0.0
    %2884 = vmatpush1.msra.mxu0 %v2856
    %2885 = vmatprep.subr.mxu0 0.0
    %2886 = vmatpush1.msra.mxu0 %v2855
    %2887 = vmatprep.subr.mxu0 0.0
    %2888 = vmatpush1.msra.mxu0 %v2854
    %2889 = vmatprep.subr.mxu0 0.0
    %2890 = vmatpush1.msra.mxu0 %v2853
    %2891 = vmatprep.subr.mxu0 0.0
    %2892 = vmatpush1.msra.mxu0 %v2852
    %2893 = vmatprep.subr.mxu0 0.0
    %2894 = vmatpush1.msra.mxu0 %v2851
    %2895 = vmatprep.subr.mxu0 0.0
    %2896 = vmatpush1.msra.mxu0 %v2850
    %2897 = vmatprep.subr.mxu0 0.0
    %2898 = vmatpush1.msra.mxu0 %v2849
    %2899 = vmatprep.subr.mxu0 0.0
    %2900 = vmatpush1.msra.mxu0 %v2848
    %2901 = vmatprep.subr.mxu0 0.0
    %2902 = vmatpush1.msra.mxu0 %v2847
    %2903 = vmatprep.subr.mxu0 0.0
    %2904 = vmatpush2.msra.mxu0 0.0
    %2905 = vmatprep.subr.mxu0 0.0
    %2906 = vmatpush2.msra.mxu0 0.0
    %2907 = vmatprep.subr.mxu0 0.0
    %2908 = vmatpush2.msra.mxu0 0.0
    %2909 = vmatprep.subr.mxu0 0.0
    %2910 = vmatpush2.msra.mxu0 0.0
    %2911 = vmatprep.subr.mxu0 0.0
    %2912 = vmatpush2.msra.mxu0 0.0
    %2913 = vmatprep.subr.mxu0 0.0
    %2914 = vmatpush2.msra.mxu0 0.0
    %2915 = vmatprep.subr.mxu0 0.0
    %2916 = vmatpush2.msra.mxu0 0.0
    %2917 = vmatprep.subr.mxu0 0.0
    %2918 = vmatpush2.msra.mxu0 0.0
    %2919 = vmatprep.subr.mxu0 0.0
    %2920 = vmatpush2.msra.mxu0 0.0
    %2921 = vmatprep.subr.mxu0 0.0
    %2922 = vmatpush2.msra.mxu0 0.0
    %2923 = vmatprep.subr.mxu0 0.0
    %2924 = vmatpush2.msra.mxu0 0.0
    %2925 = vmatprep.subr.mxu0 0.0
    %2926 = vmatpush2.msra.mxu0 0.0
    %2927 = vmatprep.subr.mxu0 0.0
    %2928 = vmatpush2.msra.mxu0 0.0
    %2929 = vmatprep.subr.mxu0 0.0
    %2930 = vmatpush2.msra.mxu0 0.0
    %2931 = vmatprep.subr.mxu0 0.0
    %2932 = vmatpush2.msra.mxu0 0.0
    %2933 = vmatprep.subr.mxu0 0.0
    %2934 = vmatpush2.msra.mxu0 0.0
    %2935 = vmatprep.mubr.f32.mxu0 0.0
    %2936 = vmatmul.mubr.f32.gmra.mxu0 %v2866
    %v2937 = vpop.f32.mrf.mxu0
    %v2938 = vadd.f32 %v2863, %v2937
    %v2939 = vpop.f32.mrf.mxu0
    %2940 = vdwg.mxu0
    %v2941 = vmax.f32 %v2938, 0.0
    %v2942 = vld [vmem:[%s25] sm:$0xff]
    %v2943 = vld [vmem:[%s25 + $0x8] sm:$0xff]
    %v2944 = vld [vmem:[%s25 + $0x10] sm:$0xff]
    %v2945 = vld [vmem:[%s25 + $0x18] sm:$0xff]
    %v2946 = vld [vmem:[%s25 + $0x20] sm:$0xff]
    %v2947 = vld [vmem:[%s25 + $0x28] sm:$0xff]
    %v2948 = vld [vmem:[%s25 + $0x30] sm:$0xff]
    %v2949 = vld [vmem:[%s25 + $0x38] sm:$0xf]
    %v2950 = vld [vmem:[#allocation8 + $0x6] ss:$0 sm:$0xff]
    %vm2951 = vcmask 490496
    %v2953 = vsel %vm2951, %v2941, 0
    %v2956 = vsel %vm1555, %v2949, 0
    %2958 = vmatprep.subr.mxu0 0.0
    %2959 = vmatpush1.msra.mxu0 0.0
    %2960 = vmatprep.subr.mxu0 0.0
    %2961 = vmatpush1.msra.mxu0 0.0
    %2962 = vmatprep.subr.mxu0 0.0
    %2963 = vmatpush1.msra.mxu0 0.0
    %2964 = vmatprep.subr.mxu0 0.0
    %2965 = vmatpush1.msra.mxu0 0.0
    %2966 = vmatprep.subr.mxu0 0.0
    %2967 = vmatpush1.msra.mxu0 0.0
    %2968 = vmatprep.subr.mxu0 0.0
    %2969 = vmatpush1.msra.mxu0 0.0
    %2970 = vmatprep.subr.mxu0 0.0
    %2971 = vmatpush1.msra.mxu0 0.0
    %2972 = vmatprep.subr.mxu0 0.0
    %2973 = vmatpush1.msra.mxu0 0.0
    %2974 = vmatprep.subr.mxu0 0.0
    %2975 = vmatpush1.msra.mxu0 %v2956
    %2976 = vmatprep.subr.mxu0 0.0
    %2977 = vmatpush1.msra.mxu0 %v2948
    %2978 = vmatprep.subr.mxu0 0.0
    %2979 = vmatpush1.msra.mxu0 %v2947
    %2980 = vmatprep.subr.mxu0 0.0
    %2981 = vmatpush1.msra.mxu0 %v2946
    %2982 = vmatprep.subr.mxu0 0.0
    %2983 = vmatpush1.msra.mxu0 %v2945
    %2984 = vmatprep.subr.mxu0 0.0
    %2985 = vmatpush1.msra.mxu0 %v2944
    %2986 = vmatprep.subr.mxu0 0.0
    %2987 = vmatpush1.msra.mxu0 %v2943
    %2988 = vmatprep.subr.mxu0 0.0
    %2989 = vmatpush1.msra.mxu0 %v2942
    %2990 = vmatprep.subr.mxu0 0.0
    %2991 = vmatpush2.msra.mxu0 0.0
    %2992 = vmatprep.subr.mxu0 0.0
    %2993 = vmatpush2.msra.mxu0 0.0
    %2994 = vmatprep.subr.mxu0 0.0
    %2995 = vmatpush2.msra.mxu0 0.0
    %2996 = vmatprep.subr.mxu0 0.0
    %2997 = vmatpush2.msra.mxu0 0.0
    %2998 = vmatprep.subr.mxu0 0.0
    %2999 = vmatpush2.msra.mxu0 0.0
    %3000 = vmatprep.subr.mxu0 0.0
    %3001 = vmatpush2.msra.mxu0 0.0
    %3002 = vmatprep.subr.mxu0 0.0
    %3003 = vmatpush2.msra.mxu0 0.0
    %3004 = vmatprep.subr.mxu0 0.0
    %3005 = vmatpush2.msra.mxu0 0.0
    %3006 = vmatprep.subr.mxu0 0.0
    %3007 = vmatpush2.msra.mxu0 0.0
    %3008 = vmatprep.subr.mxu0 0.0
    %3009 = vmatpush2.msra.mxu0 0.0
    %3010 = vmatprep.subr.mxu0 0.0
    %3011 = vmatpush2.msra.mxu0 0.0
    %3012 = vmatprep.subr.mxu0 0.0
    %3013 = vmatpush2.msra.mxu0 0.0
    %3014 = vmatprep.subr.mxu0 0.0
    %3015 = vmatpush2.msra.mxu0 0.0
    %3016 = vmatprep.subr.mxu0 0.0
    %3017 = vmatpush2.msra.mxu0 0.0
    %3018 = vmatprep.subr.mxu0 0.0
    %3019 = vmatpush2.msra.mxu0 0.0
    %3020 = vmatprep.subr.mxu0 0.0
    %3021 = vmatpush2.msra.mxu0 0.0
    %3022 = vmatprep.mubr.f32.mxu0 0.0
    %3023 = vmatmul.mubr.f32.gmra.mxu0 %v2953
    %v3024 = vpop.f32.mrf.mxu0
    %v3025 = vadd.f32 %v2950, %v3024
    %v3026 = vpop.f32.mrf.mxu0
    %3027 = vdwg.mxu0
    %v3028 = vld [vmem:[#allocation13] sm:$0xff]
    %v3029 = vld [vmem:[#allocation13 + $0x8] sm:$0xff]
    %v3030 = vld [vmem:[#allocation13 + $0x10] sm:$0xff]
    %v3031 = vld [vmem:[#allocation13 + $0x18] sm:$0xf]
    %v3032 = vld [vmem:[#allocation8 + $0x7] ss:$0 sm:$0xff]
    %vm3033 = vcmask 228352
    %v3035 = vsel %vm3033, %v3025, 0
    %v3038 = vsel %vm1555, %v3031, 0
    %3040 = vmatprep.subr.mxu0 0.0
    %3041 = vmatpush1.msra.mxu0 0.0
    %3042 = vmatprep.subr.mxu0 0.0
    %3043 = vmatpush1.msra.mxu0 0.0
    %3044 = vmatprep.subr.mxu0 0.0
    %3045 = vmatpush1.msra.mxu0 0.0
    %3046 = vmatprep.subr.mxu0 0.0
    %3047 = vmatpush1.msra.mxu0 0.0
    %3048 = vmatprep.subr.mxu0 0.0
    %3049 = vmatpush1.msra.mxu0 0.0
    %3050 = vmatprep.subr.mxu0 0.0
    %3051 = vmatpush1.msra.mxu0 0.0
    %3052 = vmatprep.subr.mxu0 0.0
    %3053 = vmatpush1.msra.mxu0 0.0
    %3054 = vmatprep.subr.mxu0 0.0
    %3055 = vmatpush1.msra.mxu0 0.0
    %3056 = vmatprep.subr.mxu0 0.0
    %3057 = vmatpush1.msra.mxu0 0.0
    %3058 = vmatprep.subr.mxu0 0.0
    %3059 = vmatpush1.msra.mxu0 0.0
    %3060 = vmatprep.subr.mxu0 0.0
    %3061 = vmatpush1.msra.mxu0 0.0
    %3062 = vmatprep.subr.mxu0 0.0
    %3063 = vmatpush1.msra.mxu0 0.0
    %3064 = vmatprep.subr.mxu0 0.0
    %3065 = vmatpush1.msra.mxu0 %v3038
    %3066 = vmatprep.subr.mxu0 0.0
    %3067 = vmatpush1.msra.mxu0 %v3030
    %3068 = vmatprep.subr.mxu0 0.0
    %3069 = vmatpush1.msra.mxu0 %v3029
    %3070 = vmatprep.subr.mxu0 0.0
    %3071 = vmatpush1.msra.mxu0 %v3028
    %3072 = vmatprep.subr.mxu0 0.0
    %3073 = vmatpush2.msra.mxu0 0.0
    %3074 = vmatprep.subr.mxu0 0.0
    %3075 = vmatpush2.msra.mxu0 0.0
    %3076 = vmatprep.subr.mxu0 0.0
    %3077 = vmatpush2.msra.mxu0 0.0
    %3078 = vmatprep.subr.mxu0 0.0
    %3079 = vmatpush2.msra.mxu0 0.0
    %3080 = vmatprep.subr.mxu0 0.0
    %3081 = vmatpush2.msra.mxu0 0.0
    %3082 = vmatprep.subr.mxu0 0.0
    %3083 = vmatpush2.msra.mxu0 0.0
    %3084 = vmatprep.subr.mxu0 0.0
    %3085 = vmatpush2.msra.mxu0 0.0
    %3086 = vmatprep.subr.mxu0 0.0
    %3087 = vmatpush2.msra.mxu0 0.0
    %3088 = vmatprep.subr.mxu0 0.0
    %3089 = vmatpush2.msra.mxu0 0.0
    %3090 = vmatprep.subr.mxu0 0.0
    %3091 = vmatpush2.msra.mxu0 0.0
    %3092 = vmatprep.subr.mxu0 0.0
    %3093 = vmatpush2.msra.mxu0 0.0
    %3094 = vmatprep.subr.mxu0 0.0
    %3095 = vmatpush2.msra.mxu0 0.0
    %3096 = vmatprep.subr.mxu0 0.0
    %3097 = vmatpush2.msra.mxu0 0.0
    %3098 = vmatprep.subr.mxu0 0.0
    %3099 = vmatpush2.msra.mxu0 0.0
    %3100 = vmatprep.subr.mxu0 0.0
    %3101 = vmatpush2.msra.mxu0 0.0
    %3102 = vmatprep.subr.mxu0 0.0
    %3103 = vmatpush2.msra.mxu0 0.0
    %3104 = vmatprep.mubr.f32.mxu0 0.0
    %3105 = vmatmul.mubr.f32.gmra.mxu0 %v3035
    %v3106 = vpop.f32.mrf.mxu0
    %v3107 = vadd.f32 %v3032, %v3106
    %v3108 = vpop.f32.mrf.mxu0
    %3109 = vdwg.mxu0
    %v3110 = vmax.f32 %v3107, 0.0
    %v3111 = vld [vmem:[%s29] sm:$0xff]
    %v3112 = vld [vmem:[%s29 + $0x8] sm:$0xff]
    %v3113 = vld [vmem:[%s29 + $0x10] sm:$0xff]
    %v3114 = vld [vmem:[%s29 + $0x18] sm:$0xff]
    %v3115 = vld [vmem:[%s29 + $0x20] sm:$0xff]
    %v3116 = vld [vmem:[%s29 + $0x28] sm:$0xff]
    %v3117 = vld [vmem:[%s29 + $0x30] sm:$0xff]
    %v3118 = vld [vmem:[%s29 + $0x38] sm:$0xf]
    %v3119 = vld [vmem:[#allocation8 + $0x28] ss:$0 sm:$0xff]
    %v3121 = vsel %vm2951, %v3110, 0
    %v3124 = vsel %vm1555, %v3118, 0
    %3126 = vmatprep.subr.mxu0 0.0
    %3127 = vmatpush1.msra.mxu0 0.0
    %3128 = vmatprep.subr.mxu0 0.0
    %3129 = vmatpush1.msra.mxu0 0.0
    %3130 = vmatprep.subr.mxu0 0.0
    %3131 = vmatpush1.msra.mxu0 0.0
    %3132 = vmatprep.subr.mxu0 0.0
    %3133 = vmatpush1.msra.mxu0 0.0
    %3134 = vmatprep.subr.mxu0 0.0
    %3135 = vmatpush1.msra.mxu0 0.0
    %3136 = vmatprep.subr.mxu0 0.0
    %3137 = vmatpush1.msra.mxu0 0.0
    %3138 = vmatprep.subr.mxu0 0.0
    %3139 = vmatpush1.msra.mxu0 0.0
    %3140 = vmatprep.subr.mxu0 0.0
    %3141 = vmatpush1.msra.mxu0 0.0
    %3142 = vmatprep.subr.mxu0 0.0
    %3143 = vmatpush1.msra.mxu0 %v3124
    %3144 = vmatprep.subr.mxu0 0.0
    %3145 = vmatpush1.msra.mxu0 %v3117
    %3146 = vmatprep.subr.mxu0 0.0
    %3147 = vmatpush1.msra.mxu0 %v3116
    %3148 = vmatprep.subr.mxu0 0.0
    %3149 = vmatpush1.msra.mxu0 %v3115
    %3150 = vmatprep.subr.mxu0 0.0
    %3151 = vmatpush1.msra.mxu0 %v3114
    %3152 = vmatprep.subr.mxu0 0.0
    %3153 = vmatpush1.msra.mxu0 %v3113
    %3154 = vmatprep.subr.mxu0 0.0
    %3155 = vmatpush1.msra.mxu0 %v3112
    %3156 = vmatprep.subr.mxu0 0.0
    %3157 = vmatpush1.msra.mxu0 %v3111
    %3158 = vmatprep.subr.mxu0 0.0
    %3159 = vmatpush2.msra.mxu0 0.0
    %3160 = vmatprep.subr.mxu0 0.0
    %3161 = vmatpush2.msra.mxu0 0.0
    %3162 = vmatprep.subr.mxu0 0.0
    %3163 = vmatpush2.msra.mxu0 0.0
    %3164 = vmatprep.subr.mxu0 0.0
    %3165 = vmatpush2.msra.mxu0 0.0
    %3166 = vmatprep.subr.mxu0 0.0
    %3167 = vmatpush2.msra.mxu0 0.0
    %3168 = vmatprep.subr.mxu0 0.0
    %3169 = vmatpush2.msra.mxu0 0.0
    %3170 = vmatprep.subr.mxu0 0.0
    %3171 = vmatpush2.msra.mxu0 0.0
    %3172 = vmatprep.subr.mxu0 0.0
    %3173 = vmatpush2.msra.mxu0 0.0
    %3174 = vmatprep.subr.mxu0 0.0
    %3175 = vmatpush2.msra.mxu0 0.0
    %3176 = vmatprep.subr.mxu0 0.0
    %3177 = vmatpush2.msra.mxu0 0.0
    %3178 = vmatprep.subr.mxu0 0.0
    %3179 = vmatpush2.msra.mxu0 0.0
    %3180 = vmatprep.subr.mxu0 0.0
    %3181 = vmatpush2.msra.mxu0 0.0
    %3182 = vmatprep.subr.mxu0 0.0
    %3183 = vmatpush2.msra.mxu0 0.0
    %3184 = vmatprep.subr.mxu0 0.0
    %3185 = vmatpush2.msra.mxu0 0.0
    %3186 = vmatprep.subr.mxu0 0.0
    %3187 = vmatpush2.msra.mxu0 0.0
    %3188 = vmatprep.subr.mxu0 0.0
    %3189 = vmatpush2.msra.mxu0 0.0
    %3190 = vmatprep.mubr.f32.mxu0 0.0
    %3191 = vmatmul.mubr.f32.gmra.mxu0 %v3121
    %v3192 = vpop.f32.mrf.mxu0
    %v3193 = vadd.f32 %v3119, %v3192
    %v3194 = vpop.f32.mrf.mxu0
    %3195 = vdwg.mxu0
    %v3196 = vmax.f32 %v3193, 0.0
    %v3197 = vld [vmem:[#allocation14] sm:$0xff]
    %v3198 = vld [vmem:[#allocation14 + $0x8] sm:$0xff]
    %v3199 = vld [vmem:[#allocation14 + $0x10] sm:$0xff]
    %v3200 = vld [vmem:[#allocation14 + $0x18] sm:$0xff]
    %v3201 = vld [vmem:[#allocation14 + $0x20] sm:$0xff]
    %v3202 = vld [vmem:[#allocation14 + $0x28] sm:$0xff]
    %v3203 = vld [vmem:[#allocation14 + $0x30] sm:$0xff]
    %v3204 = vld [vmem:[#allocation14 + $0x38] sm:$0xff]
    %v3205 = vld [vmem:[#allocation14 + $0x40] sm:$0xff]
    %v3206 = vld [vmem:[#allocation14 + $0x48] sm:$0xff]
    %v3207 = vld [vmem:[#allocation14 + $0x50] sm:$0xff]
    %v3208 = vld [vmem:[#allocation14 + $0x58] sm:$0xff]
    %v3209 = vld [vmem:[#allocation14 + $0x60] sm:$0xff]
    %v3210 = vld [vmem:[#allocation14 + $0x68] sm:$0xff]
    %v3211 = vld [vmem:[#allocation14 + $0x70] sm:$0xff]
    %v3212 = vld [vmem:[#allocation14 + $0x78] sm:$0xff]
    %v3213 = vld [vmem:[#allocation14 + $0x80] sm:$0xff]
    %v3214 = vld [vmem:[#allocation14 + $0x88] sm:$0xff]
    %v3215 = vld [vmem:[#allocation14 + $0x90] sm:$0xff]
    %v3216 = vld [vmem:[#allocation14 + $0x98] sm:$0xff]
    %v3217 = vld [vmem:[#allocation14 + $0xa0] sm:$0xff]
    %v3218 = vld [vmem:[#allocation14 + $0xa8] sm:$0xff]
    %v3219 = vld [vmem:[#allocation14 + $0xb0] sm:$0xff]
    %v3220 = vld [vmem:[#allocation14 + $0xb8] sm:$0xff]
    %v3221 = vld [vmem:[#allocation14 + $0xc0] sm:$0xff]
    %v3222 = vld [vmem:[#allocation14 + $0xc8] sm:$0xff]
    %v3223 = vld [vmem:[#allocation14 + $0xd0] sm:$0xff]
    %v3224 = vld [vmem:[#allocation14 + $0xd8] sm:$0xff]
    %v3225 = vld [vmem:[#allocation14 + $0xe0] sm:$0xff]
    %v3226 = vld [vmem:[#allocation14 + $0xe8] sm:$0xff]
    %v3227 = vld [vmem:[#allocation14 + $0xf0] sm:$0xf]
    %v3228 = vld [vmem:[#allocation14 + $0xf8] sm:$0xf]
    %s3229 = scalar_lea.vmem [#allocation8], 41
    %v3230 = vld [vmem:[%s3229] ss:$8 sm:$0x3]
    %v3232 = vlaneseq
    %v3233 = vshrl.u32 %v3232, 7
    %v3234 = vsub.s32 0, %v3233
    %v3235 = vrot.slane %v3230, %v3234
    %v3236 = vlaneseq
    %v3237 = vshrl.u32 %v3236, 7
    %v3238 = vsub.s32 1, %v3237
    %v3239 = vrot.slane %v3230, %v3238
    %v3243 = vsel %vm2864, %v3196, 0
    %v3246 = vsel %vm1555, %v3227, 0
    %v3249 = vsel %vm1555, %v3228, 0
    %3251 = vmatprep.subr.mxu0 %v3249
    %3252 = vmatpush1.msra.mxu0 %v3246
    %3253 = vmatprep.subr.mxu0 %v3226
    %3254 = vmatpush1.msra.mxu0 %v3225
    %3255 = vmatprep.subr.mxu0 %v3224
    %3256 = vmatpush1.msra.mxu0 %v3223
    %3257 = vmatprep.subr.mxu0 %v3222
    %3258 = vmatpush1.msra.mxu0 %v3221
    %3259 = vmatprep.subr.mxu0 %v3220
    %3260 = vmatpush1.msra.mxu0 %v3219
    %3261 = vmatprep.subr.mxu0 %v3218
    %3262 = vmatpush1.msra.mxu0 %v3217
    %3263 = vmatprep.subr.mxu0 %v3216
    %3264 = vmatpush1.msra.mxu0 %v3215
    %3265 = vmatprep.subr.mxu0 %v3214
    %3266 = vmatpush1.msra.mxu0 %v3213
    %3267 = vmatprep.subr.mxu0 %v3212
    %3268 = vmatpush1.msra.mxu0 %v3211
    %3269 = vmatprep.subr.mxu0 %v3210
    %3270 = vmatpush1.msra.mxu0 %v3209
    %3271 = vmatprep.subr.mxu0 %v3208
    %3272 = vmatpush1.msra.mxu0 %v3207
    %3273 = vmatprep.subr.mxu0 %v3206
    %3274 = vmatpush1.msra.mxu0 %v3205
    %3275 = vmatprep.subr.mxu0 %v3204
    %3276 = vmatpush1.msra.mxu0 %v3203
    %3277 = vmatprep.subr.mxu0 %v3202
    %3278 = vmatpush1.msra.mxu0 %v3201
    %3279 = vmatprep.subr.mxu0 %v3200
    %3280 = vmatpush1.msra.mxu0 %v3199
    %3281 = vmatprep.subr.mxu0 %v3198
    %3282 = vmatpush1.msra.mxu0 %v3197
    %3283 = vmatprep.subr.mxu0 0.0
    %3284 = vmatpush2.msra.mxu0 0.0
    %3285 = vmatprep.subr.mxu0 0.0
    %3286 = vmatpush2.msra.mxu0 0.0
    %3287 = vmatprep.subr.mxu0 0.0
    %3288 = vmatpush2.msra.mxu0 0.0
    %3289 = vmatprep.subr.mxu0 0.0
    %3290 = vmatpush2.msra.mxu0 0.0
    %3291 = vmatprep.subr.mxu0 0.0
    %3292 = vmatpush2.msra.mxu0 0.0
    %3293 = vmatprep.subr.mxu0 0.0
    %3294 = vmatpush2.msra.mxu0 0.0
    %3295 = vmatprep.subr.mxu0 0.0
    %3296 = vmatpush2.msra.mxu0 0.0
    %3297 = vmatprep.subr.mxu0 0.0
    %3298 = vmatpush2.msra.mxu0 0.0
    %3299 = vmatprep.subr.mxu0 0.0
    %3300 = vmatpush2.msra.mxu0 0.0
    %3301 = vmatprep.subr.mxu0 0.0
    %3302 = vmatpush2.msra.mxu0 0.0
    %3303 = vmatprep.subr.mxu0 0.0
    %3304 = vmatpush2.msra.mxu0 0.0
    %3305 = vmatprep.subr.mxu0 0.0
    %3306 = vmatpush2.msra.mxu0 0.0
    %3307 = vmatprep.subr.mxu0 0.0
    %3308 = vmatpush2.msra.mxu0 0.0
    %3309 = vmatprep.subr.mxu0 0.0
    %3310 = vmatpush2.msra.mxu0 0.0
    %3311 = vmatprep.subr.mxu0 0.0
    %3312 = vmatpush2.msra.mxu0 0.0
    %3313 = vmatprep.subr.mxu0 0.0
    %3314 = vmatpush2.msra.mxu0 0.0
    %3315 = vmatprep.mubr.f32.mxu0 0.0
    %3316 = vmatmul.mubr.f32.gmra.mxu0 %v3243
    %v3317 = vpop.f32.mrf.mxu0
    %v3318 = vadd.f32 %v3235, %v3317
    %v3319 = vpop.f32.mrf.mxu0
    %v3320 = vadd.f32 %v3239, %v3319
    %3321 = vdwg.mxu0
    %v3322 = vmul.f32 %v2741, %v3318
    %v3323 = vmul.f32 %v2742, %v3320
    %v3324 = vadd.f32 %v2741, %v3322
    %v3325 = vadd.f32 %v2742, %v3323
    %v3326 = vld [vmem:[#allocation16] sm:$0xff]
    %v3327 = vld [vmem:[#allocation16 + $0x8] sm:$0xff]
    %v3328 = vld [vmem:[#allocation16 + $0x10] sm:$0xff]
    %v3329 = vld [vmem:[#allocation16 + $0x18] sm:$0xff]
    %v3330 = vld [vmem:[#allocation16 + $0x20] sm:$0xff]
    %v3331 = vld [vmem:[#allocation16 + $0x28] sm:$0xff]
    %v3332 = vld [vmem:[#allocation16 + $0x30] sm:$0xff]
    %v3333 = vld [vmem:[#allocation16 + $0x38] sm:$0xff]
    %v3334 = vld [vmem:[#allocation16 + $0x40] sm:$0xff]
    %v3335 = vld [vmem:[#allocation16 + $0x48] sm:$0xff]
    %v3336 = vld [vmem:[#allocation16 + $0x50] sm:$0xff]
    %v3337 = vld [vmem:[#allocation16 + $0x58] sm:$0xff]
    %v3338 = vld [vmem:[#allocation16 + $0x60] sm:$0xff]
    %v3339 = vld [vmem:[#allocation16 + $0x68] sm:$0xff]
    %v3340 = vld [vmem:[#allocation16 + $0x70] sm:$0xff]
    %v3341 = vld [vmem:[#allocation16 + $0x78] sm:$0xff]
    %v3342 = vld [vmem:[#allocation16 + $0x80] sm:$0xff]
    %v3343 = vld [vmem:[#allocation16 + $0x88] sm:$0xff]
    %v3344 = vld [vmem:[#allocation16 + $0x90] sm:$0xff]
    %v3345 = vld [vmem:[#allocation16 + $0x98] sm:$0xff]
    %v3346 = vld [vmem:[#allocation16 + $0xa0] sm:$0xff]
    %v3347 = vld [vmem:[#allocation16 + $0xa8] sm:$0xff]
    %v3348 = vld [vmem:[#allocation16 + $0xb0] sm:$0xff]
    %v3349 = vld [vmem:[#allocation16 + $0xb8] sm:$0xff]
    %v3350 = vld [vmem:[#allocation16 + $0xc0] sm:$0xff]
    %v3351 = vld [vmem:[#allocation16 + $0xc8] sm:$0xff]
    %v3352 = vld [vmem:[#allocation16 + $0xd0] sm:$0xff]
    %v3353 = vld [vmem:[#allocation16 + $0xd8] sm:$0xff]
    %v3354 = vld [vmem:[#allocation16 + $0xe0] sm:$0xff]
    %v3355 = vld [vmem:[#allocation16 + $0xe8] sm:$0xff]
    %v3356 = vld [vmem:[#allocation16 + $0xf0] sm:$0xff]
    %v3357 = vld [vmem:[#allocation16 + $0xf8] sm:$0xff]
    %v3358 = vld [vmem:[#allocation8 + $0x2a] ss:$0 sm:$0xff]
    %3359 = vmatprep.subr.mxu0 0.0
    %3360 = vmatpush1.msra.mxu0 %v3341
    %3361 = vmatprep.subr.mxu0 0.0
    %3362 = vmatpush1.msra.mxu0 %v3340
    %3363 = vmatprep.subr.mxu0 0.0
    %3364 = vmatpush1.msra.mxu0 %v3339
    %3365 = vmatprep.subr.mxu0 0.0
    %3366 = vmatpush1.msra.mxu0 %v3338
    %3367 = vmatprep.subr.mxu0 0.0
    %3368 = vmatpush1.msra.mxu0 %v3337
    %3369 = vmatprep.subr.mxu0 0.0
    %3370 = vmatpush1.msra.mxu0 %v3336
    %3371 = vmatprep.subr.mxu0 0.0
    %3372 = vmatpush1.msra.mxu0 %v3335
    %3373 = vmatprep.subr.mxu0 0.0
    %3374 = vmatpush1.msra.mxu0 %v3334
    %3375 = vmatprep.subr.mxu0 0.0
    %3376 = vmatpush1.msra.mxu0 %v3333
    %3377 = vmatprep.subr.mxu0 0.0
    %3378 = vmatpush1.msra.mxu0 %v3332
    %3379 = vmatprep.subr.mxu0 0.0
    %3380 = vmatpush1.msra.mxu0 %v3331
    %3381 = vmatprep.subr.mxu0 0.0
    %3382 = vmatpush1.msra.mxu0 %v3330
    %3383 = vmatprep.subr.mxu0 0.0
    %3384 = vmatpush1.msra.mxu0 %v3329
    %3385 = vmatprep.subr.mxu0 0.0
    %3386 = vmatpush1.msra.mxu0 %v3328
    %3387 = vmatprep.subr.mxu0 0.0
    %3388 = vmatpush1.msra.mxu0 %v3327
    %3389 = vmatprep.subr.mxu0 0.0
    %3390 = vmatpush1.msra.mxu0 %v3326
    %3391 = vmatprep.subr.mxu0 0.0
    %3392 = vmatpush2.msra.mxu0 %v3357
    %3393 = vmatprep.subr.mxu0 0.0
    %3394 = vmatpush2.msra.mxu0 %v3356
    %3395 = vmatprep.subr.mxu0 0.0
    %3396 = vmatpush2.msra.mxu0 %v3355
    %3397 = vmatprep.subr.mxu0 0.0
    %3398 = vmatpush2.msra.mxu0 %v3354
    %3399 = vmatprep.subr.mxu0 0.0
    %3400 = vmatpush2.msra.mxu0 %v3353
    %3401 = vmatprep.subr.mxu0 0.0
    %3402 = vmatpush2.msra.mxu0 %v3352
    %3403 = vmatprep.subr.mxu0 0.0
    %3404 = vmatpush2.msra.mxu0 %v3351
    %3405 = vmatprep.subr.mxu0 0.0
    %3406 = vmatpush2.msra.mxu0 %v3350
    %3407 = vmatprep.subr.mxu0 0.0
    %3408 = vmatpush2.msra.mxu0 %v3349
    %3409 = vmatprep.subr.mxu0 0.0
    %3410 = vmatpush2.msra.mxu0 %v3348
    %3411 = vmatprep.subr.mxu0 0.0
    %3412 = vmatpush2.msra.mxu0 %v3347
    %3413 = vmatprep.subr.mxu0 0.0
    %3414 = vmatpush2.msra.mxu0 %v3346
    %3415 = vmatprep.subr.mxu0 0.0
    %3416 = vmatpush2.msra.mxu0 %v3345
    %3417 = vmatprep.subr.mxu0 0.0
    %3418 = vmatpush2.msra.mxu0 %v3344
    %3419 = vmatprep.subr.mxu0 0.0
    %3420 = vmatpush2.msra.mxu0 %v3343
    %3421 = vmatprep.subr.mxu0 0.0
    %3422 = vmatpush2.msra.mxu0 %v3342
    %3423 = vmatprep.mubr.f32.mxu0 %v3325
    %3424 = vmatmul.mubr.f32.gmra.mxu0 %v3324
    %v3425 = vpop.f32.mrf.mxu0
    %v3426 = vadd.f32 %v3358, %v3425
    %v3427 = vpop.f32.mrf.mxu0
    %3428 = vdwg.mxu0
    %v3429 = vmul.f32 %v3426, %v3426
    %v3430 = vld [vmem:[#allocation17] sm:$0xff]
    %v3431 = vld [vmem:[#allocation17 + $0x8] sm:$0xff]
    %v3432 = vld [vmem:[#allocation17 + $0x10] sm:$0xff]
    %v3433 = vld [vmem:[#allocation17 + $0x18] sm:$0xff]
    %v3434 = vld [vmem:[#allocation17 + $0x20] sm:$0xff]
    %v3435 = vld [vmem:[#allocation17 + $0x28] sm:$0xff]
    %v3436 = vld [vmem:[#allocation17 + $0x30] sm:$0xff]
    %v3437 = vld [vmem:[#allocation17 + $0x38] sm:$0xff]
    %v3438 = vld [vmem:[#allocation17 + $0x40] sm:$0xff]
    %v3439 = vld [vmem:[#allocation17 + $0x48] sm:$0xff]
    %v3440 = vld [vmem:[#allocation17 + $0x50] sm:$0xff]
    %v3441 = vld [vmem:[#allocation17 + $0x58] sm:$0xff]
    %v3442 = vld [vmem:[#allocation17 + $0x60] sm:$0xff]
    %v3443 = vld [vmem:[#allocation17 + $0x68] sm:$0xff]
    %v3444 = vld [vmem:[#allocation17 + $0x70] sm:$0xff]
    %v3445 = vld [vmem:[#allocation17 + $0x78] sm:$0xf]
    %v3446 = vld [vmem:[#allocation8 + $0x2b] ss:$0 sm:$0xff]
    %v3448 = vsel %vm2864, %v3429, 0
    %v3451 = vsel %vm1555, %v3445, 0
    %3453 = vmatprep.subr.mxu0 0.0
    %3454 = vmatpush1.msra.mxu0 %v3451
    %3455 = vmatprep.subr.mxu0 0.0
    %3456 = vmatpush1.msra.mxu0 %v3444
    %3457 = vmatprep.subr.mxu0 0.0
    %3458 = vmatpush1.msra.mxu0 %v3443
    %3459 = vmatprep.subr.mxu0 0.0
    %3460 = vmatpush1.msra.mxu0 %v3442
    %3461 = vmatprep.subr.mxu0 0.0
    %3462 = vmatpush1.msra.mxu0 %v3441
    %3463 = vmatprep.subr.mxu0 0.0
    %3464 = vmatpush1.msra.mxu0 %v3440
    %3465 = vmatprep.subr.mxu0 0.0
    %3466 = vmatpush1.msra.mxu0 %v3439
    %3467 = vmatprep.subr.mxu0 0.0
    %3468 = vmatpush1.msra.mxu0 %v3438
    %3469 = vmatprep.subr.mxu0 0.0
    %3470 = vmatpush1.msra.mxu0 %v3437
    %3471 = vmatprep.subr.mxu0 0.0
    %3472 = vmatpush1.msra.mxu0 %v3436
    %3473 = vmatprep.subr.mxu0 0.0
    %3474 = vmatpush1.msra.mxu0 %v3435
    %3475 = vmatprep.subr.mxu0 0.0
    %3476 = vmatpush1.msra.mxu0 %v3434
    %3477 = vmatprep.subr.mxu0 0.0
    %3478 = vmatpush1.msra.mxu0 %v3433
    %3479 = vmatprep.subr.mxu0 0.0
    %3480 = vmatpush1.msra.mxu0 %v3432
    %3481 = vmatprep.subr.mxu0 0.0
    %3482 = vmatpush1.msra.mxu0 %v3431
    %3483 = vmatprep.subr.mxu0 0.0
    %3484 = vmatpush1.msra.mxu0 %v3430
    %3485 = vmatprep.subr.mxu0 0.0
    %3486 = vmatpush2.msra.mxu0 0.0
    %3487 = vmatprep.subr.mxu0 0.0
    %3488 = vmatpush2.msra.mxu0 0.0
    %3489 = vmatprep.subr.mxu0 0.0
    %3490 = vmatpush2.msra.mxu0 0.0
    %3491 = vmatprep.subr.mxu0 0.0
    %3492 = vmatpush2.msra.mxu0 0.0
    %3493 = vmatprep.subr.mxu0 0.0
    %3494 = vmatpush2.msra.mxu0 0.0
    %3495 = vmatprep.subr.mxu0 0.0
    %3496 = vmatpush2.msra.mxu0 0.0
    %3497 = vmatprep.subr.mxu0 0.0
    %3498 = vmatpush2.msra.mxu0 0.0
    %3499 = vmatprep.subr.mxu0 0.0
    %3500 = vmatpush2.msra.mxu0 0.0
    %3501 = vmatprep.subr.mxu0 0.0
    %3502 = vmatpush2.msra.mxu0 0.0
    %3503 = vmatprep.subr.mxu0 0.0
    %3504 = vmatpush2.msra.mxu0 0.0
    %3505 = vmatprep.subr.mxu0 0.0
    %3506 = vmatpush2.msra.mxu0 0.0
    %3507 = vmatprep.subr.mxu0 0.0
    %3508 = vmatpush2.msra.mxu0 0.0
    %3509 = vmatprep.subr.mxu0 0.0
    %3510 = vmatpush2.msra.mxu0 0.0
    %3511 = vmatprep.subr.mxu0 0.0
    %3512 = vmatpush2.msra.mxu0 0.0
    %3513 = vmatprep.subr.mxu0 0.0
    %3514 = vmatpush2.msra.mxu0 0.0
    %3515 = vmatprep.subr.mxu0 0.0
    %3516 = vmatpush2.msra.mxu0 0.0
    %3517 = vmatprep.mubr.f32.mxu0 0.0
    %3518 = vmatmul.mubr.f32.gmra.mxu0 %v3448
    %v3519 = vpop.f32.mrf.mxu0
    %v3520 = vadd.f32 %v3446, %v3519
    %v3521 = vpop.f32.mrf.mxu0
    %3522 = vdwg.mxu0
    %v3523 = vmax.f32 %v3520, 1e-06
    %v3524 = vrsqrt.pop %v3523
    %v3525 = vmul.f32 %v3426, %v3524
    %v3526 = vld [vmem:[%s37] sm:$0xff]
    %v3527 = vld [vmem:[%s37 + $0x8] sm:$0xff]
    %v3528 = vld [vmem:[%s37 + $0x10] sm:$0xff]
    %v3529 = vld [vmem:[%s37 + $0x18] sm:$0xff]
    %v3530 = vld [vmem:[%s37 + $0x20] sm:$0xff]
    %v3531 = vld [vmem:[%s37 + $0x28] sm:$0xff]
    %v3532 = vld [vmem:[%s37 + $0x30] sm:$0xff]
    %v3533 = vld [vmem:[%s37 + $0x38] sm:$0xff]
    %v3534 = vld [vmem:[%s37 + $0x40] sm:$0xff]
    %v3535 = vld [vmem:[%s37 + $0x48] sm:$0xff]
    %v3536 = vld [vmem:[%s37 + $0x50] sm:$0xff]
    %v3537 = vld [vmem:[%s37 + $0x58] sm:$0xff]
    %v3538 = vld [vmem:[%s37 + $0x60] sm:$0xff]
    %v3539 = vld [vmem:[%s37 + $0x68] sm:$0xff]
    %v3540 = vld [vmem:[%s37 + $0x70] sm:$0xff]
    %v3541 = vld [vmem:[%s37 + $0x78] sm:$0xf]
    %v3542 = vld [vmem:[#allocation8 + $0x2c] ss:$0 sm:$0xff]
    %v3544 = vsel %vm2864, %v3525, 0
    %v3547 = vsel %vm1555, %v3541, 0
    %3549 = vmatprep.subr.mxu0 0.0
    %3550 = vmatpush1.msra.mxu0 %v3547
    %3551 = vmatprep.subr.mxu0 0.0
    %3552 = vmatpush1.msra.mxu0 %v3540
    %3553 = vmatprep.subr.mxu0 0.0
    %3554 = vmatpush1.msra.mxu0 %v3539
    %3555 = vmatprep.subr.mxu0 0.0
    %3556 = vmatpush1.msra.mxu0 %v3538
    %3557 = vmatprep.subr.mxu0 0.0
    %3558 = vmatpush1.msra.mxu0 %v3537
    %3559 = vmatprep.subr.mxu0 0.0
    %3560 = vmatpush1.msra.mxu0 %v3536
    %3561 = vmatprep.subr.mxu0 0.0
    %3562 = vmatpush1.msra.mxu0 %v3535
    %3563 = vmatprep.subr.mxu0 0.0
    %3564 = vmatpush1.msra.mxu0 %v3534
    %3565 = vmatprep.subr.mxu0 0.0
    %3566 = vmatpush1.msra.mxu0 %v3533
    %3567 = vmatprep.subr.mxu0 0.0
    %3568 = vmatpush1.msra.mxu0 %v3532
    %3569 = vmatprep.subr.mxu0 0.0
    %3570 = vmatpush1.msra.mxu0 %v3531
    %3571 = vmatprep.subr.mxu0 0.0
    %3572 = vmatpush1.msra.mxu0 %v3530
    %3573 = vmatprep.subr.mxu0 0.0
    %3574 = vmatpush1.msra.mxu0 %v3529
    %3575 = vmatprep.subr.mxu0 0.0
    %3576 = vmatpush1.msra.mxu0 %v3528
    %3577 = vmatprep.subr.mxu0 0.0
    %3578 = vmatpush1.msra.mxu0 %v3527
    %3579 = vmatprep.subr.mxu0 0.0
    %3580 = vmatpush1.msra.mxu0 %v3526
    %3581 = vmatprep.subr.mxu0 0.0
    %3582 = vmatpush2.msra.mxu0 0.0
    %3583 = vmatprep.subr.mxu0 0.0
    %3584 = vmatpush2.msra.mxu0 0.0
    %3585 = vmatprep.subr.mxu0 0.0
    %3586 = vmatpush2.msra.mxu0 0.0
    %3587 = vmatprep.subr.mxu0 0.0
    %3588 = vmatpush2.msra.mxu0 0.0
    %3589 = vmatprep.subr.mxu0 0.0
    %3590 = vmatpush2.msra.mxu0 0.0
    %3591 = vmatprep.subr.mxu0 0.0
    %3592 = vmatpush2.msra.mxu0 0.0
    %3593 = vmatprep.subr.mxu0 0.0
    %3594 = vmatpush2.msra.mxu0 0.0
    %3595 = vmatprep.subr.mxu0 0.0
    %3596 = vmatpush2.msra.mxu0 0.0
    %3597 = vmatprep.subr.mxu0 0.0
    %3598 = vmatpush2.msra.mxu0 0.0
    %3599 = vmatprep.subr.mxu0 0.0
    %3600 = vmatpush2.msra.mxu0 0.0
    %3601 = vmatprep.subr.mxu0 0.0
    %3602 = vmatpush2.msra.mxu0 0.0
    %3603 = vmatprep.subr.mxu0 0.0
    %3604 = vmatpush2.msra.mxu0 0.0
    %3605 = vmatprep.subr.mxu0 0.0
    %3606 = vmatpush2.msra.mxu0 0.0
    %3607 = vmatprep.subr.mxu0 0.0
    %3608 = vmatpush2.msra.mxu0 0.0
    %3609 = vmatprep.subr.mxu0 0.0
    %3610 = vmatpush2.msra.mxu0 0.0
    %3611 = vmatprep.subr.mxu0 0.0
    %3612 = vmatpush2.msra.mxu0 0.0
    %3613 = vmatprep.mubr.f32.mxu0 0.0
    %3614 = vmatmul.mubr.f32.gmra.mxu0 %v3544
    %v3615 = vpop.f32.mrf.mxu0
    %v3616 = vadd.f32 %v3542, %v3615
    %v3617 = vpop.f32.mrf.mxu0
    %3618 = vdwg.mxu0
    %v3619 = vld [vmem:[#allocation19] sm:$0xff]
    %v3620 = vld [vmem:[#allocation19 + $0x8] sm:$0xff]
    %v3621 = vld [vmem:[#allocation19 + $0x10] sm:$0xff]
    %v3622 = vld [vmem:[#allocation19 + $0x18] sm:$0xff]
    %v3623 = vld [vmem:[#allocation19 + $0x20] sm:$0xff]
    %v3624 = vld [vmem:[#allocation19 + $0x28] sm:$0xff]
    %v3625 = vld [vmem:[#allocation19 + $0x30] sm:$0xff]
    %v3626 = vld [vmem:[#allocation19 + $0x38] sm:$0xff]
    %v3627 = vld [vmem:[#allocation8 + $0x2d] ss:$0 sm:$0xff]
    %v3629 = vsel %vm362, %v3616, 0
    %3631 = vmatprep.subr.mxu0 0.0
    %3632 = vmatpush1.msra.mxu0 0.0
    %3633 = vmatprep.subr.mxu0 0.0
    %3634 = vmatpush1.msra.mxu0 0.0
    %3635 = vmatprep.subr.mxu0 0.0
    %3636 = vmatpush1.msra.mxu0 0.0
    %3637 = vmatprep.subr.mxu0 0.0
    %3638 = vmatpush1.msra.mxu0 0.0
    %3639 = vmatprep.subr.mxu0 0.0
    %3640 = vmatpush1.msra.mxu0 0.0
    %3641 = vmatprep.subr.mxu0 0.0
    %3642 = vmatpush1.msra.mxu0 0.0
    %3643 = vmatprep.subr.mxu0 0.0
    %3644 = vmatpush1.msra.mxu0 0.0
    %3645 = vmatprep.subr.mxu0 0.0
    %3646 = vmatpush1.msra.mxu0 0.0
    %3647 = vmatprep.subr.mxu0 0.0
    %3648 = vmatpush1.msra.mxu0 %v3626
    %3649 = vmatprep.subr.mxu0 0.0
    %3650 = vmatpush1.msra.mxu0 %v3625
    %3651 = vmatprep.subr.mxu0 0.0
    %3652 = vmatpush1.msra.mxu0 %v3624
    %3653 = vmatprep.subr.mxu0 0.0
    %3654 = vmatpush1.msra.mxu0 %v3623
    %3655 = vmatprep.subr.mxu0 0.0
    %3656 = vmatpush1.msra.mxu0 %v3622
    %3657 = vmatprep.subr.mxu0 0.0
    %3658 = vmatpush1.msra.mxu0 %v3621
    %3659 = vmatprep.subr.mxu0 0.0
    %3660 = vmatpush1.msra.mxu0 %v3620
    %3661 = vmatprep.subr.mxu0 0.0
    %3662 = vmatpush1.msra.mxu0 %v3619
    %3663 = vmatprep.subr.mxu0 0.0
    %3664 = vmatpush2.msra.mxu0 0.0
    %3665 = vmatprep.subr.mxu0 0.0
    %3666 = vmatpush2.msra.mxu0 0.0
    %3667 = vmatprep.subr.mxu0 0.0
    %3668 = vmatpush2.msra.mxu0 0.0
    %3669 = vmatprep.subr.mxu0 0.0
    %3670 = vmatpush2.msra.mxu0 0.0
    %3671 = vmatprep.subr.mxu0 0.0
    %3672 = vmatpush2.msra.mxu0 0.0
    %3673 = vmatprep.subr.mxu0 0.0
    %3674 = vmatpush2.msra.mxu0 0.0
    %3675 = vmatprep.subr.mxu0 0.0
    %3676 = vmatpush2.msra.mxu0 0.0
    %3677 = vmatprep.subr.mxu0 0.0
    %3678 = vmatpush2.msra.mxu0 0.0
    %3679 = vmatprep.subr.mxu0 0.0
    %3680 = vmatpush2.msra.mxu0 0.0
    %3681 = vmatprep.subr.mxu0 0.0
    %3682 = vmatpush2.msra.mxu0 0.0
    %3683 = vmatprep.subr.mxu0 0.0
    %3684 = vmatpush2.msra.mxu0 0.0
    %3685 = vmatprep.subr.mxu0 0.0
    %3686 = vmatpush2.msra.mxu0 0.0
    %3687 = vmatprep.subr.mxu0 0.0
    %3688 = vmatpush2.msra.mxu0 0.0
    %3689 = vmatprep.subr.mxu0 0.0
    %3690 = vmatpush2.msra.mxu0 0.0
    %3691 = vmatprep.subr.mxu0 0.0
    %3692 = vmatpush2.msra.mxu0 0.0
    %3693 = vmatprep.subr.mxu0 0.0
    %3694 = vmatpush2.msra.mxu0 0.0
    %3695 = vmatprep.mubr.f32.mxu0 0.0
    %3696 = vmatmul.mubr.f32.gmra.mxu0 %v3629
    %v3697 = vpop.f32.mrf.mxu0
    %v3698 = vadd.f32 %v3627, %v3697
    %v3699 = vpop.f32.mrf.mxu0
    %3700 = vdwg.mxu0
    %v3701 = vmax.f32 %v3698, 0.0
    %v3702 = vld [vmem:[%s41] sm:$0xff]
    %v3703 = vld [vmem:[%s41 + $0x8] sm:$0xff]
    %v3704 = vld [vmem:[%s41 + $0x10] sm:$0xff]
    %v3705 = vld [vmem:[%s41 + $0x18] sm:$0xff]
    %v3706 = vld [vmem:[%s41 + $0x20] sm:$0xff]
    %v3707 = vld [vmem:[%s41 + $0x28] sm:$0xff]
    %v3708 = vld [vmem:[%s41 + $0x30] sm:$0xff]
    %v3709 = vld [vmem:[%s41 + $0x38] sm:$0xf]
    %v3710 = vld [vmem:[#allocation8 + $0x2e] ss:$0 sm:$0xff]
    %v3712 = vsel %vm2951, %v3701, 0
    %v3715 = vsel %vm1555, %v3709, 0
    %3717 = vmatprep.subr.mxu0 0.0
    %3718 = vmatpush1.msra.mxu0 0.0
    %3719 = vmatprep.subr.mxu0 0.0
    %3720 = vmatpush1.msra.mxu0 0.0
    %3721 = vmatprep.subr.mxu0 0.0
    %3722 = vmatpush1.msra.mxu0 0.0
    %3723 = vmatprep.subr.mxu0 0.0
    %3724 = vmatpush1.msra.mxu0 0.0
    %3725 = vmatprep.subr.mxu0 0.0
    %3726 = vmatpush1.msra.mxu0 0.0
    %3727 = vmatprep.subr.mxu0 0.0
    %3728 = vmatpush1.msra.mxu0 0.0
    %3729 = vmatprep.subr.mxu0 0.0
    %3730 = vmatpush1.msra.mxu0 0.0
    %3731 = vmatprep.subr.mxu0 0.0
    %3732 = vmatpush1.msra.mxu0 0.0
    %3733 = vmatprep.subr.mxu0 0.0
    %3734 = vmatpush1.msra.mxu0 %v3715
    %3735 = vmatprep.subr.mxu0 0.0
    %3736 = vmatpush1.msra.mxu0 %v3708
    %3737 = vmatprep.subr.mxu0 0.0
    %3738 = vmatpush1.msra.mxu0 %v3707
    %3739 = vmatprep.subr.mxu0 0.0
    %3740 = vmatpush1.msra.mxu0 %v3706
    %3741 = vmatprep.subr.mxu0 0.0
    %3742 = vmatpush1.msra.mxu0 %v3705
    %3743 = vmatprep.subr.mxu0 0.0
    %3744 = vmatpush1.msra.mxu0 %v3704
    %3745 = vmatprep.subr.mxu0 0.0
    %3746 = vmatpush1.msra.mxu0 %v3703
    %3747 = vmatprep.subr.mxu0 0.0
    %3748 = vmatpush1.msra.mxu0 %v3702
    %3749 = vmatprep.subr.mxu0 0.0
    %3750 = vmatpush2.msra.mxu0 0.0
    %3751 = vmatprep.subr.mxu0 0.0
    %3752 = vmatpush2.msra.mxu0 0.0
    %3753 = vmatprep.subr.mxu0 0.0
    %3754 = vmatpush2.msra.mxu0 0.0
    %3755 = vmatprep.subr.mxu0 0.0
    %3756 = vmatpush2.msra.mxu0 0.0
    %3757 = vmatprep.subr.mxu0 0.0
    %3758 = vmatpush2.msra.mxu0 0.0
    %3759 = vmatprep.subr.mxu0 0.0
    %3760 = vmatpush2.msra.mxu0 0.0
    %3761 = vmatprep.subr.mxu0 0.0
    %3762 = vmatpush2.msra.mxu0 0.0
    %3763 = vmatprep.subr.mxu0 0.0
    %3764 = vmatpush2.msra.mxu0 0.0
    %3765 = vmatprep.subr.mxu0 0.0
    %3766 = vmatpush2.msra.mxu0 0.0
    %3767 = vmatprep.subr.mxu0 0.0
    %3768 = vmatpush2.msra.mxu0 0.0
    %3769 = vmatprep.subr.mxu0 0.0
    %3770 = vmatpush2.msra.mxu0 0.0
    %3771 = vmatprep.subr.mxu0 0.0
    %3772 = vmatpush2.msra.mxu0 0.0
    %3773 = vmatprep.subr.mxu0 0.0
    %3774 = vmatpush2.msra.mxu0 0.0
    %3775 = vmatprep.subr.mxu0 0.0
    %3776 = vmatpush2.msra.mxu0 0.0
    %3777 = vmatprep.subr.mxu0 0.0
    %3778 = vmatpush2.msra.mxu0 0.0
    %3779 = vmatprep.subr.mxu0 0.0
    %3780 = vmatpush2.msra.mxu0 0.0
    %3781 = vmatprep.mubr.f32.mxu0 0.0
    %3782 = vmatmul.mubr.f32.gmra.mxu0 %v3712
    %v3783 = vpop.f32.mrf.mxu0
    %v3784 = vadd.f32 %v3710, %v3783
    %v3785 = vpop.f32.mrf.mxu0
    %3786 = vdwg.mxu0
    %v3787 = vmax.f32 %v3784, 0.0
    %v3788 = vld [vmem:[%s43] sm:$0xff]
    %v3789 = vld [vmem:[%s43 + $0x8] sm:$0xff]
    %v3790 = vld [vmem:[%s43 + $0x10] sm:$0xff]
    %v3791 = vld [vmem:[%s43 + $0x18] sm:$0xf]
    %v3792 = vld [vmem:[#allocation8 + $0x2f] ss:$0 sm:$0xff]
    %v3794 = vsel %vm3033, %v3787, 0
    %v3797 = vsel %vm1555, %v3791, 0
    %3799 = vmatprep.subr.mxu0 0.0
    %3800 = vmatpush1.msra.mxu0 0.0
    %3801 = vmatprep.subr.mxu0 0.0
    %3802 = vmatpush1.msra.mxu0 0.0
    %3803 = vmatprep.subr.mxu0 0.0
    %3804 = vmatpush1.msra.mxu0 0.0
    %3805 = vmatprep.subr.mxu0 0.0
    %3806 = vmatpush1.msra.mxu0 0.0
    %3807 = vmatprep.subr.mxu0 0.0
    %3808 = vmatpush1.msra.mxu0 0.0
    %3809 = vmatprep.subr.mxu0 0.0
    %3810 = vmatpush1.msra.mxu0 0.0
    %3811 = vmatprep.subr.mxu0 0.0
    %3812 = vmatpush1.msra.mxu0 0.0
    %3813 = vmatprep.subr.mxu0 0.0
    %3814 = vmatpush1.msra.mxu0 0.0
    %3815 = vmatprep.subr.mxu0 0.0
    %3816 = vmatpush1.msra.mxu0 0.0
    %3817 = vmatprep.subr.mxu0 0.0
    %3818 = vmatpush1.msra.mxu0 0.0
    %3819 = vmatprep.subr.mxu0 0.0
    %3820 = vmatpush1.msra.mxu0 0.0
    %3821 = vmatprep.subr.mxu0 0.0
    %3822 = vmatpush1.msra.mxu0 0.0
    %3823 = vmatprep.subr.mxu0 0.0
    %3824 = vmatpush1.msra.mxu0 %v3797
    %3825 = vmatprep.subr.mxu0 0.0
    %3826 = vmatpush1.msra.mxu0 %v3790
    %3827 = vmatprep.subr.mxu0 0.0
    %3828 = vmatpush1.msra.mxu0 %v3789
    %3829 = vmatprep.subr.mxu0 0.0
    %3830 = vmatpush1.msra.mxu0 %v3788
    %3831 = vmatprep.subr.mxu0 0.0
    %3832 = vmatpush2.msra.mxu0 0.0
    %3833 = vmatprep.subr.mxu0 0.0
    %3834 = vmatpush2.msra.mxu0 0.0
    %3835 = vmatprep.subr.mxu0 0.0
    %3836 = vmatpush2.msra.mxu0 0.0
    %3837 = vmatprep.subr.mxu0 0.0
    %3838 = vmatpush2.msra.mxu0 0.0
    %3839 = vmatprep.subr.mxu0 0.0
    %3840 = vmatpush2.msra.mxu0 0.0
    %3841 = vmatprep.subr.mxu0 0.0
    %3842 = vmatpush2.msra.mxu0 0.0
    %3843 = vmatprep.subr.mxu0 0.0
    %3844 = vmatpush2.msra.mxu0 0.0
    %3845 = vmatprep.subr.mxu0 0.0
    %3846 = vmatpush2.msra.mxu0 0.0
    %3847 = vmatprep.subr.mxu0 0.0
    %3848 = vmatpush2.msra.mxu0 0.0
    %3849 = vmatprep.subr.mxu0 0.0
    %3850 = vmatpush2.msra.mxu0 0.0
    %3851 = vmatprep.subr.mxu0 0.0
    %3852 = vmatpush2.msra.mxu0 0.0
    %3853 = vmatprep.subr.mxu0 0.0
    %3854 = vmatpush2.msra.mxu0 0.0
    %3855 = vmatprep.subr.mxu0 0.0
    %3856 = vmatpush2.msra.mxu0 0.0
    %3857 = vmatprep.subr.mxu0 0.0
    %3858 = vmatpush2.msra.mxu0 0.0
    %3859 = vmatprep.subr.mxu0 0.0
    %3860 = vmatpush2.msra.mxu0 0.0
    %3861 = vmatprep.subr.mxu0 0.0
    %3862 = vmatpush2.msra.mxu0 0.0
    %3863 = vmatprep.mubr.f32.mxu0 0.0
    %3864 = vmatmul.mubr.f32.gmra.mxu0 %v3794
    %v3865 = vpop.f32.mrf.mxu0
    %v3866 = vadd.f32 %v3792, %v3865
    %v3867 = vpop.f32.mrf.mxu0
    %3868 = vdwg.mxu0
    %v3869 = vld [vmem:[#allocation20] sm:$0xff]
    %v3870 = vld [vmem:[#allocation20 + $0x8] sm:$0xff]
    %v3871 = vld [vmem:[#allocation20 + $0x10] sm:$0xff]
    %v3872 = vld [vmem:[#allocation8 + $0x50] ss:$0 sm:$0xff]
    %vm3873 = vcmask 195584
    %v3875 = vsel %vm3873, %v3866, 0
    %3877 = vmatprep.subr.mxu0 0.0
    %3878 = vmatpush1.msra.mxu0 0.0
    %3879 = vmatprep.subr.mxu0 0.0
    %3880 = vmatpush1.msra.mxu0 0.0
    %3881 = vmatprep.subr.mxu0 0.0
    %3882 = vmatpush1.msra.mxu0 0.0
    %3883 = vmatprep.subr.mxu0 0.0
    %3884 = vmatpush1.msra.mxu0 0.0
    %3885 = vmatprep.subr.mxu0 0.0
    %3886 = vmatpush1.msra.mxu0 0.0
    %3887 = vmatprep.subr.mxu0 0.0
    %3888 = vmatpush1.msra.mxu0 0.0
    %3889 = vmatprep.subr.mxu0 0.0
    %3890 = vmatpush1.msra.mxu0 0.0
    %3891 = vmatprep.subr.mxu0 0.0
    %3892 = vmatpush1.msra.mxu0 0.0
    %3893 = vmatprep.subr.mxu0 0.0
    %3894 = vmatpush1.msra.mxu0 0.0
    %3895 = vmatprep.subr.mxu0 0.0
    %3896 = vmatpush1.msra.mxu0 0.0
    %3897 = vmatprep.subr.mxu0 0.0
    %3898 = vmatpush1.msra.mxu0 0.0
    %3899 = vmatprep.subr.mxu0 0.0
    %3900 = vmatpush1.msra.mxu0 0.0
    %3901 = vmatprep.subr.mxu0 0.0
    %3902 = vmatpush1.msra.mxu0 0.0
    %3903 = vmatprep.subr.mxu0 0.0
    %3904 = vmatpush1.msra.mxu0 %v3871
    %3905 = vmatprep.subr.mxu0 0.0
    %3906 = vmatpush1.msra.mxu0 %v3870
    %3907 = vmatprep.subr.mxu0 0.0
    %3908 = vmatpush1.msra.mxu0 %v3869
    %3909 = vmatprep.subr.mxu0 0.0
    %3910 = vmatpush2.msra.mxu0 0.0
    %3911 = vmatprep.subr.mxu0 0.0
    %3912 = vmatpush2.msra.mxu0 0.0
    %3913 = vmatprep.subr.mxu0 0.0
    %3914 = vmatpush2.msra.mxu0 0.0
    %3915 = vmatprep.subr.mxu0 0.0
    %3916 = vmatpush2.msra.mxu0 0.0
    %3917 = vmatprep.subr.mxu0 0.0
    %3918 = vmatpush2.msra.mxu0 0.0
    %3919 = vmatprep.subr.mxu0 0.0
    %3920 = vmatpush2.msra.mxu0 0.0
    %3921 = vmatprep.subr.mxu0 0.0
    %3922 = vmatpush2.msra.mxu0 0.0
    %3923 = vmatprep.subr.mxu0 0.0
    %3924 = vmatpush2.msra.mxu0 0.0
    %3925 = vmatprep.subr.mxu0 0.0
    %3926 = vmatpush2.msra.mxu0 0.0
    %3927 = vmatprep.subr.mxu0 0.0
    %3928 = vmatpush2.msra.mxu0 0.0
    %3929 = vmatprep.subr.mxu0 0.0
    %3930 = vmatpush2.msra.mxu0 0.0
    %3931 = vmatprep.subr.mxu0 0.0
    %3932 = vmatpush2.msra.mxu0 0.0
    %3933 = vmatprep.subr.mxu0 0.0
    %3934 = vmatpush2.msra.mxu0 0.0
    %3935 = vmatprep.subr.mxu0 0.0
    %3936 = vmatpush2.msra.mxu0 0.0
    %3937 = vmatprep.subr.mxu0 0.0
    %3938 = vmatpush2.msra.mxu0 0.0
    %3939 = vmatprep.subr.mxu0 0.0
    %3940 = vmatpush2.msra.mxu0 0.0
    %3941 = vmatprep.mubr.f32.mxu0 0.0
    %3942 = vmatmul.mubr.f32.gmra.mxu0 %v3875
    %v3943 = vpop.f32.mrf.mxu0
    %v3944 = vadd.f32 %v3872, %v3943
    %v3945 = vpop.f32.mrf.mxu0
    %3946 = vdwg.mxu0
    %v3947 = vmax.f32 %v3944, 0.0
    %v3948 = vld [vmem:[#allocation22] sm:$0xff]
    %v3949 = vld [vmem:[#allocation22 + $0x8] sm:$0xff]
    %v3950 = vld [vmem:[#allocation22 + $0x10] sm:$0xff]
    %v3951 = vld [vmem:[#allocation22 + $0x18] sm:$0xf]
    %v3952 = vld [vmem:[#allocation8 + $0x51] ss:$0 sm:$0xff]
    %v3954 = vsel %vm3033, %v3947, 0
    %v3957 = vsel %vm1555, %v3951, 0
    %3959 = vmatprep.subr.mxu0 0.0
    %3960 = vmatpush1.msra.mxu0 0.0
    %3961 = vmatprep.subr.mxu0 0.0
    %3962 = vmatpush1.msra.mxu0 0.0
    %3963 = vmatprep.subr.mxu0 0.0
    %3964 = vmatpush1.msra.mxu0 0.0
    %3965 = vmatprep.subr.mxu0 0.0
    %3966 = vmatpush1.msra.mxu0 0.0
    %3967 = vmatprep.subr.mxu0 0.0
    %3968 = vmatpush1.msra.mxu0 0.0
    %3969 = vmatprep.subr.mxu0 0.0
    %3970 = vmatpush1.msra.mxu0 0.0
    %3971 = vmatprep.subr.mxu0 0.0
    %3972 = vmatpush1.msra.mxu0 0.0
    %3973 = vmatprep.subr.mxu0 0.0
    %3974 = vmatpush1.msra.mxu0 0.0
    %3975 = vmatprep.subr.mxu0 0.0
    %3976 = vmatpush1.msra.mxu0 0.0
    %3977 = vmatprep.subr.mxu0 0.0
    %3978 = vmatpush1.msra.mxu0 0.0
    %3979 = vmatprep.subr.mxu0 0.0
    %3980 = vmatpush1.msra.mxu0 0.0
    %3981 = vmatprep.subr.mxu0 0.0
    %3982 = vmatpush1.msra.mxu0 0.0
    %3983 = vmatprep.subr.mxu0 0.0
    %3984 = vmatpush1.msra.mxu0 %v3957
    %3985 = vmatprep.subr.mxu0 0.0
    %3986 = vmatpush1.msra.mxu0 %v3950
    %3987 = vmatprep.subr.mxu0 0.0
    %3988 = vmatpush1.msra.mxu0 %v3949
    %3989 = vmatprep.subr.mxu0 0.0
    %3990 = vmatpush1.msra.mxu0 %v3948
    %3991 = vmatprep.subr.mxu0 0.0
    %3992 = vmatpush2.msra.mxu0 0.0
    %3993 = vmatprep.subr.mxu0 0.0
    %3994 = vmatpush2.msra.mxu0 0.0
    %3995 = vmatprep.subr.mxu0 0.0
    %3996 = vmatpush2.msra.mxu0 0.0
    %3997 = vmatprep.subr.mxu0 0.0
    %3998 = vmatpush2.msra.mxu0 0.0
    %3999 = vmatprep.subr.mxu0 0.0
    %4000 = vmatpush2.msra.mxu0 0.0
    %4001 = vmatprep.subr.mxu0 0.0
    %4002 = vmatpush2.msra.mxu0 0.0
    %4003 = vmatprep.subr.mxu0 0.0
    %4004 = vmatpush2.msra.mxu0 0.0
    %4005 = vmatprep.subr.mxu0 0.0
    %4006 = vmatpush2.msra.mxu0 0.0
    %4007 = vmatprep.subr.mxu0 0.0
    %4008 = vmatpush2.msra.mxu0 0.0
    %4009 = vmatprep.subr.mxu0 0.0
    %4010 = vmatpush2.msra.mxu0 0.0
    %4011 = vmatprep.subr.mxu0 0.0
    %4012 = vmatpush2.msra.mxu0 0.0
    %4013 = vmatprep.subr.mxu0 0.0
    %4014 = vmatpush2.msra.mxu0 0.0
    %4015 = vmatprep.subr.mxu0 0.0
    %4016 = vmatpush2.msra.mxu0 0.0
    %4017 = vmatprep.subr.mxu0 0.0
    %4018 = vmatpush2.msra.mxu0 0.0
    %4019 = vmatprep.subr.mxu0 0.0
    %4020 = vmatpush2.msra.mxu0 0.0
    %4021 = vmatprep.subr.mxu0 0.0
    %4022 = vmatpush2.msra.mxu0 0.0
    %4023 = vmatprep.mubr.f32.mxu0 0.0
    %4024 = vmatmul.mubr.f32.gmra.mxu0 %v3954
    %v4025 = vpop.f32.mrf.mxu0
    %v4026 = vadd.f32 %v3952, %v4025
    %v4027 = vpop.f32.mrf.mxu0
    %4028 = vdwg.mxu0
    %v4029 = vmax.f32 %v4026, 0.0
    %v4030 = vld [vmem:[%s49] sm:$0xff]
    %v4031 = vld [vmem:[%s49 + $0x8] sm:$0xff]
    %v4032 = vld [vmem:[%s49 + $0x10] sm:$0xff]
    %v4033 = vld [vmem:[%s49 + $0x18] sm:$0xff]
    %v4034 = vld [vmem:[%s49 + $0x20] sm:$0xff]
    %v4035 = vld [vmem:[%s49 + $0x28] sm:$0xff]
    %v4036 = vld [vmem:[%s49 + $0x30] sm:$0xff]
    %v4037 = vld [vmem:[%s49 + $0x38] sm:$0xf]
    %v4038 = vld [vmem:[#allocation8 + $0x52] ss:$0 sm:$0xff]
    %v4040 = vsel %vm2951, %v4029, 0
    %v4043 = vsel %vm1555, %v4037, 0
    %4045 = vmatprep.subr.mxu0 0.0
    %4046 = vmatpush1.msra.mxu0 0.0
    %4047 = vmatprep.subr.mxu0 0.0
    %4048 = vmatpush1.msra.mxu0 0.0
    %4049 = vmatprep.subr.mxu0 0.0
    %4050 = vmatpush1.msra.mxu0 0.0
    %4051 = vmatprep.subr.mxu0 0.0
    %4052 = vmatpush1.msra.mxu0 0.0
    %4053 = vmatprep.subr.mxu0 0.0
    %4054 = vmatpush1.msra.mxu0 0.0
    %4055 = vmatprep.subr.mxu0 0.0
    %4056 = vmatpush1.msra.mxu0 0.0
    %4057 = vmatprep.subr.mxu0 0.0
    %4058 = vmatpush1.msra.mxu0 0.0
    %4059 = vmatprep.subr.mxu0 0.0
    %4060 = vmatpush1.msra.mxu0 0.0
    %4061 = vmatprep.subr.mxu0 0.0
    %4062 = vmatpush1.msra.mxu0 %v4043
    %4063 = vmatprep.subr.mxu0 0.0
    %4064 = vmatpush1.msra.mxu0 %v4036
    %4065 = vmatprep.subr.mxu0 0.0
    %4066 = vmatpush1.msra.mxu0 %v4035
    %4067 = vmatprep.subr.mxu0 0.0
    %4068 = vmatpush1.msra.mxu0 %v4034
    %4069 = vmatprep.subr.mxu0 0.0
    %4070 = vmatpush1.msra.mxu0 %v4033
    %4071 = vmatprep.subr.mxu0 0.0
    %4072 = vmatpush1.msra.mxu0 %v4032
    %4073 = vmatprep.subr.mxu0 0.0
    %4074 = vmatpush1.msra.mxu0 %v4031
    %4075 = vmatprep.subr.mxu0 0.0
    %4076 = vmatpush1.msra.mxu0 %v4030
    %4077 = vmatprep.subr.mxu0 0.0
    %4078 = vmatpush2.msra.mxu0 0.0
    %4079 = vmatprep.subr.mxu0 0.0
    %4080 = vmatpush2.msra.mxu0 0.0
    %4081 = vmatprep.subr.mxu0 0.0
    %4082 = vmatpush2.msra.mxu0 0.0
    %4083 = vmatprep.subr.mxu0 0.0
    %4084 = vmatpush2.msra.mxu0 0.0
    %4085 = vmatprep.subr.mxu0 0.0
    %4086 = vmatpush2.msra.mxu0 0.0
    %4087 = vmatprep.subr.mxu0 0.0
    %4088 = vmatpush2.msra.mxu0 0.0
    %4089 = vmatprep.subr.mxu0 0.0
    %4090 = vmatpush2.msra.mxu0 0.0
    %4091 = vmatprep.subr.mxu0 0.0
    %4092 = vmatpush2.msra.mxu0 0.0
    %4093 = vmatprep.subr.mxu0 0.0
    %4094 = vmatpush2.msra.mxu0 0.0
    %4095 = vmatprep.subr.mxu0 0.0
    %4096 = vmatpush2.msra.mxu0 0.0
    %4097 = vmatprep.subr.mxu0 0.0
    %4098 = vmatpush2.msra.mxu0 0.0
    %4099 = vmatprep.subr.mxu0 0.0
    %4100 = vmatpush2.msra.mxu0 0.0
    %4101 = vmatprep.subr.mxu0 0.0
    %4102 = vmatpush2.msra.mxu0 0.0
    %4103 = vmatprep.subr.mxu0 0.0
    %4104 = vmatpush2.msra.mxu0 0.0
    %4105 = vmatprep.subr.mxu0 0.0
    %4106 = vmatpush2.msra.mxu0 0.0
    %4107 = vmatprep.subr.mxu0 0.0
    %4108 = vmatpush2.msra.mxu0 0.0
    %4109 = vmatprep.mubr.f32.mxu0 0.0
    %4110 = vmatmul.mubr.f32.gmra.mxu0 %v4040
    %v4111 = vpop.f32.mrf.mxu0
    %v4112 = vadd.f32 %v4038, %v4111
    %v4113 = vpop.f32.mrf.mxu0
    %4114 = vdwg.mxu0
    %v4115 = vmul.f32 %v3616, %v4112
    %v4116 = vadd.f32 %v3616, %v4115
    %v4117 = vld [vmem:[%s51] sm:$0xff]
    %v4118 = vld [vmem:[%s51 + $0x8] sm:$0xff]
    %v4119 = vld [vmem:[%s51 + $0x10] sm:$0xff]
    %v4120 = vld [vmem:[%s51 + $0x18] sm:$0xff]
    %v4121 = vld [vmem:[%s51 + $0x20] sm:$0xff]
    %v4122 = vld [vmem:[%s51 + $0x28] sm:$0xff]
    %v4123 = vld [vmem:[%s51 + $0x30] sm:$0xff]
    %v4124 = vld [vmem:[%s51 + $0x38] sm:$0xff]
    %v4125 = vld [vmem:[%s51 + $0x40] sm:$0xff]
    %v4126 = vld [vmem:[%s51 + $0x48] sm:$0xff]
    %v4127 = vld [vmem:[%s51 + $0x50] sm:$0xff]
    %v4128 = vld [vmem:[%s51 + $0x58] sm:$0xff]
    %v4129 = vld [vmem:[%s51 + $0x60] sm:$0xff]
    %v4130 = vld [vmem:[%s51 + $0x68] sm:$0xff]
    %v4131 = vld [vmem:[%s51 + $0x70] sm:$0xff]
    %v4132 = vld [vmem:[%s51 + $0x78] sm:$0xff]
    %v4133 = vld [vmem:[%s51 + $0x80] sm:$0xff]
    %v4134 = vld [vmem:[%s51 + $0x88] sm:$0xff]
    %v4135 = vld [vmem:[%s51 + $0x90] sm:$0xff]
    %v4136 = vld [vmem:[%s51 + $0x98] sm:$0xff]
    %v4137 = vld [vmem:[%s51 + $0xa0] sm:$0xff]
    %v4138 = vld [vmem:[%s51 + $0xa8] sm:$0xff]
    %v4139 = vld [vmem:[%s51 + $0xb0] sm:$0xff]
    %v4140 = vld [vmem:[%s51 + $0xb8] sm:$0xff]
    %v4141 = vld [vmem:[%s51 + $0xc0] sm:$0xff]
    %v4142 = vld [vmem:[%s51 + $0xc8] sm:$0xff]
    %v4143 = vld [vmem:[%s51 + $0xd0] sm:$0xff]
    %v4144 = vld [vmem:[%s51 + $0xd8] sm:$0xff]
    %v4145 = vld [vmem:[%s51 + $0xe0] sm:$0xff]
    %v4146 = vld [vmem:[%s51 + $0xe8] sm:$0xff]
    %v4147 = vld [vmem:[%s51 + $0xf0] sm:$0xff]
    %v4148 = vld [vmem:[%s51 + $0xf8] sm:$0xff]
    %v4149 = vld [vmem:[%s51 + $0x100] sm:$0xff]
    %v4150 = vld [vmem:[%s51 + $0x108] sm:$0xff]
    %v4151 = vld [vmem:[%s51 + $0x110] sm:$0xff]
    %v4152 = vld [vmem:[%s51 + $0x118] sm:$0xff]
    %v4153 = vld [vmem:[%s51 + $0x120] sm:$0xff]
    %v4154 = vld [vmem:[%s51 + $0x128] sm:$0xff]
    %v4155 = vld [vmem:[%s51 + $0x130] sm:$0xff]
    %v4156 = vld [vmem:[%s51 + $0x138] sm:$0xff]
    %v4157 = vld [vmem:[%s51 + $0x140] sm:$0xff]
    %v4158 = vld [vmem:[%s51 + $0x148] sm:$0xff]
    %v4159 = vld [vmem:[%s51 + $0x150] sm:$0xff]
    %v4160 = vld [vmem:[%s51 + $0x158] sm:$0xff]
    %v4161 = vld [vmem:[%s51 + $0x160] sm:$0xff]
    %v4162 = vld [vmem:[%s51 + $0x168] sm:$0xff]
    %v4163 = vld [vmem:[%s51 + $0x170] sm:$0xff]
    %v4164 = vld [vmem:[%s51 + $0x178] sm:$0xff]
    %v4165 = vld [vmem:[%s51 + $0x180] sm:$0xff]
    %v4166 = vld [vmem:[%s51 + $0x188] sm:$0xff]
    %v4167 = vld [vmem:[%s51 + $0x190] sm:$0xff]
    %v4168 = vld [vmem:[%s51 + $0x198] sm:$0xff]
    %v4169 = vld [vmem:[%s51 + $0x1a0] sm:$0xff]
    %v4170 = vld [vmem:[%s51 + $0x1a8] sm:$0xff]
    %v4171 = vld [vmem:[%s51 + $0x1b0] sm:$0xff]
    %v4172 = vld [vmem:[%s51 + $0x1b8] sm:$0xff]
    %v4173 = vld [vmem:[%s51 + $0x1c0] sm:$0xff]
    %v4174 = vld [vmem:[%s51 + $0x1c8] sm:$0xff]
    %v4175 = vld [vmem:[%s51 + $0x1d0] sm:$0xff]
    %v4176 = vld [vmem:[%s51 + $0x1d8] sm:$0xff]
    %v4177 = vld [vmem:[%s51 + $0x1e0] sm:$0xff]
    %v4178 = vld [vmem:[%s51 + $0x1e8] sm:$0xff]
    %v4179 = vld [vmem:[%s51 + $0x1f0] sm:$0xff]
    %v4180 = vld [vmem:[%s51 + $0x1f8] sm:$0xff]
    %v4181 = vld [vmem:[%s51 + $0x200] sm:$0xf]
    %v4182 = vld [vmem:[#allocation8 + $0x53] ss:$0 sm:$0xff]
    %v4184 = vsel %vm1555, %v4181, 0
    %4186 = vmatprep.subr.mxu0 0.0
    %4187 = vmatpush1.msra.mxu0 %v4132
    %4188 = vmatprep.subr.mxu0 0.0
    %4189 = vmatpush1.msra.mxu0 %v4131
    %4190 = vmatprep.subr.mxu0 0.0
    %4191 = vmatpush1.msra.mxu0 %v4130
    %4192 = vmatprep.subr.mxu0 0.0
    %4193 = vmatpush1.msra.mxu0 %v4129
    %4194 = vmatprep.subr.mxu0 0.0
    %4195 = vmatpush1.msra.mxu0 %v4128
    %4196 = vmatprep.subr.mxu0 0.0
    %4197 = vmatpush1.msra.mxu0 %v4127
    %4198 = vmatprep.subr.mxu0 0.0
    %4199 = vmatpush1.msra.mxu0 %v4126
    %4200 = vmatprep.subr.mxu0 0.0
    %4201 = vmatpush1.msra.mxu0 %v4125
    %4202 = vmatprep.subr.mxu0 0.0
    %4203 = vmatpush1.msra.mxu0 %v4124
    %4204 = vmatprep.subr.mxu0 0.0
    %4205 = vmatpush1.msra.mxu0 %v4123
    %4206 = vmatprep.subr.mxu0 0.0
    %4207 = vmatpush1.msra.mxu0 %v4122
    %4208 = vmatprep.subr.mxu0 0.0
    %4209 = vmatpush1.msra.mxu0 %v4121
    %4210 = vmatprep.subr.mxu0 0.0
    %4211 = vmatpush1.msra.mxu0 %v4120
    %4212 = vmatprep.subr.mxu0 0.0
    %4213 = vmatpush1.msra.mxu0 %v4119
    %4214 = vmatprep.subr.mxu0 0.0
    %4215 = vmatpush1.msra.mxu0 %v4118
    %4216 = vmatprep.subr.mxu0 0.0
    %4217 = vmatpush1.msra.mxu0 %v4117
    %4218 = vmatprep.subr.mxu0 0.0
    %4219 = vmatpush2.msra.mxu0 %v4148
    %4220 = vmatprep.subr.mxu0 0.0
    %4221 = vmatpush2.msra.mxu0 %v4147
    %4222 = vmatprep.subr.mxu0 0.0
    %4223 = vmatpush2.msra.mxu0 %v4146
    %4224 = vmatprep.subr.mxu0 0.0
    %4225 = vmatpush2.msra.mxu0 %v4145
    %4226 = vmatprep.subr.mxu0 0.0
    %4227 = vmatpush2.msra.mxu0 %v4144
    %4228 = vmatprep.subr.mxu0 0.0
    %4229 = vmatpush2.msra.mxu0 %v4143
    %4230 = vmatprep.subr.mxu0 0.0
    %4231 = vmatpush2.msra.mxu0 %v4142
    %4232 = vmatprep.subr.mxu0 0.0
    %4233 = vmatpush2.msra.mxu0 %v4141
    %4234 = vmatprep.subr.mxu0 0.0
    %4235 = vmatpush2.msra.mxu0 %v4140
    %4236 = vmatprep.subr.mxu0 0.0
    %4237 = vmatpush2.msra.mxu0 %v4139
    %4238 = vmatprep.subr.mxu0 0.0
    %4239 = vmatpush2.msra.mxu0 %v4138
    %4240 = vmatprep.subr.mxu0 0.0
    %4241 = vmatpush2.msra.mxu0 %v4137
    %4242 = vmatprep.subr.mxu0 0.0
    %4243 = vmatpush2.msra.mxu0 %v4136
    %4244 = vmatprep.subr.mxu0 0.0
    %4245 = vmatpush2.msra.mxu0 %v4135
    %4246 = vmatprep.subr.mxu0 0.0
    %4247 = vmatpush2.msra.mxu0 %v4134
    %4248 = vmatprep.subr.mxu0 0.0
    %4249 = vmatpush2.msra.mxu0 %v4133
    %4250 = vmatprep.mubr.f32.mxu0 %v2218
    %4251 = vmatmul.mubr.f32.gmra.mxu0 %v2217
    %v4252 = vpop.f32.mrf.mxu0
    %v4253 = vadd.f32 %v4182, %v4252
    %v4254 = vpop.f32.mrf.mxu0
    %4255 = vdwg.mxu0
    %4256 = vmatprep.subr.mxu0 0.0
    %4257 = vmatpush1.msra.mxu0 %v4164
    %4258 = vmatprep.subr.mxu0 0.0
    %4259 = vmatpush1.msra.mxu0 %v4163
    %4260 = vmatprep.subr.mxu0 0.0
    %4261 = vmatpush1.msra.mxu0 %v4162
    %4262 = vmatprep.subr.mxu0 0.0
    %4263 = vmatpush1.msra.mxu0 %v4161
    %4264 = vmatprep.subr.mxu0 0.0
    %4265 = vmatpush1.msra.mxu0 %v4160
    %4266 = vmatprep.subr.mxu0 0.0
    %4267 = vmatpush1.msra.mxu0 %v4159
    %4268 = vmatprep.subr.mxu0 0.0
    %4269 = vmatpush1.msra.mxu0 %v4158
    %4270 = vmatprep.subr.mxu0 0.0
    %4271 = vmatpush1.msra.mxu0 %v4157
    %4272 = vmatprep.subr.mxu0 0.0
    %4273 = vmatpush1.msra.mxu0 %v4156
    %4274 = vmatprep.subr.mxu0 0.0
    %4275 = vmatpush1.msra.mxu0 %v4155
    %4276 = vmatprep.subr.mxu0 0.0
    %4277 = vmatpush1.msra.mxu0 %v4154
    %4278 = vmatprep.subr.mxu0 0.0
    %4279 = vmatpush1.msra.mxu0 %v4153
    %4280 = vmatprep.subr.mxu0 0.0
    %4281 = vmatpush1.msra.mxu0 %v4152
    %4282 = vmatprep.subr.mxu0 0.0
    %4283 = vmatpush1.msra.mxu0 %v4151
    %4284 = vmatprep.subr.mxu0 0.0
    %4285 = vmatpush1.msra.mxu0 %v4150
    %4286 = vmatprep.subr.mxu0 0.0
    %4287 = vmatpush1.msra.mxu0 %v4149
    %4288 = vmatprep.subr.mxu0 0.0
    %4289 = vmatpush2.msra.mxu0 %v4180
    %4290 = vmatprep.subr.mxu0 0.0
    %4291 = vmatpush2.msra.mxu0 %v4179
    %4292 = vmatprep.subr.mxu0 0.0
    %4293 = vmatpush2.msra.mxu0 %v4178
    %4294 = vmatprep.subr.mxu0 0.0
    %4295 = vmatpush2.msra.mxu0 %v4177
    %4296 = vmatprep.subr.mxu0 0.0
    %4297 = vmatpush2.msra.mxu0 %v4176
    %4298 = vmatprep.subr.mxu0 0.0
    %4299 = vmatpush2.msra.mxu0 %v4175
    %4300 = vmatprep.subr.mxu0 0.0
    %4301 = vmatpush2.msra.mxu0 %v4174
    %4302 = vmatprep.subr.mxu0 0.0
    %4303 = vmatpush2.msra.mxu0 %v4173
    %4304 = vmatprep.subr.mxu0 0.0
    %4305 = vmatpush2.msra.mxu0 %v4172
    %4306 = vmatprep.subr.mxu0 0.0
    %4307 = vmatpush2.msra.mxu0 %v4171
    %4308 = vmatprep.subr.mxu0 0.0
    %4309 = vmatpush2.msra.mxu0 %v4170
    %4310 = vmatprep.subr.mxu0 0.0
    %4311 = vmatpush2.msra.mxu0 %v4169
    %4312 = vmatprep.subr.mxu0 0.0
    %4313 = vmatpush2.msra.mxu0 %v4168
    %4314 = vmatprep.subr.mxu0 0.0
    %4315 = vmatpush2.msra.mxu0 %v4167
    %4316 = vmatprep.subr.mxu0 0.0
    %4317 = vmatpush2.msra.mxu0 %v4166
    %4318 = vmatprep.subr.mxu0 0.0
    %4319 = vmatpush2.msra.mxu0 %v4165
    %4320 = vmatprep.mubr.f32.mxu0 %v2220
    %4321 = vmatmul.mubr.f32.gmra.mxu0 %v2219
    %v4322 = vpop.f32.mrf.mxu0
    %v4323 = vadd.f32 %v4253, %v4322
    %v4324 = vpop.f32.mrf.mxu0
    %4325 = vdwg.mxu0
    %4326 = vmatprep.subr.mxu0 0.0
    %4327 = vmatpush1.msra.mxu0 0.0
    %4328 = vmatprep.subr.mxu0 0.0
    %4329 = vmatpush1.msra.mxu0 0.0
    %4330 = vmatprep.subr.mxu0 0.0
    %4331 = vmatpush1.msra.mxu0 0.0
    %4332 = vmatprep.subr.mxu0 0.0
    %4333 = vmatpush1.msra.mxu0 0.0
    %4334 = vmatprep.subr.mxu0 0.0
    %4335 = vmatpush1.msra.mxu0 0.0
    %4336 = vmatprep.subr.mxu0 0.0
    %4337 = vmatpush1.msra.mxu0 0.0
    %4338 = vmatprep.subr.mxu0 0.0
    %4339 = vmatpush1.msra.mxu0 0.0
    %4340 = vmatprep.subr.mxu0 0.0
    %4341 = vmatpush1.msra.mxu0 0.0
    %4342 = vmatprep.subr.mxu0 0.0
    %4343 = vmatpush1.msra.mxu0 0.0
    %4344 = vmatprep.subr.mxu0 0.0
    %4345 = vmatpush1.msra.mxu0 0.0
    %4346 = vmatprep.subr.mxu0 0.0
    %4347 = vmatpush1.msra.mxu0 0.0
    %4348 = vmatprep.subr.mxu0 0.0
    %4349 = vmatpush1.msra.mxu0 0.0
    %4350 = vmatprep.subr.mxu0 0.0
    %4351 = vmatpush1.msra.mxu0 0.0
    %4352 = vmatprep.subr.mxu0 0.0
    %4353 = vmatpush1.msra.mxu0 0.0
    %4354 = vmatprep.subr.mxu0 0.0
    %4355 = vmatpush1.msra.mxu0 0.0
    %4356 = vmatprep.subr.mxu0 0.0
    %4357 = vmatpush1.msra.mxu0 %v4184
    %4358 = vmatprep.subr.mxu0 0.0
    %4359 = vmatpush2.msra.mxu0 0.0
    %4360 = vmatprep.subr.mxu0 0.0
    %4361 = vmatpush2.msra.mxu0 0.0
    %4362 = vmatprep.subr.mxu0 0.0
    %4363 = vmatpush2.msra.mxu0 0.0
    %4364 = vmatprep.subr.mxu0 0.0
    %4365 = vmatpush2.msra.mxu0 0.0
    %4366 = vmatprep.subr.mxu0 0.0
    %4367 = vmatpush2.msra.mxu0 0.0
    %4368 = vmatprep.subr.mxu0 0.0
    %4369 = vmatpush2.msra.mxu0 0.0
    %4370 = vmatprep.subr.mxu0 0.0
    %4371 = vmatpush2.msra.mxu0 0.0
    %4372 = vmatprep.subr.mxu0 0.0
    %4373 = vmatpush2.msra.mxu0 0.0
    %4374 = vmatprep.subr.mxu0 0.0
    %4375 = vmatpush2.msra.mxu0 0.0
    %4376 = vmatprep.subr.mxu0 0.0
    %4377 = vmatpush2.msra.mxu0 0.0
    %4378 = vmatprep.subr.mxu0 0.0
    %4379 = vmatpush2.msra.mxu0 0.0
    %4380 = vmatprep.subr.mxu0 0.0
    %4381 = vmatpush2.msra.mxu0 0.0
    %4382 = vmatprep.subr.mxu0 0.0
    %4383 = vmatpush2.msra.mxu0 0.0
    %4384 = vmatprep.subr.mxu0 0.0
    %4385 = vmatpush2.msra.mxu0 0.0
    %4386 = vmatprep.subr.mxu0 0.0
    %4387 = vmatpush2.msra.mxu0 0.0
    %4388 = vmatprep.subr.mxu0 0.0
    %4389 = vmatpush2.msra.mxu0 0.0
    %4390 = vmatprep.mubr.f32.mxu0 0.0
    %4391 = vmatmul.mubr.f32.gmra.mxu0 %v2366
    %v4392 = vpop.f32.mrf.mxu0
    %v4393 = vadd.f32 %v4323, %v4392
    %v4394 = vpop.f32.mrf.mxu0
    %4395 = vdwg.mxu0
    %v4396 = vld [vmem:[%s53] sm:$0xff]
    %v4397 = vld [vmem:[%s53 + $0x8] sm:$0xff]
    %v4398 = vld [vmem:[%s53 + $0x10] sm:$0xff]
    %v4399 = vld [vmem:[%s53 + $0x18] sm:$0xff]
    %v4400 = vld [vmem:[%s53 + $0x20] sm:$0xff]
    %v4401 = vld [vmem:[%s53 + $0x28] sm:$0xff]
    %v4402 = vld [vmem:[%s53 + $0x30] sm:$0xff]
    %v4403 = vld [vmem:[%s53 + $0x38] sm:$0xff]
    %v4404 = vld [vmem:[%s53 + $0x40] sm:$0xff]
    %v4405 = vld [vmem:[%s53 + $0x48] sm:$0xff]
    %v4406 = vld [vmem:[%s53 + $0x50] sm:$0xff]
    %v4407 = vld [vmem:[%s53 + $0x58] sm:$0xff]
    %v4408 = vld [vmem:[%s53 + $0x60] sm:$0xff]
    %v4409 = vld [vmem:[%s53 + $0x68] sm:$0xff]
    %v4410 = vld [vmem:[%s53 + $0x70] sm:$0xff]
    %v4411 = vld [vmem:[%s53 + $0x78] sm:$0xff]
    %v4412 = vld [vmem:[%s53 + $0x80] sm:$0xff]
    %v4413 = vld [vmem:[%s53 + $0x88] sm:$0xff]
    %v4414 = vld [vmem:[%s53 + $0x90] sm:$0xff]
    %v4415 = vld [vmem:[%s53 + $0x98] sm:$0xff]
    %v4416 = vld [vmem:[%s53 + $0xa0] sm:$0xff]
    %v4417 = vld [vmem:[%s53 + $0xa8] sm:$0xff]
    %v4418 = vld [vmem:[%s53 + $0xb0] sm:$0xff]
    %v4419 = vld [vmem:[%s53 + $0xb8] sm:$0xff]
    %v4420 = vld [vmem:[%s53 + $0xc0] sm:$0xff]
    %v4421 = vld [vmem:[%s53 + $0xc8] sm:$0xff]
    %v4422 = vld [vmem:[%s53 + $0xd0] sm:$0xff]
    %v4423 = vld [vmem:[%s53 + $0xd8] sm:$0xff]
    %v4424 = vld [vmem:[%s53 + $0xe0] sm:$0xff]
    %v4425 = vld [vmem:[%s53 + $0xe8] sm:$0xff]
    %v4426 = vld [vmem:[%s53 + $0xf0] sm:$0xff]
    %v4427 = vld [vmem:[%s53 + $0xf8] sm:$0xff]
    %v4428 = vld [vmem:[#allocation8 + $0x54] ss:$0 sm:$0xff]
    %4429 = vmatprep.subr.mxu0 0.0
    %4430 = vmatpush1.msra.mxu0 %v4411
    %4431 = vmatprep.subr.mxu0 0.0
    %4432 = vmatpush1.msra.mxu0 %v4410
    %4433 = vmatprep.subr.mxu0 0.0
    %4434 = vmatpush1.msra.mxu0 %v4409
    %4435 = vmatprep.subr.mxu0 0.0
    %4436 = vmatpush1.msra.mxu0 %v4408
    %4437 = vmatprep.subr.mxu0 0.0
    %4438 = vmatpush1.msra.mxu0 %v4407
    %4439 = vmatprep.subr.mxu0 0.0
    %4440 = vmatpush1.msra.mxu0 %v4406
    %4441 = vmatprep.subr.mxu0 0.0
    %4442 = vmatpush1.msra.mxu0 %v4405
    %4443 = vmatprep.subr.mxu0 0.0
    %4444 = vmatpush1.msra.mxu0 %v4404
    %4445 = vmatprep.subr.mxu0 0.0
    %4446 = vmatpush1.msra.mxu0 %v4403
    %4447 = vmatprep.subr.mxu0 0.0
    %4448 = vmatpush1.msra.mxu0 %v4402
    %4449 = vmatprep.subr.mxu0 0.0
    %4450 = vmatpush1.msra.mxu0 %v4401
    %4451 = vmatprep.subr.mxu0 0.0
    %4452 = vmatpush1.msra.mxu0 %v4400
    %4453 = vmatprep.subr.mxu0 0.0
    %4454 = vmatpush1.msra.mxu0 %v4399
    %4455 = vmatprep.subr.mxu0 0.0
    %4456 = vmatpush1.msra.mxu0 %v4398
    %4457 = vmatprep.subr.mxu0 0.0
    %4458 = vmatpush1.msra.mxu0 %v4397
    %4459 = vmatprep.subr.mxu0 0.0
    %4460 = vmatpush1.msra.mxu0 %v4396
    %4461 = vmatprep.subr.mxu0 0.0
    %4462 = vmatpush2.msra.mxu0 %v4427
    %4463 = vmatprep.subr.mxu0 0.0
    %4464 = vmatpush2.msra.mxu0 %v4426
    %4465 = vmatprep.subr.mxu0 0.0
    %4466 = vmatpush2.msra.mxu0 %v4425
    %4467 = vmatprep.subr.mxu0 0.0
    %4468 = vmatpush2.msra.mxu0 %v4424
    %4469 = vmatprep.subr.mxu0 0.0
    %4470 = vmatpush2.msra.mxu0 %v4423
    %4471 = vmatprep.subr.mxu0 0.0
    %4472 = vmatpush2.msra.mxu0 %v4422
    %4473 = vmatprep.subr.mxu0 0.0
    %4474 = vmatpush2.msra.mxu0 %v4421
    %4475 = vmatprep.subr.mxu0 0.0
    %4476 = vmatpush2.msra.mxu0 %v4420
    %4477 = vmatprep.subr.mxu0 0.0
    %4478 = vmatpush2.msra.mxu0 %v4419
    %4479 = vmatprep.subr.mxu0 0.0
    %4480 = vmatpush2.msra.mxu0 %v4418
    %4481 = vmatprep.subr.mxu0 0.0
    %4482 = vmatpush2.msra.mxu0 %v4417
    %4483 = vmatprep.subr.mxu0 0.0
    %4484 = vmatpush2.msra.mxu0 %v4416
    %4485 = vmatprep.subr.mxu0 0.0
    %4486 = vmatpush2.msra.mxu0 %v4415
    %4487 = vmatprep.subr.mxu0 0.0
    %4488 = vmatpush2.msra.mxu0 %v4414
    %4489 = vmatprep.subr.mxu0 0.0
    %4490 = vmatpush2.msra.mxu0 %v4413
    %4491 = vmatprep.subr.mxu0 0.0
    %4492 = vmatpush2.msra.mxu0 %v4412
    %4493 = vmatprep.mubr.f32.mxu0 %v2742
    %4494 = vmatmul.mubr.f32.gmra.mxu0 %v2741
    %v4495 = vpop.f32.mrf.mxu0
    %v4496 = vadd.f32 %v4428, %v4495
    %v4497 = vpop.f32.mrf.mxu0
    %4498 = vdwg.mxu0
    %v4499 = vld [vmem:[%s55] sm:$0xff]
    %v4500 = vld [vmem:[%s55 + $0x8] sm:$0xff]
    %v4501 = vld [vmem:[%s55 + $0x10] sm:$0xff]
    %v4502 = vld [vmem:[%s55 + $0x18] sm:$0xff]
    %v4503 = vld [vmem:[%s55 + $0x20] sm:$0xff]
    %v4504 = vld [vmem:[%s55 + $0x28] sm:$0xff]
    %v4505 = vld [vmem:[%s55 + $0x30] sm:$0xff]
    %v4506 = vld [vmem:[%s55 + $0x38] sm:$0xff]
    %v4507 = vld [vmem:[%s55 + $0x40] sm:$0xff]
    %v4508 = vld [vmem:[%s55 + $0x48] sm:$0xff]
    %v4509 = vld [vmem:[%s55 + $0x50] sm:$0xff]
    %v4510 = vld [vmem:[%s55 + $0x58] sm:$0xff]
    %v4511 = vld [vmem:[%s55 + $0x60] sm:$0xff]
    %v4512 = vld [vmem:[%s55 + $0x68] sm:$0xff]
    %v4513 = vld [vmem:[%s55 + $0x70] sm:$0xff]
    %v4514 = vld [vmem:[%s55 + $0x78] sm:$0xf]
    %v4515 = vld [vmem:[#allocation8 + $0x55] ss:$0 sm:$0xff]
    %v4517 = vsel %vm1555, %v4514, 0
    %4519 = vmatprep.subr.mxu0 0.0
    %4520 = vmatpush1.msra.mxu0 %v4517
    %4521 = vmatprep.subr.mxu0 0.0
    %4522 = vmatpush1.msra.mxu0 %v4513
    %4523 = vmatprep.subr.mxu0 0.0
    %4524 = vmatpush1.msra.mxu0 %v4512
    %4525 = vmatprep.subr.mxu0 0.0
    %4526 = vmatpush1.msra.mxu0 %v4511
    %4527 = vmatprep.subr.mxu0 0.0
    %4528 = vmatpush1.msra.mxu0 %v4510
    %4529 = vmatprep.subr.mxu0 0.0
    %4530 = vmatpush1.msra.mxu0 %v4509
    %4531 = vmatprep.subr.mxu0 0.0
    %4532 = vmatpush1.msra.mxu0 %v4508
    %4533 = vmatprep.subr.mxu0 0.0
    %4534 = vmatpush1.msra.mxu0 %v4507
    %4535 = vmatprep.subr.mxu0 0.0
    %4536 = vmatpush1.msra.mxu0 %v4506
    %4537 = vmatprep.subr.mxu0 0.0
    %4538 = vmatpush1.msra.mxu0 %v4505
    %4539 = vmatprep.subr.mxu0 0.0
    %4540 = vmatpush1.msra.mxu0 %v4504
    %4541 = vmatprep.subr.mxu0 0.0
    %4542 = vmatpush1.msra.mxu0 %v4503
    %4543 = vmatprep.subr.mxu0 0.0
    %4544 = vmatpush1.msra.mxu0 %v4502
    %4545 = vmatprep.subr.mxu0 0.0
    %4546 = vmatpush1.msra.mxu0 %v4501
    %4547 = vmatprep.subr.mxu0 0.0
    %4548 = vmatpush1.msra.mxu0 %v4500
    %4549 = vmatprep.subr.mxu0 0.0
    %4550 = vmatpush1.msra.mxu0 %v4499
    %4551 = vmatprep.subr.mxu0 0.0
    %4552 = vmatpush2.msra.mxu0 0.0
    %4553 = vmatprep.subr.mxu0 0.0
    %4554 = vmatpush2.msra.mxu0 0.0
    %4555 = vmatprep.subr.mxu0 0.0
    %4556 = vmatpush2.msra.mxu0 0.0
    %4557 = vmatprep.subr.mxu0 0.0
    %4558 = vmatpush2.msra.mxu0 0.0
    %4559 = vmatprep.subr.mxu0 0.0
    %4560 = vmatpush2.msra.mxu0 0.0
    %4561 = vmatprep.subr.mxu0 0.0
    %4562 = vmatpush2.msra.mxu0 0.0
    %4563 = vmatprep.subr.mxu0 0.0
    %4564 = vmatpush2.msra.mxu0 0.0
    %4565 = vmatprep.subr.mxu0 0.0
    %4566 = vmatpush2.msra.mxu0 0.0
    %4567 = vmatprep.subr.mxu0 0.0
    %4568 = vmatpush2.msra.mxu0 0.0
    %4569 = vmatprep.subr.mxu0 0.0
    %4570 = vmatpush2.msra.mxu0 0.0
    %4571 = vmatprep.subr.mxu0 0.0
    %4572 = vmatpush2.msra.mxu0 0.0
    %4573 = vmatprep.subr.mxu0 0.0
    %4574 = vmatpush2.msra.mxu0 0.0
    %4575 = vmatprep.subr.mxu0 0.0
    %4576 = vmatpush2.msra.mxu0 0.0
    %4577 = vmatprep.subr.mxu0 0.0
    %4578 = vmatpush2.msra.mxu0 0.0
    %4579 = vmatprep.subr.mxu0 0.0
    %4580 = vmatpush2.msra.mxu0 0.0
    %4581 = vmatprep.subr.mxu0 0.0
    %4582 = vmatpush2.msra.mxu0 0.0
    %4583 = vmatprep.mubr.f32.mxu0 0.0
    %4584 = vmatmul.mubr.f32.gmra.mxu0 %v3544
    %v4585 = vpop.f32.mrf.mxu0
    %v4586 = vadd.f32 %v4515, %v4585
    %v4587 = vpop.f32.mrf.mxu0
    %4588 = vdwg.mxu0
    %v4589 = vld [vmem:[%s57] sm:$0xff]
    %v4590 = vld [vmem:[%s57 + $0x8] sm:$0xff]
    %v4591 = vld [vmem:[%s57 + $0x10] sm:$0xff]
    %v4592 = vld [vmem:[%s57 + $0x18] sm:$0xff]
    %v4593 = vld [vmem:[%s57 + $0x20] sm:$0xff]
    %v4594 = vld [vmem:[%s57 + $0x28] sm:$0xff]
    %v4595 = vld [vmem:[%s57 + $0x30] sm:$0xff]
    %v4596 = vld [vmem:[%s57 + $0x38] sm:$0xff]
    %v4597 = vld [vmem:[#allocation8 + $0x56] ss:$0 sm:$0xff]
    %v4599 = vsel %vm362, %v4116, 0
    %4601 = vmatprep.subr.mxu0 0.0
    %4602 = vmatpush1.msra.mxu0 0.0
    %4603 = vmatprep.subr.mxu0 0.0
    %4604 = vmatpush1.msra.mxu0 0.0
    %4605 = vmatprep.subr.mxu0 0.0
    %4606 = vmatpush1.msra.mxu0 0.0
    %4607 = vmatprep.subr.mxu0 0.0
    %4608 = vmatpush1.msra.mxu0 0.0
    %4609 = vmatprep.subr.mxu0 0.0
    %4610 = vmatpush1.msra.mxu0 0.0
    %4611 = vmatprep.subr.mxu0 0.0
    %4612 = vmatpush1.msra.mxu0 0.0
    %4613 = vmatprep.subr.mxu0 0.0
    %4614 = vmatpush1.msra.mxu0 0.0
    %4615 = vmatprep.subr.mxu0 0.0
    %4616 = vmatpush1.msra.mxu0 0.0
    %4617 = vmatprep.subr.mxu0 0.0
    %4618 = vmatpush1.msra.mxu0 %v4596
    %4619 = vmatprep.subr.mxu0 0.0
    %4620 = vmatpush1.msra.mxu0 %v4595
    %4621 = vmatprep.subr.mxu0 0.0
    %4622 = vmatpush1.msra.mxu0 %v4594
    %4623 = vmatprep.subr.mxu0 0.0
    %4624 = vmatpush1.msra.mxu0 %v4593
    %4625 = vmatprep.subr.mxu0 0.0
    %4626 = vmatpush1.msra.mxu0 %v4592
    %4627 = vmatprep.subr.mxu0 0.0
    %4628 = vmatpush1.msra.mxu0 %v4591
    %4629 = vmatprep.subr.mxu0 0.0
    %4630 = vmatpush1.msra.mxu0 %v4590
    %4631 = vmatprep.subr.mxu0 0.0
    %4632 = vmatpush1.msra.mxu0 %v4589
    %4633 = vmatprep.subr.mxu0 0.0
    %4634 = vmatpush2.msra.mxu0 0.0
    %4635 = vmatprep.subr.mxu0 0.0
    %4636 = vmatpush2.msra.mxu0 0.0
    %4637 = vmatprep.subr.mxu0 0.0
    %4638 = vmatpush2.msra.mxu0 0.0
    %4639 = vmatprep.subr.mxu0 0.0
    %4640 = vmatpush2.msra.mxu0 0.0
    %4641 = vmatprep.subr.mxu0 0.0
    %4642 = vmatpush2.msra.mxu0 0.0
    %4643 = vmatprep.subr.mxu0 0.0
    %4644 = vmatpush2.msra.mxu0 0.0
    %4645 = vmatprep.subr.mxu0 0.0
    %4646 = vmatpush2.msra.mxu0 0.0
    %4647 = vmatprep.subr.mxu0 0.0
    %4648 = vmatpush2.msra.mxu0 0.0
    %4649 = vmatprep.subr.mxu0 0.0
    %4650 = vmatpush2.msra.mxu0 0.0
    %4651 = vmatprep.subr.mxu0 0.0
    %4652 = vmatpush2.msra.mxu0 0.0
    %4653 = vmatprep.subr.mxu0 0.0
    %4654 = vmatpush2.msra.mxu0 0.0
    %4655 = vmatprep.subr.mxu0 0.0
    %4656 = vmatpush2.msra.mxu0 0.0
    %4657 = vmatprep.subr.mxu0 0.0
    %4658 = vmatpush2.msra.mxu0 0.0
    %4659 = vmatprep.subr.mxu0 0.0
    %4660 = vmatpush2.msra.mxu0 0.0
    %4661 = vmatprep.subr.mxu0 0.0
    %4662 = vmatpush2.msra.mxu0 0.0
    %4663 = vmatprep.subr.mxu0 0.0
    %4664 = vmatpush2.msra.mxu0 0.0
    %4665 = vmatprep.mubr.f32.mxu0 0.0
    %4666 = vmatmul.mubr.f32.gmra.mxu0 %v4599
    %v4667 = vpop.f32.mrf.mxu0
    %v4668 = vadd.f32 %v4597, %v4667
    %v4669 = vpop.f32.mrf.mxu0
    %4670 = vdwg.mxu0
    %v4671 = vld [vmem:[%s59] sm:$0xff]
    %v4672 = vld [vmem:[%s59 + $0x8] sm:$0xff]
    %v4673 = vld [vmem:[%s59 + $0x10] sm:$0xff]
    %v4674 = vld [vmem:[%s59 + $0x18] sm:$0xff]
    %v4675 = vld [vmem:[%s59 + $0x20] sm:$0xff]
    %v4676 = vld [vmem:[%s59 + $0x28] sm:$0xff]
    %v4677 = vld [vmem:[%s59 + $0x30] sm:$0xff]
    %v4678 = vld [vmem:[%s59 + $0x38] sm:$0xff]
    %v4679 = vld [vmem:[#allocation8 + $0x57] ss:$0 sm:$0xff]
    %v4681 = vsel %vm362, %v4393, 0
    %4683 = vmatprep.subr.mxu0 0.0
    %4684 = vmatpush1.msra.mxu0 0.0
    %4685 = vmatprep.subr.mxu0 0.0
    %4686 = vmatpush1.msra.mxu0 0.0
    %4687 = vmatprep.subr.mxu0 0.0
    %4688 = vmatpush1.msra.mxu0 0.0
    %4689 = vmatprep.subr.mxu0 0.0
    %4690 = vmatpush1.msra.mxu0 0.0
    %4691 = vmatprep.subr.mxu0 0.0
    %4692 = vmatpush1.msra.mxu0 0.0
    %4693 = vmatprep.subr.mxu0 0.0
    %4694 = vmatpush1.msra.mxu0 0.0
    %4695 = vmatprep.subr.mxu0 0.0
    %4696 = vmatpush1.msra.mxu0 0.0
    %4697 = vmatprep.subr.mxu0 0.0
    %4698 = vmatpush1.msra.mxu0 0.0
    %4699 = vmatprep.subr.mxu0 0.0
    %4700 = vmatpush1.msra.mxu0 %v4678
    %4701 = vmatprep.subr.mxu0 0.0
    %4702 = vmatpush1.msra.mxu0 %v4677
    %4703 = vmatprep.subr.mxu0 0.0
    %4704 = vmatpush1.msra.mxu0 %v4676
    %4705 = vmatprep.subr.mxu0 0.0
    %4706 = vmatpush1.msra.mxu0 %v4675
    %4707 = vmatprep.subr.mxu0 0.0
    %4708 = vmatpush1.msra.mxu0 %v4674
    %4709 = vmatprep.subr.mxu0 0.0
    %4710 = vmatpush1.msra.mxu0 %v4673
    %4711 = vmatprep.subr.mxu0 0.0
    %4712 = vmatpush1.msra.mxu0 %v4672
    %4713 = vmatprep.subr.mxu0 0.0
    %4714 = vmatpush1.msra.mxu0 %v4671
    %4715 = vmatprep.subr.mxu0 0.0
    %4716 = vmatpush2.msra.mxu0 0.0
    %4717 = vmatprep.subr.mxu0 0.0
    %4718 = vmatpush2.msra.mxu0 0.0
    %4719 = vmatprep.subr.mxu0 0.0
    %4720 = vmatpush2.msra.mxu0 0.0
    %4721 = vmatprep.subr.mxu0 0.0
    %4722 = vmatpush2.msra.mxu0 0.0
    %4723 = vmatprep.subr.mxu0 0.0
    %4724 = vmatpush2.msra.mxu0 0.0
    %4725 = vmatprep.subr.mxu0 0.0
    %4726 = vmatpush2.msra.mxu0 0.0
    %4727 = vmatprep.subr.mxu0 0.0
    %4728 = vmatpush2.msra.mxu0 0.0
    %4729 = vmatprep.subr.mxu0 0.0
    %4730 = vmatpush2.msra.mxu0 0.0
    %4731 = vmatprep.subr.mxu0 0.0
    %4732 = vmatpush2.msra.mxu0 0.0
    %4733 = vmatprep.subr.mxu0 0.0
    %4734 = vmatpush2.msra.mxu0 0.0
    %4735 = vmatprep.subr.mxu0 0.0
    %4736 = vmatpush2.msra.mxu0 0.0
    %4737 = vmatprep.subr.mxu0 0.0
    %4738 = vmatpush2.msra.mxu0 0.0
    %4739 = vmatprep.subr.mxu0 0.0
    %4740 = vmatpush2.msra.mxu0 0.0
    %4741 = vmatprep.subr.mxu0 0.0
    %4742 = vmatpush2.msra.mxu0 0.0
    %4743 = vmatprep.subr.mxu0 0.0
    %4744 = vmatpush2.msra.mxu0 0.0
    %4745 = vmatprep.subr.mxu0 0.0
    %4746 = vmatpush2.msra.mxu0 0.0
    %4747 = vmatprep.mubr.f32.mxu0 0.0
    %4748 = vmatmul.mubr.f32.gmra.mxu0 %v4681
    %v4749 = vpop.f32.mrf.mxu0
    %v4750 = vadd.f32 %v4679, %v4749
    %v4751 = vpop.f32.mrf.mxu0
    %4752 = vdwg.mxu0
    %v4753 = vadd.f32 %v4668, %v4750
    %v4754 = vld [vmem:[%s61] sm:$0xff]
    %v4755 = vld [vmem:[%s61 + $0x8] sm:$0xff]
    %v4756 = vld [vmem:[%s61 + $0x10] sm:$0xff]
    %v4757 = vld [vmem:[%s61 + $0x18] sm:$0xff]
    %v4758 = vld [vmem:[%s61 + $0x20] sm:$0xff]
    %v4759 = vld [vmem:[%s61 + $0x28] sm:$0xff]
    %v4760 = vld [vmem:[%s61 + $0x30] sm:$0xff]
    %v4761 = vld [vmem:[%s61 + $0x38] sm:$0xff]
    %v4762 = vld [vmem:[#allocation8 + $0x78] ss:$0 sm:$0xff]
    %v4764 = vsel %vm362, %v4496, 0
    %4766 = vmatprep.subr.mxu0 0.0
    %4767 = vmatpush1.msra.mxu0 0.0
    %4768 = vmatprep.subr.mxu0 0.0
    %4769 = vmatpush1.msra.mxu0 0.0
    %4770 = vmatprep.subr.mxu0 0.0
    %4771 = vmatpush1.msra.mxu0 0.0
    %4772 = vmatprep.subr.mxu0 0.0
    %4773 = vmatpush1.msra.mxu0 0.0
    %4774 = vmatprep.subr.mxu0 0.0
    %4775 = vmatpush1.msra.mxu0 0.0
    %4776 = vmatprep.subr.mxu0 0.0
    %4777 = vmatpush1.msra.mxu0 0.0
    %4778 = vmatprep.subr.mxu0 0.0
    %4779 = vmatpush1.msra.mxu0 0.0
    %4780 = vmatprep.subr.mxu0 0.0
    %4781 = vmatpush1.msra.mxu0 0.0
    %4782 = vmatprep.subr.mxu0 0.0
    %4783 = vmatpush1.msra.mxu0 %v4761
    %4784 = vmatprep.subr.mxu0 0.0
    %4785 = vmatpush1.msra.mxu0 %v4760
    %4786 = vmatprep.subr.mxu0 0.0
    %4787 = vmatpush1.msra.mxu0 %v4759
    %4788 = vmatprep.subr.mxu0 0.0
    %4789 = vmatpush1.msra.mxu0 %v4758
    %4790 = vmatprep.subr.mxu0 0.0
    %4791 = vmatpush1.msra.mxu0 %v4757
    %4792 = vmatprep.subr.mxu0 0.0
    %4793 = vmatpush1.msra.mxu0 %v4756
    %4794 = vmatprep.subr.mxu0 0.0
    %4795 = vmatpush1.msra.mxu0 %v4755
    %4796 = vmatprep.subr.mxu0 0.0
    %4797 = vmatpush1.msra.mxu0 %v4754
    %4798 = vmatprep.subr.mxu0 0.0
    %4799 = vmatpush2.msra.mxu0 0.0
    %4800 = vmatprep.subr.mxu0 0.0
    %4801 = vmatpush2.msra.mxu0 0.0
    %4802 = vmatprep.subr.mxu0 0.0
    %4803 = vmatpush2.msra.mxu0 0.0
    %4804 = vmatprep.subr.mxu0 0.0
    %4805 = vmatpush2.msra.mxu0 0.0
    %4806 = vmatprep.subr.mxu0 0.0
    %4807 = vmatpush2.msra.mxu0 0.0
    %4808 = vmatprep.subr.mxu0 0.0
    %4809 = vmatpush2.msra.mxu0 0.0
    %4810 = vmatprep.subr.mxu0 0.0
    %4811 = vmatpush2.msra.mxu0 0.0
    %4812 = vmatprep.subr.mxu0 0.0
    %4813 = vmatpush2.msra.mxu0 0.0
    %4814 = vmatprep.subr.mxu0 0.0
    %4815 = vmatpush2.msra.mxu0 0.0
    %4816 = vmatprep.subr.mxu0 0.0
    %4817 = vmatpush2.msra.mxu0 0.0
    %4818 = vmatprep.subr.mxu0 0.0
    %4819 = vmatpush2.msra.mxu0 0.0
    %4820 = vmatprep.subr.mxu0 0.0
    %4821 = vmatpush2.msra.mxu0 0.0
    %4822 = vmatprep.subr.mxu0 0.0
    %4823 = vmatpush2.msra.mxu0 0.0
    %4824 = vmatprep.subr.mxu0 0.0
    %4825 = vmatpush2.msra.mxu0 0.0
    %4826 = vmatprep.subr.mxu0 0.0
    %4827 = vmatpush2.msra.mxu0 0.0
    %4828 = vmatprep.subr.mxu0 0.0
    %4829 = vmatpush2.msra.mxu0 0.0
    %4830 = vmatprep.mubr.f32.mxu0 0.0
    %4831 = vmatmul.mubr.f32.gmra.mxu0 %v4764
    %v4832 = vpop.f32.mrf.mxu0
    %v4833 = vadd.f32 %v4762, %v4832
    %v4834 = vpop.f32.mrf.mxu0
    %4835 = vdwg.mxu0
    %v4836 = vadd.f32 %v4753, %v4833
    %v4837 = vld [vmem:[%s63] sm:$0xff]
    %v4838 = vld [vmem:[%s63 + $0x8] sm:$0xff]
    %v4839 = vld [vmem:[%s63 + $0x10] sm:$0xff]
    %v4840 = vld [vmem:[%s63 + $0x18] sm:$0xff]
    %v4841 = vld [vmem:[%s63 + $0x20] sm:$0xff]
    %v4842 = vld [vmem:[%s63 + $0x28] sm:$0xff]
    %v4843 = vld [vmem:[%s63 + $0x30] sm:$0xff]
    %v4844 = vld [vmem:[%s63 + $0x38] sm:$0xff]
    %v4845 = vld [vmem:[#allocation8 + $0x79] ss:$0 sm:$0xff]
    %v4847 = vsel %vm362, %v4586, 0
    %4849 = vmatprep.subr.mxu0 0.0
    %4850 = vmatpush1.msra.mxu0 0.0
    %4851 = vmatprep.subr.mxu0 0.0
    %4852 = vmatpush1.msra.mxu0 0.0
    %4853 = vmatprep.subr.mxu0 0.0
    %4854 = vmatpush1.msra.mxu0 0.0
    %4855 = vmatprep.subr.mxu0 0.0
    %4856 = vmatpush1.msra.mxu0 0.0
    %4857 = vmatprep.subr.mxu0 0.0
    %4858 = vmatpush1.msra.mxu0 0.0
    %4859 = vmatprep.subr.mxu0 0.0
    %4860 = vmatpush1.msra.mxu0 0.0
    %4861 = vmatprep.subr.mxu0 0.0
    %4862 = vmatpush1.msra.mxu0 0.0
    %4863 = vmatprep.subr.mxu0 0.0
    %4864 = vmatpush1.msra.mxu0 0.0
    %4865 = vmatprep.subr.mxu0 0.0
    %4866 = vmatpush1.msra.mxu0 %v4844
    %4867 = vmatprep.subr.mxu0 0.0
    %4868 = vmatpush1.msra.mxu0 %v4843
    %4869 = vmatprep.subr.mxu0 0.0
    %4870 = vmatpush1.msra.mxu0 %v4842
    %4871 = vmatprep.subr.mxu0 0.0
    %4872 = vmatpush1.msra.mxu0 %v4841
    %4873 = vmatprep.subr.mxu0 0.0
    %4874 = vmatpush1.msra.mxu0 %v4840
    %4875 = vmatprep.subr.mxu0 0.0
    %4876 = vmatpush1.msra.mxu0 %v4839
    %4877 = vmatprep.subr.mxu0 0.0
    %4878 = vmatpush1.msra.mxu0 %v4838
    %4879 = vmatprep.subr.mxu0 0.0
    %4880 = vmatpush1.msra.mxu0 %v4837
    %4881 = vmatprep.subr.mxu0 0.0
    %4882 = vmatpush2.msra.mxu0 0.0
    %4883 = vmatprep.subr.mxu0 0.0
    %4884 = vmatpush2.msra.mxu0 0.0
    %4885 = vmatprep.subr.mxu0 0.0
    %4886 = vmatpush2.msra.mxu0 0.0
    %4887 = vmatprep.subr.mxu0 0.0
    %4888 = vmatpush2.msra.mxu0 0.0
    %4889 = vmatprep.subr.mxu0 0.0
    %4890 = vmatpush2.msra.mxu0 0.0
    %4891 = vmatprep.subr.mxu0 0.0
    %4892 = vmatpush2.msra.mxu0 0.0
    %4893 = vmatprep.subr.mxu0 0.0
    %4894 = vmatpush2.msra.mxu0 0.0
    %4895 = vmatprep.subr.mxu0 0.0
    %4896 = vmatpush2.msra.mxu0 0.0
    %4897 = vmatprep.subr.mxu0 0.0
    %4898 = vmatpush2.msra.mxu0 0.0
    %4899 = vmatprep.subr.mxu0 0.0
    %4900 = vmatpush2.msra.mxu0 0.0
    %4901 = vmatprep.subr.mxu0 0.0
    %4902 = vmatpush2.msra.mxu0 0.0
    %4903 = vmatprep.subr.mxu0 0.0
    %4904 = vmatpush2.msra.mxu0 0.0
    %4905 = vmatprep.subr.mxu0 0.0
    %4906 = vmatpush2.msra.mxu0 0.0
    %4907 = vmatprep.subr.mxu0 0.0
    %4908 = vmatpush2.msra.mxu0 0.0
    %4909 = vmatprep.subr.mxu0 0.0
    %4910 = vmatpush2.msra.mxu0 0.0
    %4911 = vmatprep.subr.mxu0 0.0
    %4912 = vmatpush2.msra.mxu0 0.0
    %4913 = vmatprep.mubr.f32.mxu0 0.0
    %4914 = vmatmul.mubr.f32.gmra.mxu0 %v4847
    %v4915 = vpop.f32.mrf.mxu0
    %v4916 = vadd.f32 %v4845, %v4915
    %v4917 = vpop.f32.mrf.mxu0
    %4918 = vdwg.mxu0
    %v4919 = vadd.f32 %v4836, %v4916
    %vm4920 = vcmask 254976
    %4921 = vst.msk [vmem:[#allocation23] sm:$0x3] %vm4920, %v4919
    // Predicated region
    $region182: #{run.1} parent=1 // pred_check
      _
    $region183: #{run.1} parent=1 // pred_check_branch
      %4923 = sbr.rel (0) target = $region185
    $region184: #{run.1} parent=1 // pred_region
      %s4925 = ssub.s32 32, 32
      %4926 = vsyncadd [#allocation4], %s4925
      %s4928 = sshll.u32 [#allocation23], 4
      %s4929 = int_to_ptr.vmem [resolvable:$true] %s4928
      %4931 = dma.vmem_to_hbm [thread:$0]  %s4929, 32, %s65, [#allocation4]
    $region185: #{run.1} parent=1 // pred_fallthru
      _
    // Predicated region
    $region186: #{run.1} parent=1 // pred_check
      _
    $region187: #{run.1} parent=1 // pred_check_branch
      %4933 = sbr.rel (0) target = $region189
    $region188: #{run.1} parent=1 // pred_region
      %4934 = dma.done [#allocation4], 32
    $region189: #{run.1} parent=1 // pred_fallthru
      _
    %4935 = vsyncpa [#allocation3], 1
    %4936 = vsyncpa [#allocation6], 1
    %4937 = vsyncpa [#allocation9], 1
    %4938 = vsyncpa [#allocation12], 1
    %4939 = vsyncpa [#allocation15], 1
    %4940 = vsyncpa [#allocation18], 1
    %4941 = vsyncpa [#allocation21], 1
    %4942 = vsyncpa [#allocation4], 1

</llo_original>
